<compile_context>
chip_gen: v7x
topology: tpu7x:2x2x1
jax: 0.10.0
libtpu: 0.0.40
codegen_flags: <defaults>
</compile_context>

<pallas_src>
import functools

import jax
import jax.numpy as jnp
from jax.experimental import pallas as pl
from jax.experimental.pallas import tpu as pltpu


def _mha_kernel(q_ref, k_ref, v_ref, msym_ref,
                wq_ref, bq_ref, wk_ref, bk_ref, wv_ref, bv_ref,
                wo_ref, bo_ref, *refs, scale):
    kh_ref, vh_ref = refs[-2:]          # VMEM caches for projected K / V heads
    out_refs = refs[:-2]
    if len(out_refs) == 3:
        out_ref, score_ref, map_ref = out_refs
    else:
        (out_ref,) = out_refs
        score_ref = map_ref = None

    H, S, d = kh_ref.shape
    qi = pl.program_id(1)

    # ---- K/V projections: fused 128-wide GEMMs, computed once per batch ----
    # qi is the inner "arbitrary" grid axis, so qi == 0 runs first for every
    # batch; the projected heads stay cached in VMEM for all later q-tiles.
    @pl.when(qi == 0)
    def _():
        k = k_ref[0]                                            # (S, hidden) bf16
        v = v_ref[0]
        kh = (jnp.dot(k, wk_ref[...], preferred_element_type=jnp.float32)
              + bk_ref[...]).astype(kh_ref.dtype)               # (S, H*d)
        vh = (jnp.dot(v, wv_ref[...], preferred_element_type=jnp.float32)
              + bv_ref[...]).astype(vh_ref.dtype)
        for h in range(H):        # static head-split: lane-slice copies only
            kh_ref[h] = kh[:, h * d:(h + 1) * d]
            vh_ref[h] = vh[:, h * d:(h + 1) * d]

    # ---- Q projection: fused 128-wide GEMM; fold 1/sqrt(d) into Q once ----
    q = q_ref[0]                                                # (TQ, hidden) bf16
    qh = ((jnp.dot(q, wq_ref[...], preferred_element_type=jnp.float32)
           + bq_ref[...]) * scale).astype(jnp.bfloat16)         # (TQ, H*d)
    qh_heads = jnp.stack(
        [qh[:, h * d:(h + 1) * d] for h in range(H)], axis=0)   # (H, TQ, d)

    msym = msym_ref[0].astype(jnp.float32)                      # (TQ, S) 0/1

    # ---- scores for all heads: (H, TQ, S); d-contraction is MHA-inherent ---
    s = jnp.einsum('hqd,hkd->hqk', qh_heads, kh_ref[...],
                   preferred_element_type=jnp.float32)
    mask3 = jnp.broadcast_to(msym[None], s.shape)               # built once
    s = jnp.where(mask3 == 0.0, jnp.float32(-1e9), s)           # masked_fill
    if score_ref is not None:
        score_ref[0] = s.astype(score_ref.dtype)

    # ---- masked softmax over keys (f32); normalizations on the EUP ---------
    s_max = jnp.max(s, axis=-1, keepdims=True)
    e = jnp.exp(s - s_max)
    p = e * pl.reciprocal(jnp.sum(e, axis=-1, keepdims=True), approx=True)
    p = p * mask3
    p = p * pl.reciprocal(jnp.sum(p, axis=-1, keepdims=True) + 1e-13,
                          approx=True)
    if map_ref is not None:
        map_ref[0] = p.astype(map_ref.dtype)

    # (attention dropout is identity in eval mode)
    # ---- context per head, then fused output projection --------------------
    ctx = jnp.einsum('hqk,hkd->hqd', p.astype(jnp.bfloat16), vh_ref[...],
                     preferred_element_type=jnp.float32)        # (H, TQ, d)
    ctx16 = ctx.astype(jnp.bfloat16)
    ctx_flat = jnp.concatenate(
        [ctx16[h] for h in range(H)], axis=-1)                  # (TQ, H*d)
    out = (jnp.dot(ctx_flat, wo_ref[...], preferred_element_type=jnp.float32)
           + bo_ref[...])
    out_ref[0] = out.astype(out_ref.dtype)


def _vmem_limit_bytes(S, hidden, H, d, TQ, return_attention, attn_itemsize):
    """Explicit per-step VMEM budget (double-buffered blocks + working set)."""
    bf16, f32 = 2, 4
    per_step = (TQ * hidden * bf16          # q block
                + 2 * S * hidden * bf16     # k, v blocks (resident per batch)
                + TQ * S * bf16             # symmetric-mask block
                + TQ * hidden * f32)        # output block
    if return_attention:
        per_step += 2 * H * TQ * S * attn_itemsize
    weights = (4 * hidden * hidden + 4 * hidden) * bf16 + 4 * hidden * f32
    scratch = 2 * H * S * d * bf16          # cached Kh / Vh heads
    working = 4 * H * TQ * S * f32          # s / e / p style live intermediates
    est = 2 * per_step + 2 * weights + scratch + working
    est = int(est * 1.5) + (4 << 20)        # headroom
    # Clamp to 64 MiB so the request is valid on v7x (64 MiB physical VMEM).
    return max(32 << 20, min(est, 64 << 20))


def multi_head_attention(q, k, v, mask, params, *, head_size,
                         q_tile=None, return_attention=True,
                         attn_dtype=jnp.float32):
    B, S, hidden = q.shape
    assert hidden % head_size == 0
    d = hidden // head_size
    scale = d ** (-0.5)

    TQ = q_tile if q_tile is not None else min(S, 256)
    assert S % TQ == 0, "q_tile must divide the sequence length"
    assert TQ == S or TQ % 16 == 0, "q_tile must be a multiple of 16"

    wq, bq, wk, bk, wv, bv, wo, bo = params

    # One-time layout / dtype plumbing in plain XLA (outside the kernel).
    q16 = q.astype(jnp.bfloat16)
    k16 = k.astype(jnp.bfloat16)
    v16 = v.astype(jnp.bfloat16)
    wq16 = wq.astype(jnp.bfloat16)
    wk16 = wk.astype(jnp.bfloat16)
    wv16 = wv.astype(jnp.bfloat16)
    wo16 = wo.astype(jnp.bfloat16)
    bq32 = bq.reshape(1, -1).astype(jnp.float32)
    bk32 = bk.reshape(1, -1).astype(jnp.float32)
    bv32 = bv.reshape(1, -1).astype(jnp.float32)
    bo32 = bo.reshape(1, -1).astype(jnp.float32)
    msym = (jnp.swapaxes(mask, 1, 2) * mask).astype(jnp.bfloat16)   # (B, S, S)

    kernel = functools.partial(_mha_kernel, scale=scale)

    def _resident(arr):   # weights/biases: constant index map, stay resident
        n = arr.ndim
        return pl.BlockSpec(arr.shape, lambda b, qi, _n=n: (0,) * _n)

    x_shape = jax.ShapeDtypeStruct((B, S, hidden), jnp.float32)
    x_spec = pl.BlockSpec((1, TQ, hidden), lambda b, qi: (b, qi, 0))

    if return_attention:
        attn_shape = jax.ShapeDtypeStruct((B, head_size, S, S), attn_dtype)
        attn_spec = pl.BlockSpec((1, head_size, TQ, S),
                                 lambda b, qi: (b, 0, qi, 0))
        out_shapes = (x_shape, attn_shape, attn_shape)
        out_specs = [x_spec, attn_spec, attn_spec]
    else:
        out_shapes = (x_shape,)
        out_specs = [x_spec]

    vmem_limit = _vmem_limit_bytes(S, hidden, head_size, d, TQ,
                                   return_attention,
                                   jnp.dtype(attn_dtype).itemsize)

    res = pl.pallas_call(
        kernel,
        out_shape=out_shapes,
        grid_spec=pltpu.PrefetchScalarGridSpec(
            num_scalar_prefetch=0,
            grid=(B, S // TQ),
            in_specs=[
                pl.BlockSpec((1, TQ, hidden), lambda b, qi: (b, qi, 0)),  # q
                pl.BlockSpec((1, S, hidden), lambda b, qi: (b, 0, 0)),    # k
                pl.BlockSpec((1, S, hidden), lambda b, qi: (b, 0, 0)),    # v
                pl.BlockSpec((1, TQ, S), lambda b, qi: (b, qi, 0)),       # msym
                _resident(wq16), _resident(bq32),
                _resident(wk16), _resident(bk32),
                _resident(wv16), _resident(bv32),
                _resident(wo16), _resident(bo32),
            ],
            out_specs=out_specs,
            scratch_shapes=[
                pltpu.VMEM((head_size, S, d), jnp.bfloat16),   # cached Kh
                pltpu.VMEM((head_size, S, d), jnp.bfloat16),   # cached Vh
            ],
        ),
        compiler_params=pltpu.CompilerParams(
            # batch parallel (megacore on v7x); q-tile arbitrary/sequential so
            # the @pl.when(qi == 0) K/V projection-cache refill is correct.
            dimension_semantics=("parallel", "arbitrary"),
            vmem_limit_bytes=vmem_limit,
        ),
    )(q16, k16, v16, msym, wq16, bq32, wk16, bk32, wv16, bv32, wo16, bo32)

    if return_attention:
        return res            # (x, att_score, att_map)
    return res[0]             # x only (skips the big side-output writeback)


def _reference(q, k, v, mask, params, *, head_size):
    """Pure-JAX f32 reference mirroring the PyTorch forward."""
    wq, bq, wk, bk, wv, bv, wo, bo = params
    B, S, hidden = q.shape
    d = hidden // head_size
    scale = d ** (-0.5)

    def proj(x, w, b):
        y = x @ w + b
        return y.reshape(B, S, head_size, d).transpose(0, 2, 1, 3)

    Q, K, V = proj(q, wq, bq), proj(k, wk, bk), proj(v, wv, bv)
    m = jnp.repeat(mask[:, None, :, :], head_size, axis=1).astype(jnp.float32)
    m = jnp.swapaxes(m, 2, 3) * m
    s = jnp.einsum("bhqd,bhkd->bhqk", Q, K) * scale
    s = jnp.where(m == 0.0, -1e9, s)
    p = jax.nn.softmax(s, axis=-1)
    p = p * m
    p = p / (jnp.sum(p, axis=-1, keepdims=True) + 1e-13)
    x = jnp.einsum("bhqk,bhkd->bhqd", p, V)
    x = x.transpose(0, 2, 1, 3).reshape(B, S, head_size * d)
    x = x @ wo + bo
    return x, s, p


if __name__ == "__main__":
    B, S, HIDDEN, HEADS, TQ = 2, 128, 128, 4, 64
    key = jax.random.PRNGKey(0)
    keys = jax.random.split(key, 12)

    q = jax.random.normal(keys[0], (B, S, HIDDEN), jnp.float32)
    k = jax.random.normal(keys[1], (B, S, HIDDEN), jnp.float32)
    v = jax.random.normal(keys[2], (B, S, HIDDEN), jnp.float32)
    mask = jax.random.bernoulli(keys[3], 0.8, (B, S, S)).astype(jnp.float32)

    def init_linear(kw, kb, fan_in, fan_out):
        lim = 1.0 / (fan_in ** 0.5)
        w = jax.random.uniform(kw, (fan_in, fan_out), jnp.float32, -lim, lim)
        b = jax.random.uniform(kb, (1, fan_out), jnp.float32, -lim, lim)
        return w, b

    wq, bq = init_linear(keys[4], keys[5], HIDDEN, HIDDEN)
    wk, bk = init_linear(keys[6], keys[7], HIDDEN, HIDDEN)
    wv, bv = init_linear(keys[8], keys[9], HIDDEN, HIDDEN)
    wo, bo = init_linear(keys[10], keys[11], HIDDEN, HIDDEN)
    params = (wq, bq, wk, bk, wv, bv, wo, bo)

    out, att_score, att_map = multi_head_attention(
        q, k, v, mask, params, head_size=HEADS, q_tile=TQ)
    jax.block_until_ready((out, att_score, att_map))

    ref_out, ref_score, ref_map = _reference(q, k, v, mask, params,
                                             head_size=HEADS)
    assert out.shape == (B, S, HIDDEN)
    assert att_score.shape == (B, HEADS, S, S)
    assert att_map.shape == (B, HEADS, S, S)
    # bf16 MXU inputs + approx EUP reciprocal -> slightly relaxed tolerances.
    assert jnp.allclose(out, ref_out, atol=5e-2, rtol=5e-2)
    assert jnp.allclose(att_score, ref_score, atol=1e-1, rtol=1e-2)
    assert jnp.allclose(att_map, ref_map, atol=5e-2, rtol=1e-2)

    # Lean variant: skip the (B, H, S, S) side outputs entirely (v5e HBM win).
    out_only = multi_head_attention(
        q, k, v, mask, params, head_size=HEADS, q_tile=TQ,
        return_attention=False)
    jax.block_until_ready(out_only)
    assert jnp.allclose(out_only, ref_out, atol=5e-2, rtol=5e-2)

    print("KERNEL_OK")
</pallas_src>

<mosaic_0001>
module attributes {stable_mosaic.version = 11 : i64} {
  func.func @_mha_kernel(%arg0: i32, %arg1: i32, %arg2: memref<1x64x128xbf16, #tpu.memory_space<vmem>>, %arg3: memref<1x128x128xbf16, #tpu.memory_space<vmem>>, %arg4: memref<1x128x128xbf16, #tpu.memory_space<vmem>>, %arg5: memref<1x64x128xbf16, #tpu.memory_space<vmem>>, %arg6: memref<128x128xbf16, #tpu.memory_space<vmem>>, %arg7: memref<1x128xf32, #tpu.memory_space<vmem>>, %arg8: memref<128x128xbf16, #tpu.memory_space<vmem>>, %arg9: memref<1x128xf32, #tpu.memory_space<vmem>>, %arg10: memref<128x128xbf16, #tpu.memory_space<vmem>>, %arg11: memref<1x128xf32, #tpu.memory_space<vmem>>, %arg12: memref<128x128xbf16, #tpu.memory_space<vmem>>, %arg13: memref<1x128xf32, #tpu.memory_space<vmem>>, %arg14: memref<1x64x128xf32, #tpu.memory_space<vmem>>, %arg15: memref<1x4x64x128xf32, #tpu.memory_space<vmem>>, %arg16: memref<1x4x64x128xf32, #tpu.memory_space<vmem>>, %arg17: memref<4x128x32xbf16, #tpu.memory_space<vmem>>, %arg18: memref<4x128x32xbf16, #tpu.memory_space<vmem>>) attributes {dimension_semantics = [#tpu.dimension_semantics<parallel>, #tpu.dimension_semantics<arbitrary>], iteration_bounds = array<i64: 2, 2>, scalar_prefetch = 0 : i64, scratch_operands = 2 : i64, tpu.core_type = #tpu.core_type<tc>, window_params = [{transform_indices = @transform_0, window_bounds = array<i64: 1, 64, 128>}, {transform_indices = @transform_1, window_bounds = array<i64: 1, 128, 128>}, {transform_indices = @transform_2, window_bounds = array<i64: 1, 128, 128>}, {transform_indices = @transform_3, window_bounds = array<i64: 1, 64, 128>}, {pipeline_mode = #tpu.pipeline_mode<synchronous>, transform_indices = @transform_4, window_bounds = array<i64: 128, 128>}, {pipeline_mode = #tpu.pipeline_mode<synchronous>, transform_indices = @transform_5, window_bounds = array<i64: 1, 128>}, {pipeline_mode = #tpu.pipeline_mode<synchronous>, transform_indices = @transform_6, window_bounds = array<i64: 128, 128>}, {pipeline_mode = #tpu.pipeline_mode<synchronous>, transform_indices = @transform_7, window_bounds = array<i64: 1, 128>}, {pipeline_mode = #tpu.pipeline_mode<synchronous>, transform_indices = @transform_8, window_bounds = array<i64: 128, 128>}, {pipeline_mode = #tpu.pipeline_mode<synchronous>, transform_indices = @transform_9, window_bounds = array<i64: 1, 128>}, {pipeline_mode = #tpu.pipeline_mode<synchronous>, transform_indices = @transform_10, window_bounds = array<i64: 128, 128>}, {pipeline_mode = #tpu.pipeline_mode<synchronous>, transform_indices = @transform_11, window_bounds = array<i64: 1, 128>}, {transform_indices = @transform_12, window_bounds = array<i64: 1, 64, 128>}, {transform_indices = @transform_13, window_bounds = array<i64: 1, 4, 64, 128>}, {transform_indices = @transform_14, window_bounds = array<i64: 1, 4, 64, 128>}]} {
    %c0_i32 = arith.constant 0 : i32
    %0 = arith.cmpi eq, %arg1, %c0_i32 : i32
    %1 = arith.extui %0 : i1 to i32
    %c0_i32_0 = arith.constant 0 : i32
    %2 = arith.cmpi ne, %1, %c0_i32_0 : i32
    scf.if %2 {
      %c0_41 = arith.constant 0 : index
      %c0_42 = arith.constant 0 : index
      %c0_43 = arith.constant 0 : index
      %79 = vector.load %arg3[%c0_41, %c0_42, %c0_43] : memref<1x128x128xbf16, #tpu.memory_space<vmem>>, vector<1x128x128xbf16>
      %80 = vector.shape_cast %79 : vector<1x128x128xbf16> to vector<128x128xbf16>
      %c0_44 = arith.constant 0 : index
      %c0_45 = arith.constant 0 : index
      %c0_46 = arith.constant 0 : index
      %81 = vector.load %arg4[%c0_44, %c0_45, %c0_46] : memref<1x128x128xbf16, #tpu.memory_space<vmem>>, vector<1x128x128xbf16>
      %82 = vector.shape_cast %81 : vector<1x128x128xbf16> to vector<128x128xbf16>
      %c0_47 = arith.constant 0 : index
      %c0_48 = arith.constant 0 : index
      %83 = vector.load %arg8[%c0_47, %c0_48] : memref<128x128xbf16, #tpu.memory_space<vmem>>, vector<128x128xbf16>
      %cst_49 = arith.constant dense<0.000000e+00> : vector<128x128xf32>
      %84 = tpu.matmul %80, %83, %cst_49 {dimension_numbers = #tpu.dot_dimension_numbers<[1], [0], [0], [1], [0, 0, 1, 1], [], []>} : vector<128x128xbf16>, vector<128x128xbf16>, vector<128x128xf32> -> vector<128x128xf32>
      %c0_50 = arith.constant 0 : index
      %c0_51 = arith.constant 0 : index
      %85 = vector.load %arg9[%c0_50, %c0_51] : memref<1x128xf32, #tpu.memory_space<vmem>>, vector<1x128xf32>
      %86 = vector.broadcast %85 : vector<1x128xf32> to vector<128x128xf32>
      %87 = arith.addf %84, %86 : vector<128x128xf32>
      %88 = arith.truncf %87 : vector<128x128xf32> to vector<128x128xbf16>
      %c0_52 = arith.constant 0 : index
      %c0_53 = arith.constant 0 : index
      %89 = vector.load %arg10[%c0_52, %c0_53] : memref<128x128xbf16, #tpu.memory_space<vmem>>, vector<128x128xbf16>
      %cst_54 = arith.constant dense<0.000000e+00> : vector<128x128xf32>
      %90 = tpu.matmul %82, %89, %cst_54 {dimension_numbers = #tpu.dot_dimension_numbers<[1], [0], [0], [1], [0, 0, 1, 1], [], []>} : vector<128x128xbf16>, vector<128x128xbf16>, vector<128x128xf32> -> vector<128x128xf32>
      %c0_55 = arith.constant 0 : index
      %c0_56 = arith.constant 0 : index
      %91 = vector.load %arg11[%c0_55, %c0_56] : memref<1x128xf32, #tpu.memory_space<vmem>>, vector<1x128xf32>
      %92 = vector.broadcast %91 : vector<1x128xf32> to vector<128x128xf32>
      %93 = arith.addf %90, %92 : vector<128x128xf32>
      %94 = arith.truncf %93 : vector<128x128xf32> to vector<128x128xbf16>
      %95 = vector.extract_strided_slice %88 {offsets = [0, 0], sizes = [128, 32], strides = [1, 1]} : vector<128x128xbf16> to vector<128x32xbf16>
      %c0_57 = arith.constant 0 : index
      %c0_58 = arith.constant 0 : index
      %c0_59 = arith.constant 0 : index
      %96 = vector.load %arg17[%c0_57, %c0_58, %c0_59] : memref<4x128x32xbf16, #tpu.memory_space<vmem>>, vector<1x128x32xbf16>
      %97 = vector.shape_cast %96 : vector<1x128x32xbf16> to vector<128x32xbf16>
      %98 = vector.shape_cast %95 : vector<128x32xbf16> to vector<1x128x32xbf16>
      tpu.vector_store %arg17[%c0_57, %c0_58, %c0_59], %98 {strides = array<i32>} : memref<4x128x32xbf16, #tpu.memory_space<vmem>>, vector<1x128x32xbf16>,
      %99 = vector.extract_strided_slice %94 {offsets = [0, 0], sizes = [128, 32], strides = [1, 1]} : vector<128x128xbf16> to vector<128x32xbf16>
      %c0_60 = arith.constant 0 : index
      %c0_61 = arith.constant 0 : index
      %c0_62 = arith.constant 0 : index
      %100 = vector.load %arg18[%c0_60, %c0_61, %c0_62] : memref<4x128x32xbf16, #tpu.memory_space<vmem>>, vector<1x128x32xbf16>
      %101 = vector.shape_cast %100 : vector<1x128x32xbf16> to vector<128x32xbf16>
      %102 = vector.shape_cast %99 : vector<128x32xbf16> to vector<1x128x32xbf16>
      tpu.vector_store %arg18[%c0_60, %c0_61, %c0_62], %102 {strides = array<i32>} : memref<4x128x32xbf16, #tpu.memory_space<vmem>>, vector<1x128x32xbf16>,
      %103 = vector.extract_strided_slice %88 {offsets = [0, 32], sizes = [128, 32], strides = [1, 1]} : vector<128x128xbf16> to vector<128x32xbf16>
      %c1 = arith.constant 1 : index
      %c0_63 = arith.constant 0 : index
      %c0_64 = arith.constant 0 : index
      %104 = vector.load %arg17[%c1, %c0_63, %c0_64] : memref<4x128x32xbf16, #tpu.memory_space<vmem>>, vector<1x128x32xbf16>
      %105 = vector.shape_cast %104 : vector<1x128x32xbf16> to vector<128x32xbf16>
      %106 = vector.shape_cast %103 : vector<128x32xbf16> to vector<1x128x32xbf16>
      tpu.vector_store %arg17[%c1, %c0_63, %c0_64], %106 {strides = array<i32>} : memref<4x128x32xbf16, #tpu.memory_space<vmem>>, vector<1x128x32xbf16>,
      %107 = vector.extract_strided_slice %94 {offsets = [0, 32], sizes = [128, 32], strides = [1, 1]} : vector<128x128xbf16> to vector<128x32xbf16>
      %c1_65 = arith.constant 1 : index
      %c0_66 = arith.constant 0 : index
      %c0_67 = arith.constant 0 : index
      %108 = vector.load %arg18[%c1_65, %c0_66, %c0_67] : memref<4x128x32xbf16, #tpu.memory_space<vmem>>, vector<1x128x32xbf16>
      %109 = vector.shape_cast %108 : vector<1x128x32xbf16> to vector<128x32xbf16>
      %110 = vector.shape_cast %107 : vector<128x32xbf16> to vector<1x128x32xbf16>
      tpu.vector_store %arg18[%c1_65, %c0_66, %c0_67], %110 {strides = array<i32>} : memref<4x128x32xbf16, #tpu.memory_space<vmem>>, vector<1x128x32xbf16>,
      %111 = vector.extract_strided_slice %88 {offsets = [0, 64], sizes = [128, 32], strides = [1, 1]} : vector<128x128xbf16> to vector<128x32xbf16>
      %c2 = arith.constant 2 : index
      %c0_68 = arith.constant 0 : index
      %c0_69 = arith.constant 0 : index
      %112 = vector.load %arg17[%c2, %c0_68, %c0_69] : memref<4x128x32xbf16, #tpu.memory_space<vmem>>, vector<1x128x32xbf16>
      %113 = vector.shape_cast %112 : vector<1x128x32xbf16> to vector<128x32xbf16>
      %114 = vector.shape_cast %111 : vector<128x32xbf16> to vector<1x128x32xbf16>
      tpu.vector_store %arg17[%c2, %c0_68, %c0_69], %114 {strides = array<i32>} : memref<4x128x32xbf16, #tpu.memory_space<vmem>>, vector<1x128x32xbf16>,
      %115 = vector.extract_strided_slice %94 {offsets = [0, 64], sizes = [128, 32], strides = [1, 1]} : vector<128x128xbf16> to vector<128x32xbf16>
      %c2_70 = arith.constant 2 : index
      %c0_71 = arith.constant 0 : index
      %c0_72 = arith.constant 0 : index
      %116 = vector.load %arg18[%c2_70, %c0_71, %c0_72] : memref<4x128x32xbf16, #tpu.memory_space<vmem>>, vector<1x128x32xbf16>
      %117 = vector.shape_cast %116 : vector<1x128x32xbf16> to vector<128x32xbf16>
      %118 = vector.shape_cast %115 : vector<128x32xbf16> to vector<1x128x32xbf16>
      tpu.vector_store %arg18[%c2_70, %c0_71, %c0_72], %118 {strides = array<i32>} : memref<4x128x32xbf16, #tpu.memory_space<vmem>>, vector<1x128x32xbf16>,
      %119 = vector.extract_strided_slice %88 {offsets = [0, 96], sizes = [128, 32], strides = [1, 1]} : vector<128x128xbf16> to vector<128x32xbf16>
      %c3 = arith.constant 3 : index
      %c0_73 = arith.constant 0 : index
      %c0_74 = arith.constant 0 : index
      %120 = vector.load %arg17[%c3, %c0_73, %c0_74] : memref<4x128x32xbf16, #tpu.memory_space<vmem>>, vector<1x128x32xbf16>
      %121 = vector.shape_cast %120 : vector<1x128x32xbf16> to vector<128x32xbf16>
      %122 = vector.shape_cast %119 : vector<128x32xbf16> to vector<1x128x32xbf16>
      tpu.vector_store %arg17[%c3, %c0_73, %c0_74], %122 {strides = array<i32>} : memref<4x128x32xbf16, #tpu.memory_space<vmem>>, vector<1x128x32xbf16>,
      %123 = vector.extract_strided_slice %94 {offsets = [0, 96], sizes = [128, 32], strides = [1, 1]} : vector<128x128xbf16> to vector<128x32xbf16>
      %c3_75 = arith.constant 3 : index
      %c0_76 = arith.constant 0 : index
      %c0_77 = arith.constant 0 : index
      %124 = vector.load %arg18[%c3_75, %c0_76, %c0_77] : memref<4x128x32xbf16, #tpu.memory_space<vmem>>, vector<1x128x32xbf16>
      %125 = vector.shape_cast %124 : vector<1x128x32xbf16> to vector<128x32xbf16>
      %126 = vector.shape_cast %123 : vector<128x32xbf16> to vector<1x128x32xbf16>
      tpu.vector_store %arg18[%c3_75, %c0_76, %c0_77], %126 {strides = array<i32>} : memref<4x128x32xbf16, #tpu.memory_space<vmem>>, vector<1x128x32xbf16>,
    } else {
    }
    %c0 = arith.constant 0 : index
    %c0_1 = arith.constant 0 : index
    %c0_2 = arith.constant 0 : index
    %3 = vector.load %arg2[%c0, %c0_1, %c0_2] : memref<1x64x128xbf16, #tpu.memory_space<vmem>>, vector<1x64x128xbf16>
    %4 = vector.shape_cast %3 : vector<1x64x128xbf16> to vector<64x128xbf16>
    %c0_3 = arith.constant 0 : index
    %c0_4 = arith.constant 0 : index
    %5 = vector.load %arg6[%c0_3, %c0_4] : memref<128x128xbf16, #tpu.memory_space<vmem>>, vector<128x128xbf16>
    %cst = arith.constant dense<0.000000e+00> : vector<64x128xf32>
    %6 = tpu.matmul %4, %5, %cst {dimension_numbers = #tpu.dot_dimension_numbers<[1], [0], [0], [1], [0, 0, 1, 1], [], []>} : vector<64x128xbf16>, vector<128x128xbf16>, vector<64x128xf32> -> vector<64x128xf32>
    %c0_5 = arith.constant 0 : index
    %c0_6 = arith.constant 0 : index
    %7 = vector.load %arg7[%c0_5, %c0_6] : memref<1x128xf32, #tpu.memory_space<vmem>>, vector<1x128xf32>
    %8 = vector.broadcast %7 : vector<1x128xf32> to vector<64x128xf32>
    %9 = arith.addf %6, %8 : vector<64x128xf32>
    %cst_7 = arith.constant 0.176776692 : f32
    %10 = vector.broadcast %cst_7 : f32 to vector<64x128xf32>
    %11 = arith.mulf %9, %10 : vector<64x128xf32>
    %12 = arith.truncf %11 : vector<64x128xf32> to vector<64x128xbf16>
    %13 = vector.extract_strided_slice %12 {offsets = [0, 0], sizes = [64, 32], strides = [1, 1]} : vector<64x128xbf16> to vector<64x32xbf16>
    %14 = vector.extract_strided_slice %12 {offsets = [0, 32], sizes = [64, 32], strides = [1, 1]} : vector<64x128xbf16> to vector<64x32xbf16>
    %15 = vector.extract_strided_slice %12 {offsets = [0, 64], sizes = [64, 32], strides = [1, 1]} : vector<64x128xbf16> to vector<64x32xbf16>
    %16 = vector.extract_strided_slice %12 {offsets = [0, 96], sizes = [64, 32], strides = [1, 1]} : vector<64x128xbf16> to vector<64x32xbf16>
    %17 = vector.shape_cast %13 : vector<64x32xbf16> to vector<1x64x32xbf16>
    %18 = vector.shape_cast %14 : vector<64x32xbf16> to vector<1x64x32xbf16>
    %19 = vector.shape_cast %15 : vector<64x32xbf16> to vector<1x64x32xbf16>
    %20 = vector.shape_cast %16 : vector<64x32xbf16> to vector<1x64x32xbf16>
    %21 = tpu.concatenate %17, %18, %19, %20 in 0 : vector<1x64x32xbf16>, vector<1x64x32xbf16>, vector<1x64x32xbf16>, vector<1x64x32xbf16> -> vector<4x64x32xbf16>
    %c0_8 = arith.constant 0 : index
    %c0_9 = arith.constant 0 : index
    %c0_10 = arith.constant 0 : index
    %22 = vector.load %arg5[%c0_8, %c0_9, %c0_10] : memref<1x64x128xbf16, #tpu.memory_space<vmem>>, vector<1x64x128xbf16>
    %23 = vector.shape_cast %22 : vector<1x64x128xbf16> to vector<64x128xbf16>
    %24 = arith.extf %23 : vector<64x128xbf16> to vector<64x128xf32>
    %c0_11 = arith.constant 0 : index
    %c0_12 = arith.constant 0 : index
    %c0_13 = arith.constant 0 : index
    %25 = vector.load %arg17[%c0_11, %c0_12, %c0_13] : memref<4x128x32xbf16, #tpu.memory_space<vmem>>, vector<4x128x32xbf16>
    "tpu.trace_start"() <{level = 10 : i32, message = "hqd,hkd->hqk"}> : () -> ()
    %cst_14 = arith.constant dense<0.000000e+00> : vector<4x64x128xf32>
    %26 = tpu.matmul %21, %25, %cst_14 {dimension_numbers = #tpu.dot_dimension_numbers<[2], [2], [1], [1], [0, 0, 0, 1, 1, 1], [0], [0]>} : vector<4x64x32xbf16>, vector<4x128x32xbf16>, vector<4x64x128xf32> -> vector<4x64x128xf32>
    "tpu.trace_stop"() : () -> ()
    %27 = vector.shape_cast %24 : vector<64x128xf32> to vector<1x64x128xf32>
    %28 = vector.shape_cast %27 : vector<1x64x128xf32> to vector<1x64x128xf32>
    %29 = vector.broadcast %28 : vector<1x64x128xf32> to vector<4x64x128xf32>
    %cst_15 = arith.constant 0.000000e+00 : f32
    %30 = vector.broadcast %cst_15 : f32 to vector<4x64x128xf32>
    %31 = arith.cmpf oeq, %29, %30 : vector<4x64x128xf32>
    %cst_16 = arith.constant -1.000000e+09 : f32
    %32 = vector.broadcast %cst_16 : f32 to vector<4x64x128xf32>
    %33 = arith.select %31, %32, %26 : vector<4x64x128xi1>, vector<4x64x128xf32>
    %c0_17 = arith.constant 0 : index
    %c0_18 = arith.constant 0 : index
    %c0_19 = arith.constant 0 : index
    %c0_20 = arith.constant 0 : index
    %34 = vector.load %arg15[%c0_17, %c0_18, %c0_19, %c0_20] : memref<1x4x64x128xf32, #tpu.memory_space<vmem>>, vector<1x4x64x128xf32>
    %35 = vector.shape_cast %34 : vector<1x4x64x128xf32> to vector<4x64x128xf32>
    %36 = vector.shape_cast %33 : vector<4x64x128xf32> to vector<1x4x64x128xf32>
    tpu.vector_store %arg15[%c0_17, %c0_18, %c0_19, %c0_20], %36 {strides = array<i32>} : memref<1x4x64x128xf32, #tpu.memory_space<vmem>>, vector<1x4x64x128xf32>,
    %cst_21 = arith.constant dense<0xFF800000> : vector<4x64xf32>
    %37 = vector.multi_reduction <maximumf>, %33, %cst_21 [2] : vector<4x64x128xf32> to vector<4x64xf32>
    %38 = vector.shape_cast %37 : vector<4x64xf32> to vector<4x64x1xf32>
    %39 = vector.broadcast %38 : vector<4x64x1xf32> to vector<4x64x128xf32>
    %40 = arith.subf %33, %39 : vector<4x64x128xf32>
    %41 = math.exp %40 : vector<4x64x128xf32>
    %cst_22 = arith.constant dense<0.000000e+00> : vector<4x64xf32>
    %42 = vector.multi_reduction <add>, %41, %cst_22 [2] : vector<4x64x128xf32> to vector<4x64xf32>
    %43 = vector.shape_cast %42 : vector<4x64xf32> to vector<4x64x1xf32>
    %44 = tpu.reciprocal %43 {approx = true} : vector<4x64x1xf32> -> vector<4x64x1xf32>
    %45 = vector.broadcast %44 : vector<4x64x1xf32> to vector<4x64x128xf32>
    %46 = arith.mulf %41, %45 : vector<4x64x128xf32>
    %47 = arith.mulf %46, %29 : vector<4x64x128xf32>
    %cst_23 = arith.constant dense<0.000000e+00> : vector<4x64xf32>
    %48 = vector.multi_reduction <add>, %47, %cst_23 [2] : vector<4x64x128xf32> to vector<4x64xf32>
    %49 = vector.shape_cast %48 : vector<4x64xf32> to vector<4x64x1xf32>
    %cst_24 = arith.constant 9.99999982E-14 : f32
    %50 = vector.broadcast %cst_24 : f32 to vector<4x64x1xf32>
    %51 = arith.addf %49, %50 : vector<4x64x1xf32>
    %52 = tpu.reciprocal %51 {approx = true} : vector<4x64x1xf32> -> vector<4x64x1xf32>
    %53 = vector.broadcast %52 : vector<4x64x1xf32> to vector<4x64x128xf32>
    %54 = arith.mulf %47, %53 : vector<4x64x128xf32>
    %c0_25 = arith.constant 0 : index
    %c0_26 = arith.constant 0 : index
    %c0_27 = arith.constant 0 : index
    %c0_28 = arith.constant 0 : index
    %55 = vector.load %arg16[%c0_25, %c0_26, %c0_27, %c0_28] : memref<1x4x64x128xf32, #tpu.memory_space<vmem>>, vector<1x4x64x128xf32>
    %56 = vector.shape_cast %55 : vector<1x4x64x128xf32> to vector<4x64x128xf32>
    %57 = vector.shape_cast %54 : vector<4x64x128xf32> to vector<1x4x64x128xf32>
    tpu.vector_store %arg16[%c0_25, %c0_26, %c0_27, %c0_28], %57 {strides = array<i32>} : memref<1x4x64x128xf32, #tpu.memory_space<vmem>>, vector<1x4x64x128xf32>,
    %58 = arith.truncf %54 : vector<4x64x128xf32> to vector<4x64x128xbf16>
    %c0_29 = arith.constant 0 : index
    %c0_30 = arith.constant 0 : index
    %c0_31 = arith.constant 0 : index
    %59 = vector.load %arg18[%c0_29, %c0_30, %c0_31] : memref<4x128x32xbf16, #tpu.memory_space<vmem>>, vector<4x128x32xbf16>
    "tpu.trace_start"() <{level = 10 : i32, message = "hqk,hkd->hqd"}> : () -> ()
    %cst_32 = arith.constant dense<0.000000e+00> : vector<4x64x32xf32>
    %60 = tpu.matmul %58, %59, %cst_32 {dimension_numbers = #tpu.dot_dimension_numbers<[2], [1], [1], [2], [0, 0, 0, 1, 1, 2], [0], [0]>} : vector<4x64x128xbf16>, vector<4x128x32xbf16>, vector<4x64x32xf32> -> vector<4x64x32xf32>
    "tpu.trace_stop"() : () -> ()
    %61 = arith.truncf %60 : vector<4x64x32xf32> to vector<4x64x32xbf16>
    %62 = vector.extract_strided_slice %61 {offsets = [0, 0, 0], sizes = [1, 64, 32], strides = [1, 1, 1]} : vector<4x64x32xbf16> to vector<1x64x32xbf16>
    %63 = vector.shape_cast %62 : vector<1x64x32xbf16> to vector<64x32xbf16>
    %64 = vector.extract_strided_slice %61 {offsets = [1, 0, 0], sizes = [1, 64, 32], strides = [1, 1, 1]} : vector<4x64x32xbf16> to vector<1x64x32xbf16>
    %65 = vector.shape_cast %64 : vector<1x64x32xbf16> to vector<64x32xbf16>
    %66 = vector.extract_strided_slice %61 {offsets = [2, 0, 0], sizes = [1, 64, 32], strides = [1, 1, 1]} : vector<4x64x32xbf16> to vector<1x64x32xbf16>
    %67 = vector.shape_cast %66 : vector<1x64x32xbf16> to vector<64x32xbf16>
    %68 = vector.extract_strided_slice %61 {offsets = [3, 0, 0], sizes = [1, 64, 32], strides = [1, 1, 1]} : vector<4x64x32xbf16> to vector<1x64x32xbf16>
    %69 = vector.shape_cast %68 : vector<1x64x32xbf16> to vector<64x32xbf16>
    %70 = tpu.concatenate %63, %65, %67, %69 in 1 : vector<64x32xbf16>, vector<64x32xbf16>, vector<64x32xbf16>, vector<64x32xbf16> -> vector<64x128xbf16>
    %c0_33 = arith.constant 0 : index
    %c0_34 = arith.constant 0 : index
    %71 = vector.load %arg12[%c0_33, %c0_34] : memref<128x128xbf16, #tpu.memory_space<vmem>>, vector<128x128xbf16>
    %cst_35 = arith.constant dense<0.000000e+00> : vector<64x128xf32>
    %72 = tpu.matmul %70, %71, %cst_35 {dimension_numbers = #tpu.dot_dimension_numbers<[1], [0], [0], [1], [0, 0, 1, 1], [], []>} : vector<64x128xbf16>, vector<128x128xbf16>, vector<64x128xf32> -> vector<64x128xf32>
    %c0_36 = arith.constant 0 : index
    %c0_37 = arith.constant 0 : index
    %73 = vector.load %arg13[%c0_36, %c0_37] : memref<1x128xf32, #tpu.memory_space<vmem>>, vector<1x128xf32>
    %74 = vector.broadcast %73 : vector<1x128xf32> to vector<64x128xf32>
    %75 = arith.addf %72, %74 : vector<64x128xf32>
    %c0_38 = arith.constant 0 : index
    %c0_39 = arith.constant 0 : index
    %c0_40 = arith.constant 0 : index
    %76 = vector.load %arg14[%c0_38, %c0_39, %c0_40] : memref<1x64x128xf32, #tpu.memory_space<vmem>>, vector<1x64x128xf32>
    %77 = vector.shape_cast %76 : vector<1x64x128xf32> to vector<64x128xf32>
    %78 = vector.shape_cast %75 : vector<64x128xf32> to vector<1x64x128xf32>
    tpu.vector_store %arg14[%c0_38, %c0_39, %c0_40], %78 {strides = array<i32>} : memref<1x64x128xf32, #tpu.memory_space<vmem>>, vector<1x64x128xf32>,
    return
  }
  func.func @transform_0(%arg0: i32, %arg1: i32) -> (i32, i32, i32) {
    %c0_i32 = arith.constant 0 : i32
    %c0_i32_0 = arith.constant 0 : i32
    return %arg0, %arg1, %c0_i32 : i32, i32, i32
  }
  func.func @transform_1(%arg0: i32, %arg1: i32) -> (i32, i32, i32) {
    %c0_i32 = arith.constant 0 : i32
    %c0_i32_0 = arith.constant 0 : i32
    %c0_i32_1 = arith.constant 0 : i32
    return %arg0, %c0_i32, %c0_i32_0 : i32, i32, i32
  }
  func.func @transform_2(%arg0: i32, %arg1: i32) -> (i32, i32, i32) {
    %c0_i32 = arith.constant 0 : i32
    %c0_i32_0 = arith.constant 0 : i32
    %c0_i32_1 = arith.constant 0 : i32
    return %arg0, %c0_i32, %c0_i32_0 : i32, i32, i32
  }
  func.func @transform_3(%arg0: i32, %arg1: i32) -> (i32, i32, i32) {
    %c0_i32 = arith.constant 0 : i32
    %c0_i32_0 = arith.constant 0 : i32
    return %arg0, %arg1, %c0_i32 : i32, i32, i32
  }
  func.func @transform_4(%arg0: i32, %arg1: i32) -> (i32, i32) {
    %c0_i32 = arith.constant 0 : i32
    %c0_i32_0 = arith.constant 0 : i32
    %c0_i32_1 = arith.constant 0 : i32
    return %c0_i32, %c0_i32_0 : i32, i32
  }
  func.func @transform_5(%arg0: i32, %arg1: i32) -> (i32, i32) {
    %c0_i32 = arith.constant 0 : i32
    %c0_i32_0 = arith.constant 0 : i32
    %c0_i32_1 = arith.constant 0 : i32
    return %c0_i32, %c0_i32_0 : i32, i32
  }
  func.func @transform_6(%arg0: i32, %arg1: i32) -> (i32, i32) {
    %c0_i32 = arith.constant 0 : i32
    %c0_i32_0 = arith.constant 0 : i32
    %c0_i32_1 = arith.constant 0 : i32
    return %c0_i32, %c0_i32_0 : i32, i32
  }
  func.func @transform_7(%arg0: i32, %arg1: i32) -> (i32, i32) {
    %c0_i32 = arith.constant 0 : i32
    %c0_i32_0 = arith.constant 0 : i32
    %c0_i32_1 = arith.constant 0 : i32
    return %c0_i32, %c0_i32_0 : i32, i32
  }
  func.func @transform_8(%arg0: i32, %arg1: i32) -> (i32, i32) {
    %c0_i32 = arith.constant 0 : i32
    %c0_i32_0 = arith.constant 0 : i32
    %c0_i32_1 = arith.constant 0 : i32
    return %c0_i32, %c0_i32_0 : i32, i32
  }
  func.func @transform_9(%arg0: i32, %arg1: i32) -> (i32, i32) {
    %c0_i32 = arith.constant 0 : i32
    %c0_i32_0 = arith.constant 0 : i32
    %c0_i32_1 = arith.constant 0 : i32
    return %c0_i32, %c0_i32_0 : i32, i32
  }
  func.func @transform_10(%arg0: i32, %arg1: i32) -> (i32, i32) {
    %c0_i32 = arith.constant 0 : i32
    %c0_i32_0 = arith.constant 0 : i32
    %c0_i32_1 = arith.constant 0 : i32
    return %c0_i32, %c0_i32_0 : i32, i32
  }
  func.func @transform_11(%arg0: i32, %arg1: i32) -> (i32, i32) {
    %c0_i32 = arith.constant 0 : i32
    %c0_i32_0 = arith.constant 0 : i32
    %c0_i32_1 = arith.constant 0 : i32
    return %c0_i32, %c0_i32_0 : i32, i32
  }
  func.func @transform_12(%arg0: i32, %arg1: i32) -> (i32, i32, i32) {
    %c0_i32 = arith.constant 0 : i32
    %c0_i32_0 = arith.constant 0 : i32
    return %arg0, %arg1, %c0_i32 : i32, i32, i32
  }
  func.func @transform_13(%arg0: i32, %arg1: i32) -> (i32, i32, i32, i32) {
    %c0_i32 = arith.constant 0 : i32
    %c0_i32_0 = arith.constant 0 : i32
    %c0_i32_1 = arith.constant 0 : i32
    return %arg0, %c0_i32, %arg1, %c0_i32_0 : i32, i32, i32, i32
  }
  func.func @transform_14(%arg0: i32, %arg1: i32) -> (i32, i32, i32, i32) {
    %c0_i32 = arith.constant 0 : i32
    %c0_i32_0 = arith.constant 0 : i32
    %c0_i32_1 = arith.constant 0 : i32
    return %arg0, %c0_i32, %arg1, %c0_i32_0 : i32, i32, i32, i32
  }
}

</mosaic_0001>

<llo_original>
// kernel: tpu_custom_call.1
$region0: #{tpu_custom_call.1}
  #allocation0 [shape = 'u32[]', space=smem, size = 0x4, offset = 0x4, fixed_abs, tag = 'smem constant byte address 0x4 - core index']
  #allocation1 [shape = 'u32[144,128]{1,0:T(1,128)}', space=vmem, size = 0x12000, scoped, tag = 'internal scratch']
  #allocation2 [shape = 'bf16[4,128,32]{2,1,0:T(16,128)(2,1)}', space=vmem, size = 0x20000, scoped, tag = 'scratch operand']
  #allocation3 [shape = 'bf16[4,128,32]{2,1,0:T(16,128)(2,1)}', space=vmem, size = 0x20000, scoped, tag = 'scratch operand']
  #allocation22 [shape = 's32[]', space=sflag, size = 0x4, offset = 0, fixed_abs, tag = 'sflag constant byte address 0x0 - dummy sync flag']
  #allocation24 [shape = 's32[]', space=sflag, size = 0x4, offset = 0, fixed_abs, tag = 'sflag constant byte address 0x0 - dummy sync flag']
  %s0 = inlined_call_operand.hbm [shape: bf16[2,128,128], index: 0, kind: input, shape index: {}]
  %s1 = inlined_call_operand.hbm [shape: bf16[2,128,128], index: 1, kind: input, shape index: {}]
  %s2 = inlined_call_operand.hbm [shape: bf16[2,128,128], index: 2, kind: input, shape index: {}]
  %s3 = inlined_call_operand.hbm [shape: bf16[2,128,128], index: 3, kind: input, shape index: {}]
  %s4 = inlined_call_operand.hbm [shape: bf16[128,128], index: 4, kind: input, shape index: {}]
  %s5 = inlined_call_operand.vmem [shape: f32[1,128], index: 5, kind: input, shape index: {}]
  %s6 = inlined_call_operand.hbm [shape: bf16[128,128], index: 6, kind: input, shape index: {}]
  %s7 = inlined_call_operand.vmem [shape: f32[1,128], index: 7, kind: input, shape index: {}]
  %s8 = inlined_call_operand.hbm [shape: bf16[128,128], index: 8, kind: input, shape index: {}]
  %s9 = inlined_call_operand.vmem [shape: f32[1,128], index: 9, kind: input, shape index: {}]
  %s10 = inlined_call_operand.hbm [shape: bf16[128,128], index: 10, kind: input, shape index: {}]
  %s11 = inlined_call_operand.vmem [shape: f32[1,128], index: 11, kind: input, shape index: {}]
  %s12 = inlined_call_operand.hbm [shape: f32[2,128,128], index: 12, kind: output, shape index: {0}]
  %s13 = inlined_call_operand.hbm [shape: f32[2,4,128,128], index: 13, kind: output, shape index: {1}]
  %s14 = inlined_call_operand.hbm [shape: f32[2,4,128,128], index: 14, kind: output, shape index: {2}]
  %15 = xla_tuple %s12, %s13, %s14
  %s16 = sld [smem:[#allocation0]]
  $region133: #{tpu_custom_call.1} parent=0
    _
  %s18 = ssub.s32 1, %s16
  %s19 = scalar_select 0, %s18, %s16
  $region1: #{tpu_custom_call.1} parent=0
    #allocation4 [shape = 'u8[32768]{0}', space=vmem, size = 0x8000, scoped, tag = 'input window, operand 0']
    #allocation5 [shape = 's32[2]{0}', space=sflag, size = 0x8, scoped, tag = 'scoped memory for tpu_custom_call.1']
    #allocation6 [shape = 's32[2]{0}', space=sflag, size = 0x8, scoped, tag = 'scoped memory for tpu_custom_call.1']
    #allocation7 [shape = 'u8[65536]{0}', space=vmem, size = 0x10000, scoped, tag = 'input window, operand 1']
    #allocation8 [shape = 's32[2]{0}', space=sflag, size = 0x8, scoped, tag = 'scoped memory for tpu_custom_call.1']
    #allocation9 [shape = 'u8[65536]{0}', space=vmem, size = 0x10000, scoped, tag = 'input window, operand 2']
    #allocation10 [shape = 'u8[32768]{0}', space=vmem, size = 0x8000, scoped, tag = 'input window, operand 3']
    #allocation11 [shape = 's32[2]{0}', space=sflag, size = 0x8, scoped, tag = 'scoped memory for tpu_custom_call.1']
    #allocation12 [shape = 'u8[32768]{0}', space=vmem, size = 0x8000, scoped, tag = 'input window, operand 4, single buffered']
    #allocation13 [shape = 'u8[32768]{0}', space=vmem, size = 0x8000, scoped, tag = 'input window, operand 6, single buffered']
    #allocation14 [shape = 's32[1]{0}', space=sflag, size = 0x4, scoped, tag = 'scoped memory for tpu_custom_call.1']
    #allocation15 [shape = 'u8[32768]{0}', space=vmem, size = 0x8000, scoped, tag = 'input window, operand 8, single buffered']
    #allocation16 [shape = 'u8[32768]{0}', space=vmem, size = 0x8000, scoped, tag = 'input window, operand 10, single buffered']
    #allocation17 [shape = 's32[1]{0}', space=sflag, size = 0x4, scoped, tag = 'scoped memory for tpu_custom_call.1']
    #allocation18 [shape = 'u8[65536]{0}', space=vmem, size = 0x10000, scoped, tag = 'output window, operand 0']
    #allocation19 [shape = 'u8[262144]{0}', space=vmem, size = 0x40000, scoped, tag = 'output window, operand 1']
    #allocation20 [shape = 's32[2]{0}', space=sflag, size = 0x8, scoped, tag = 'scoped memory for tpu_custom_call.1']
    #allocation21 [shape = 'u8[262144]{0}', space=vmem, size = 0x40000, scoped, tag = 'output window, operand 2']
    %20 = vsyncpa [#allocation5], 0
    %s21 = scalar_lea.sflag [#allocation5], 1
    %22 = vsyncpa %s21, 0
    %23 = vsyncpa [#allocation8], 0
    %s24 = scalar_lea.sflag [#allocation8], 1
    %25 = vsyncpa %s24, 0
    %26 = vsyncpa [#allocation11], 0
    %s27 = scalar_lea.sflag [#allocation11], 1
    %28 = vsyncpa %s27, 0
    %29 = vsyncpa [#allocation14], 0
    %30 = vsyncpa [#allocation17], 0
    %31 = vsyncpa [#allocation6], 0
    %s32 = scalar_lea.sflag [#allocation6], 1
    %33 = vsyncpa %s32, 0
    %34 = vsyncpa [#allocation20], 0
    %s35 = scalar_lea.sflag [#allocation20], 1
    %36 = vsyncpa %s35, 0
    loop: start=0, step=1, limit=6
    $region2: #{tpu_custom_call.1} parent=1 // loop_pre_header
      _
    $region3: #{tpu_custom_call.1} parent=1 // loop_header
      %s38 = sphi 0, %s42
      %p39 = scmp.ge.s32.totalorder %s38, 6
      %s45 = sphi 0, %s57
      %s46 = sphi 0, %s53
      %s47 = sphi 0, %s45
      %s48 = sphi 0, %s46
      %s49 = sphi 0, %s47
      %s50 = sphi 0, %s48
      %s62 = sphi 0, %s64
      %s65 = sphi 0, %s62
      %s66 = sphi 0, %s65
      %s82 = sphi 0, %s66
      %s88 = sphi 0, %s90
      %s91 = sphi 0, %s88
      %s92 = sphi 0, %s91
      %s108 = sphi 0, %s92
      %s114 = sphi 0, %s116
      %s117 = sphi 0, %s114
      %s118 = sphi 0, %s117
      %s134 = sphi 0, %s118
      %s142 = sphi 0, %s144
      %s145 = sphi 0, %s142
      %s146 = sphi 0, %s145
      %s162 = sphi 0, %s146
      %s166 = sphi 0, %s166
      %s168 = sphi 0, %s166
      %s169 = sphi 0, %s168
      %s183 = sphi 0, %s169
      %s187 = sphi 0, %s187
      %s189 = sphi 0, %s187
      %s190 = sphi 0, %s189
      %s204 = sphi 0, %s190
      %s208 = sphi 0, %s208
      %s210 = sphi 0, %s208
      %s211 = sphi 0, %s210
      %s225 = sphi 0, %s211
      %s229 = sphi 0, %s229
      %s231 = sphi 0, %s229
      %s232 = sphi 0, %s231
      %s246 = sphi 0, %s232
      %s250 = sphi 0, %s250
      %s252 = sphi 0, %s250
      %s253 = sphi 0, %s252
      %s267 = sphi 0, %s253
      %s271 = sphi 0, %s271
      %s273 = sphi 0, %s271
      %s274 = sphi 0, %s273
      %s288 = sphi 0, %s274
      %s292 = sphi 0, %s292
      %s294 = sphi 0, %s292
      %s295 = sphi 0, %s294
      %s309 = sphi 0, %s295
      %s313 = sphi 0, %s313
      %s315 = sphi 0, %s313
      %s316 = sphi 0, %s315
      %s330 = sphi 0, %s316
      %s338 = sphi 0, %s340
      %s341 = sphi 0, %s338
      %s342 = sphi 0, %s341
      %s358 = sphi 0, %s342
      %s366 = sphi 0, %s368
      %s369 = sphi 0, %s366
      %s370 = sphi 0, %s369
      %s386 = sphi 0, %s370
      %s394 = sphi 0, %s396
      %s397 = sphi 0, %s394
      %s398 = sphi 0, %s397
      %s414 = sphi 0, %s398
    $region4: #{tpu_custom_call.1} parent=1 // loop_header_branch
      %41 = sbr.rel (%p39) target = $region8
    $region5: #{tpu_custom_call.1} parent=1 // loop_body
      %s43 = ssub.s32 %s38, 1
      %s44 = ssub.s32 %s38, 2
      %s51 = sadd.s32 1, %s46
      %p52 = scmp.ge.s32.totalorder %s51, 2
      %s53 = scalar_select %p52, 0, %s51
      %s54 = sadd.s32 1, %s45
      %s55 = scalar_select %p52, %s54, %s45
      %p56 = scmp.ge.s32.totalorder %s55, 2
      %s57 = scalar_select %p56, 0, %s55
      %s58 = ssub.s32 %s45, %s57
      %s59 = ssub.s32 %s46, %s53
      %s60 = sor.u32 %s58, %s59
      %p61 = scmp.eq.s32.totalorder %s60, 0
      %s63 = sadd.s32 %s62, 1
      %s64 = scalar_select %p61, %s62, %s63
      %p67 = pneg %p61
      %p68 = scmp.eq.s32.totalorder %s38, 3
      %p69 = por %p67, %p68
      %p70 = scmp.ne.s32.totalorder %s62, %s65
      %p71 = scmp.eq.s32.totalorder %s38, 0
      %p72 = por %p70, %p71
      %p73 = scmp.ne.s32.totalorder %s62, %s65
      %p74 = scmp.eq.s32.totalorder %s43, 3
      %p75 = por %p73, %p74
      %p76 = scmp.ne.s32.totalorder %s65, %s66
      %p77 = scmp.eq.s32.totalorder %s43, 0
      %p78 = por %p76, %p77
      %p79 = scmp.ne.s32.totalorder %s65, %s66
      %p80 = scmp.eq.s32.totalorder %s44, 3
      %p81 = por %p79, %p80
      %p83 = scmp.ne.s32.totalorder %s66, %s82
      %p84 = scmp.eq.s32.totalorder %s44, 0
      %p85 = por %p83, %p84
      %s86 = ssub.s32 %s45, %s57
      %p87 = scmp.eq.s32.totalorder %s86, 0
      %s89 = sadd.s32 %s88, 1
      %s90 = scalar_select %p87, %s88, %s89
      %p93 = pneg %p87
      %p94 = scmp.eq.s32.totalorder %s38, 3
      %p95 = por %p93, %p94
      %p96 = scmp.ne.s32.totalorder %s88, %s91
      %p97 = scmp.eq.s32.totalorder %s38, 0
      %p98 = por %p96, %p97
      %p99 = scmp.ne.s32.totalorder %s88, %s91
      %p100 = scmp.eq.s32.totalorder %s43, 3
      %p101 = por %p99, %p100
      %p102 = scmp.ne.s32.totalorder %s91, %s92
      %p103 = scmp.eq.s32.totalorder %s43, 0
      %p104 = por %p102, %p103
      %p105 = scmp.ne.s32.totalorder %s91, %s92
      %p106 = scmp.eq.s32.totalorder %s44, 3
      %p107 = por %p105, %p106
      %p109 = scmp.ne.s32.totalorder %s92, %s108
      %p110 = scmp.eq.s32.totalorder %s44, 0
      %p111 = por %p109, %p110
      %s112 = ssub.s32 %s45, %s57
      %p113 = scmp.eq.s32.totalorder %s112, 0
      %s115 = sadd.s32 %s114, 1
      %s116 = scalar_select %p113, %s114, %s115
      %p119 = pneg %p113
      %p120 = scmp.eq.s32.totalorder %s38, 3
      %p121 = por %p119, %p120
      %p122 = scmp.ne.s32.totalorder %s114, %s117
      %p123 = scmp.eq.s32.totalorder %s38, 0
      %p124 = por %p122, %p123
      %p125 = scmp.ne.s32.totalorder %s114, %s117
      %p126 = scmp.eq.s32.totalorder %s43, 3
      %p127 = por %p125, %p126
      %p128 = scmp.ne.s32.totalorder %s117, %s118
      %p129 = scmp.eq.s32.totalorder %s43, 0
      %p130 = por %p128, %p129
      %p131 = scmp.ne.s32.totalorder %s117, %s118
      %p132 = scmp.eq.s32.totalorder %s44, 3
      %p133 = por %p131, %p132
      %p135 = scmp.ne.s32.totalorder %s118, %s134
      %p136 = scmp.eq.s32.totalorder %s44, 0
      %p137 = por %p135, %p136
      %s138 = ssub.s32 %s45, %s57
      %s139 = ssub.s32 %s46, %s53
      %s140 = sor.u32 %s138, %s139
      %p141 = scmp.eq.s32.totalorder %s140, 0
      %s143 = sadd.s32 %s142, 1
      %s144 = scalar_select %p141, %s142, %s143
      %p147 = pneg %p141
      %p148 = scmp.eq.s32.totalorder %s38, 3
      %p149 = por %p147, %p148
      %p150 = scmp.ne.s32.totalorder %s142, %s145
      %p151 = scmp.eq.s32.totalorder %s38, 0
      %p152 = por %p150, %p151
      %p153 = scmp.ne.s32.totalorder %s142, %s145
      %p154 = scmp.eq.s32.totalorder %s43, 3
      %p155 = por %p153, %p154
      %p156 = scmp.ne.s32.totalorder %s145, %s146
      %p157 = scmp.eq.s32.totalorder %s43, 0
      %p158 = por %p156, %p157
      %p159 = scmp.ne.s32.totalorder %s145, %s146
      %p160 = scmp.eq.s32.totalorder %s44, 3
      %p161 = por %p159, %p160
      %p163 = scmp.ne.s32.totalorder %s146, %s162
      %p164 = scmp.eq.s32.totalorder %s44, 0
      %p165 = por %p163, %p164
      %s167 = sadd.s32 %s166, 1
      %p170 = scmp.eq.s32.totalorder %s38, 3
      %p171 = scmp.ne.s32.totalorder %s166, %s168
      %p172 = scmp.eq.s32.totalorder %s38, 0
      %p173 = por %p171, %p172
      %p174 = scmp.ne.s32.totalorder %s166, %s168
      %p175 = scmp.eq.s32.totalorder %s43, 3
      %p176 = por %p174, %p175
      %p177 = scmp.ne.s32.totalorder %s168, %s169
      %p178 = scmp.eq.s32.totalorder %s43, 0
      %p179 = por %p177, %p178
      %p180 = scmp.ne.s32.totalorder %s168, %s169
      %p181 = scmp.eq.s32.totalorder %s44, 3
      %p182 = por %p180, %p181
      %p184 = scmp.ne.s32.totalorder %s169, %s183
      %p185 = scmp.eq.s32.totalorder %s44, 0
      %p186 = por %p184, %p185
      %s188 = sadd.s32 %s187, 1
      %p191 = scmp.eq.s32.totalorder %s38, 3
      %p192 = scmp.ne.s32.totalorder %s187, %s189
      %p193 = scmp.eq.s32.totalorder %s38, 0
      %p194 = por %p192, %p193
      %p195 = scmp.ne.s32.totalorder %s187, %s189
      %p196 = scmp.eq.s32.totalorder %s43, 3
      %p197 = por %p195, %p196
      %p198 = scmp.ne.s32.totalorder %s189, %s190
      %p199 = scmp.eq.s32.totalorder %s43, 0
      %p200 = por %p198, %p199
      %p201 = scmp.ne.s32.totalorder %s189, %s190
      %p202 = scmp.eq.s32.totalorder %s44, 3
      %p203 = por %p201, %p202
      %p205 = scmp.ne.s32.totalorder %s190, %s204
      %p206 = scmp.eq.s32.totalorder %s44, 0
      %p207 = por %p205, %p206
      %s209 = sadd.s32 %s208, 1
      %p212 = scmp.eq.s32.totalorder %s38, 3
      %p213 = scmp.ne.s32.totalorder %s208, %s210
      %p214 = scmp.eq.s32.totalorder %s38, 0
      %p215 = por %p213, %p214
      %p216 = scmp.ne.s32.totalorder %s208, %s210
      %p217 = scmp.eq.s32.totalorder %s43, 3
      %p218 = por %p216, %p217
      %p219 = scmp.ne.s32.totalorder %s210, %s211
      %p220 = scmp.eq.s32.totalorder %s43, 0
      %p221 = por %p219, %p220
      %p222 = scmp.ne.s32.totalorder %s210, %s211
      %p223 = scmp.eq.s32.totalorder %s44, 3
      %p224 = por %p222, %p223
      %p226 = scmp.ne.s32.totalorder %s211, %s225
      %p227 = scmp.eq.s32.totalorder %s44, 0
      %p228 = por %p226, %p227
      %s230 = sadd.s32 %s229, 1
      %p233 = scmp.eq.s32.totalorder %s38, 3
      %p234 = scmp.ne.s32.totalorder %s229, %s231
      %p235 = scmp.eq.s32.totalorder %s38, 0
      %p236 = por %p234, %p235
      %p237 = scmp.ne.s32.totalorder %s229, %s231
      %p238 = scmp.eq.s32.totalorder %s43, 3
      %p239 = por %p237, %p238
      %p240 = scmp.ne.s32.totalorder %s231, %s232
      %p241 = scmp.eq.s32.totalorder %s43, 0
      %p242 = por %p240, %p241
      %p243 = scmp.ne.s32.totalorder %s231, %s232
      %p244 = scmp.eq.s32.totalorder %s44, 3
      %p245 = por %p243, %p244
      %p247 = scmp.ne.s32.totalorder %s232, %s246
      %p248 = scmp.eq.s32.totalorder %s44, 0
      %p249 = por %p247, %p248
      %s251 = sadd.s32 %s250, 1
      %p254 = scmp.eq.s32.totalorder %s38, 3
      %p255 = scmp.ne.s32.totalorder %s250, %s252
      %p256 = scmp.eq.s32.totalorder %s38, 0
      %p257 = por %p255, %p256
      %p258 = scmp.ne.s32.totalorder %s250, %s252
      %p259 = scmp.eq.s32.totalorder %s43, 3
      %p260 = por %p258, %p259
      %p261 = scmp.ne.s32.totalorder %s252, %s253
      %p262 = scmp.eq.s32.totalorder %s43, 0
      %p263 = por %p261, %p262
      %p264 = scmp.ne.s32.totalorder %s252, %s253
      %p265 = scmp.eq.s32.totalorder %s44, 3
      %p266 = por %p264, %p265
      %p268 = scmp.ne.s32.totalorder %s253, %s267
      %p269 = scmp.eq.s32.totalorder %s44, 0
      %p270 = por %p268, %p269
      %s272 = sadd.s32 %s271, 1
      %p275 = scmp.eq.s32.totalorder %s38, 3
      %p276 = scmp.ne.s32.totalorder %s271, %s273
      %p277 = scmp.eq.s32.totalorder %s38, 0
      %p278 = por %p276, %p277
      %p279 = scmp.ne.s32.totalorder %s271, %s273
      %p280 = scmp.eq.s32.totalorder %s43, 3
      %p281 = por %p279, %p280
      %p282 = scmp.ne.s32.totalorder %s273, %s274
      %p283 = scmp.eq.s32.totalorder %s43, 0
      %p284 = por %p282, %p283
      %p285 = scmp.ne.s32.totalorder %s273, %s274
      %p286 = scmp.eq.s32.totalorder %s44, 3
      %p287 = por %p285, %p286
      %p289 = scmp.ne.s32.totalorder %s274, %s288
      %p290 = scmp.eq.s32.totalorder %s44, 0
      %p291 = por %p289, %p290
      %s293 = sadd.s32 %s292, 1
      %p296 = scmp.eq.s32.totalorder %s38, 3
      %p297 = scmp.ne.s32.totalorder %s292, %s294
      %p298 = scmp.eq.s32.totalorder %s38, 0
      %p299 = por %p297, %p298
      %p300 = scmp.ne.s32.totalorder %s292, %s294
      %p301 = scmp.eq.s32.totalorder %s43, 3
      %p302 = por %p300, %p301
      %p303 = scmp.ne.s32.totalorder %s294, %s295
      %p304 = scmp.eq.s32.totalorder %s43, 0
      %p305 = por %p303, %p304
      %p306 = scmp.ne.s32.totalorder %s294, %s295
      %p307 = scmp.eq.s32.totalorder %s44, 3
      %p308 = por %p306, %p307
      %p310 = scmp.ne.s32.totalorder %s295, %s309
      %p311 = scmp.eq.s32.totalorder %s44, 0
      %p312 = por %p310, %p311
      %s314 = sadd.s32 %s313, 1
      %p317 = scmp.eq.s32.totalorder %s38, 3
      %p318 = scmp.ne.s32.totalorder %s313, %s315
      %p319 = scmp.eq.s32.totalorder %s38, 0
      %p320 = por %p318, %p319
      %p321 = scmp.ne.s32.totalorder %s313, %s315
      %p322 = scmp.eq.s32.totalorder %s43, 3
      %p323 = por %p321, %p322
      %p324 = scmp.ne.s32.totalorder %s315, %s316
      %p325 = scmp.eq.s32.totalorder %s43, 0
      %p326 = por %p324, %p325
      %p327 = scmp.ne.s32.totalorder %s315, %s316
      %p328 = scmp.eq.s32.totalorder %s44, 3
      %p329 = por %p327, %p328
      %p331 = scmp.ne.s32.totalorder %s316, %s330
      %p332 = scmp.eq.s32.totalorder %s44, 0
      %p333 = por %p331, %p332
      %s334 = ssub.s32 %s45, %s57
      %s335 = ssub.s32 %s46, %s53
      %s336 = sor.u32 %s334, %s335
      %p337 = scmp.eq.s32.totalorder %s336, 0
      %s339 = sadd.s32 %s338, 1
      %s340 = scalar_select %p337, %s338, %s339
      %p343 = pneg %p337
      %p344 = scmp.eq.s32.totalorder %s38, 3
      %p345 = por %p343, %p344
      %p346 = scmp.ne.s32.totalorder %s338, %s341
      %p347 = scmp.eq.s32.totalorder %s38, 0
      %p348 = por %p346, %p347
      %p349 = scmp.ne.s32.totalorder %s338, %s341
      %p350 = scmp.eq.s32.totalorder %s43, 3
      %p351 = por %p349, %p350
      %p352 = scmp.ne.s32.totalorder %s341, %s342
      %p353 = scmp.eq.s32.totalorder %s43, 0
      %p354 = por %p352, %p353
      %p355 = scmp.ne.s32.totalorder %s341, %s342
      %p356 = scmp.eq.s32.totalorder %s44, 3
      %p357 = por %p355, %p356
      %p359 = scmp.ne.s32.totalorder %s342, %s358
      %p360 = scmp.eq.s32.totalorder %s44, 0
      %p361 = por %p359, %p360
      %s362 = ssub.s32 %s45, %s57
      %s363 = ssub.s32 %s46, %s53
      %s364 = sor.u32 %s362, %s363
      %p365 = scmp.eq.s32.totalorder %s364, 0
      %s367 = sadd.s32 %s366, 1
      %s368 = scalar_select %p365, %s366, %s367
      %p371 = pneg %p365
      %p372 = scmp.eq.s32.totalorder %s38, 3
      %p373 = por %p371, %p372
      %p374 = scmp.ne.s32.totalorder %s366, %s369
      %p375 = scmp.eq.s32.totalorder %s38, 0
      %p376 = por %p374, %p375
      %p377 = scmp.ne.s32.totalorder %s366, %s369
      %p378 = scmp.eq.s32.totalorder %s43, 3
      %p379 = por %p377, %p378
      %p380 = scmp.ne.s32.totalorder %s369, %s370
      %p381 = scmp.eq.s32.totalorder %s43, 0
      %p382 = por %p380, %p381
      %p383 = scmp.ne.s32.totalorder %s369, %s370
      %p384 = scmp.eq.s32.totalorder %s44, 3
      %p385 = por %p383, %p384
      %p387 = scmp.ne.s32.totalorder %s370, %s386
      %p388 = scmp.eq.s32.totalorder %s44, 0
      %p389 = por %p387, %p388
      %s390 = ssub.s32 %s45, %s57
      %s391 = ssub.s32 %s46, %s53
      %s392 = sor.u32 %s390, %s391
      %p393 = scmp.eq.s32.totalorder %s392, 0
      %s395 = sadd.s32 %s394, 1
      %s396 = scalar_select %p393, %s394, %s395
      %p399 = pneg %p393
      %p400 = scmp.eq.s32.totalorder %s38, 3
      %p401 = por %p399, %p400
      %p402 = scmp.ne.s32.totalorder %s394, %s397
      %p403 = scmp.eq.s32.totalorder %s38, 0
      %p404 = por %p402, %p403
      %p405 = scmp.ne.s32.totalorder %s394, %s397
      %p406 = scmp.eq.s32.totalorder %s43, 3
      %p407 = por %p405, %p406
      %p408 = scmp.ne.s32.totalorder %s397, %s398
      %p409 = scmp.eq.s32.totalorder %s43, 0
      %p410 = por %p408, %p409
      %p411 = scmp.ne.s32.totalorder %s397, %s398
      %p412 = scmp.eq.s32.totalorder %s44, 3
      %p413 = por %p411, %p412
      %p415 = scmp.ne.s32.totalorder %s398, %s414
      %p416 = scmp.eq.s32.totalorder %s44, 0
      %p417 = por %p415, %p416
      %p418 = scmp.le.s32.totalorder 1, %s38
      %p419 = scmp.lt.s32.totalorder %s38, 5
      %p420 = pnand %p418, %p419
      %p421 = pneg %p420
      // Predicated region
      $region9: #{tpu_custom_call.1} parent=5 // pred_check
        _
      $region10: #{tpu_custom_call.1} parent=5 // pred_check_branch
        %423 = sbr.rel (%p420) target = $region12
      $region11: #{tpu_custom_call.1} parent=5 // pred_region
        %s424 = ssub.s32 %s38, 1
        // Predicated region
        $region13: #{tpu_custom_call.1} parent=11 // pred_check
          %p425 = pneg %p179
        $region14: #{tpu_custom_call.1} parent=11 // pred_check_branch
          %427 = sbr.rel (%p425) target = $region16
        $region15: #{tpu_custom_call.1} parent=11 // pred_region
          %s429 = ssub.s32 1024, 1024
          %430 = vsyncadd [#allocation11], %s429
          %s431 = sshll.u32 [#allocation12], 4
          %s432 = int_to_ptr.vmem [resolvable:$true] %s431
          %437 = dma.hbm_to_vmem [thread:$0]  %s4, 1024, %s432, [#allocation11], 64, 64, 4
        $region16: #{tpu_custom_call.1} parent=11 // pred_fallthru
          _
        // Predicated region
        $region17: #{tpu_custom_call.1} parent=11 // pred_check
          %p438 = pneg %p200
        $region18: #{tpu_custom_call.1} parent=11 // pred_check_branch
          %440 = sbr.rel (%p438) target = $region20
        $region19: #{tpu_custom_call.1} parent=11 // pred_region
          _
        $region20: #{tpu_custom_call.1} parent=11 // pred_fallthru
          _
        // Predicated region
        $region21: #{tpu_custom_call.1} parent=11 // pred_check
          %p441 = pneg %p221
        $region22: #{tpu_custom_call.1} parent=11 // pred_check_branch
          %443 = sbr.rel (%p441) target = $region24
        $region23: #{tpu_custom_call.1} parent=11 // pred_region
          %s445 = ssub.s32 1024, 1024
          %446 = vsyncadd [#allocation14], %s445
          %s447 = sshll.u32 [#allocation13], 4
          %s448 = int_to_ptr.vmem [resolvable:$true] %s447
          %453 = dma.hbm_to_vmem [thread:$0]  %s6, 1024, %s448, [#allocation14], 64, 64, 4
        $region24: #{tpu_custom_call.1} parent=11 // pred_fallthru
          _
        // Predicated region
        $region25: #{tpu_custom_call.1} parent=11 // pred_check
          %p454 = pneg %p242
        $region26: #{tpu_custom_call.1} parent=11 // pred_check_branch
          %456 = sbr.rel (%p454) target = $region28
        $region27: #{tpu_custom_call.1} parent=11 // pred_region
          _
        $region28: #{tpu_custom_call.1} parent=11 // pred_fallthru
          _
        // Predicated region
        $region29: #{tpu_custom_call.1} parent=11 // pred_check
          %p457 = pneg %p263
        $region30: #{tpu_custom_call.1} parent=11 // pred_check_branch
          %459 = sbr.rel (%p457) target = $region32
        $region31: #{tpu_custom_call.1} parent=11 // pred_region
          %s461 = ssub.s32 1024, 1024
          %462 = vsyncadd [#allocation14], %s461
          %s463 = sshll.u32 [#allocation15], 4
          %s464 = int_to_ptr.vmem [resolvable:$true] %s463
          %469 = dma.hbm_to_vmem [thread:$0]  %s8, 1024, %s464, [#allocation14], 64, 64, 4
        $region32: #{tpu_custom_call.1} parent=11 // pred_fallthru
          _
        // Predicated region
        $region33: #{tpu_custom_call.1} parent=11 // pred_check
          %p470 = pneg %p284
        $region34: #{tpu_custom_call.1} parent=11 // pred_check_branch
          %472 = sbr.rel (%p470) target = $region36
        $region35: #{tpu_custom_call.1} parent=11 // pred_region
          _
        $region36: #{tpu_custom_call.1} parent=11 // pred_fallthru
          _
        // Predicated region
        $region37: #{tpu_custom_call.1} parent=11 // pred_check
          %p473 = pneg %p305
        $region38: #{tpu_custom_call.1} parent=11 // pred_check_branch
          %475 = sbr.rel (%p473) target = $region40
        $region39: #{tpu_custom_call.1} parent=11 // pred_region
          %s477 = ssub.s32 1024, 1024
          %478 = vsyncadd [#allocation17], %s477
          %s479 = sshll.u32 [#allocation16], 4
          %s480 = int_to_ptr.vmem [resolvable:$true] %s479
          %485 = dma.hbm_to_vmem [thread:$0]  %s10, 1024, %s480, [#allocation17], 64, 64, 4
        $region40: #{tpu_custom_call.1} parent=11 // pred_fallthru
          _
        // Predicated region
        $region41: #{tpu_custom_call.1} parent=11 // pred_check
          %p486 = pneg %p326
        $region42: #{tpu_custom_call.1} parent=11 // pred_check_branch
          %488 = sbr.rel (%p486) target = $region44
        $region43: #{tpu_custom_call.1} parent=11 // pred_region
          _
        $region44: #{tpu_custom_call.1} parent=11 // pred_fallthru
          _
      $region12: #{tpu_custom_call.1} parent=5 // pred_fallthru
        _
      %p489 = scmp.lt.s32.totalorder %s38, 4
      // Predicated region
      $region45: #{tpu_custom_call.1} parent=5 // pred_check
        %p490 = pneg %p489
      $region46: #{tpu_custom_call.1} parent=5 // pred_check_branch
        %492 = sbr.rel (%p490) target = $region48
      $region47: #{tpu_custom_call.1} parent=5 // pred_region
        // Predicated region
        $region49: #{tpu_custom_call.1} parent=47 // pred_check
          %p493 = pneg %p72
        $region50: #{tpu_custom_call.1} parent=47 // pred_check_branch
          %495 = sbr.rel (%p493) target = $region52
        $region51: #{tpu_custom_call.1} parent=47 // pred_region
          %s496 = sand.u32 %s62, 1
          %s497 = scalar_lea.sflag [#allocation5], %s496
          %s498 = sand.u32 %s62, 1
          %s499 = smul.addr %s498, 32
          %s500 = scalar_lea.vmem [#allocation4], %s499
          %s501 = smul.u32 8, %s46
          %s503 = ssub.s32 512, 512
          %504 = vsyncadd %s497, %s503
          %s505 = smul.addr %s45, 16
          %s506 = sadd.s32 %s501, %s505
          %s507 = smul.addr %s506, 64
          %s508 = scalar_lea.hbm %s0, %s507
          %s509 = sshll.u32 %s500, 4
          %s510 = int_to_ptr.vmem [resolvable:$true] %s509
          %515 = dma.hbm_to_vmem [thread:$0]  %s508, 512, %s510, %s497, 64, 64, 4
        $region52: #{tpu_custom_call.1} parent=47 // pred_fallthru
          _
        // Predicated region
        $region53: #{tpu_custom_call.1} parent=47 // pred_check
          %p516 = pneg %p98
        $region54: #{tpu_custom_call.1} parent=47 // pred_check_branch
          %518 = sbr.rel (%p516) target = $region56
        $region55: #{tpu_custom_call.1} parent=47 // pred_region
          %s519 = sand.u32 %s38, 1
          %s520 = scalar_lea.sflag [#allocation8], %s519
          %s521 = sand.u32 %s88, 1
          %s522 = smul.addr %s521, 64
          %s523 = scalar_lea.vmem [#allocation7], %s522
          %s525 = ssub.s32 1024, 1024
          %526 = vsyncadd %s520, %s525
          %s527 = smul.addr %s45, 16
          %s528 = smul.addr %s527, 64
          %s529 = scalar_lea.hbm %s1, %s528
          %s530 = sshll.u32 %s523, 4
          %s531 = int_to_ptr.vmem [resolvable:$true] %s530
          %536 = dma.hbm_to_vmem [thread:$0]  %s529, 1024, %s531, %s520, 64, 64, 4
        $region56: #{tpu_custom_call.1} parent=47 // pred_fallthru
          _
        // Predicated region
        $region57: #{tpu_custom_call.1} parent=47 // pred_check
          %p537 = pneg %p124
        $region58: #{tpu_custom_call.1} parent=47 // pred_check_branch
          %539 = sbr.rel (%p537) target = $region60
        $region59: #{tpu_custom_call.1} parent=47 // pred_region
          %s540 = sand.u32 %s38, 1
          %s541 = scalar_lea.sflag [#allocation8], %s540
          %s542 = sand.u32 %s114, 1
          %s543 = smul.addr %s542, 64
          %s544 = scalar_lea.vmem [#allocation9], %s543
          %s546 = ssub.s32 1024, 1024
          %547 = vsyncadd %s541, %s546
          %s548 = smul.addr %s45, 16
          %s549 = smul.addr %s548, 64
          %s550 = scalar_lea.hbm %s2, %s549
          %s551 = sshll.u32 %s544, 4
          %s552 = int_to_ptr.vmem [resolvable:$true] %s551
          %557 = dma.hbm_to_vmem [thread:$0]  %s550, 1024, %s552, %s541, 64, 64, 4
        $region60: #{tpu_custom_call.1} parent=47 // pred_fallthru
          _
        // Predicated region
        $region61: #{tpu_custom_call.1} parent=47 // pred_check
          %p558 = pneg %p152
        $region62: #{tpu_custom_call.1} parent=47 // pred_check_branch
          %560 = sbr.rel (%p558) target = $region64
        $region63: #{tpu_custom_call.1} parent=47 // pred_region
          %s561 = sand.u32 %s38, 1
          %s562 = scalar_lea.sflag [#allocation11], %s561
          %s563 = sand.u32 %s142, 1
          %s564 = smul.addr %s563, 32
          %s565 = scalar_lea.vmem [#allocation10], %s564
          %s566 = smul.u32 8, %s46
          %s568 = ssub.s32 512, 512
          %569 = vsyncadd %s562, %s568
          %s570 = smul.addr %s45, 16
          %s571 = sadd.s32 %s566, %s570
          %s572 = smul.addr %s571, 64
          %s573 = scalar_lea.hbm %s3, %s572
          %s574 = sshll.u32 %s565, 4
          %s575 = int_to_ptr.vmem [resolvable:$true] %s574
          %580 = dma.hbm_to_vmem [thread:$0]  %s573, 512, %s575, %s562, 64, 64, 4
        $region64: #{tpu_custom_call.1} parent=47 // pred_fallthru
          _
      $region48: #{tpu_custom_call.1} parent=5 // pred_fallthru
        _
      %p581 = scmp.le.s32.totalorder 1, %s38
      %p582 = scmp.lt.s32.totalorder %s38, 5
      %p583 = pnand %p581, %p582
      %p584 = pneg %p583
      // Predicated region
      $region65: #{tpu_custom_call.1} parent=5 // pred_check
        _
      $region66: #{tpu_custom_call.1} parent=5 // pred_check_branch
        %586 = sbr.rel (%p583) target = $region68
      $region67: #{tpu_custom_call.1} parent=5 // pred_region
        %s587 = ssub.s32 %s38, 1
        %s588 = sand.u32 %s65, 1
        %s589 = scalar_lea.sflag [#allocation5], %s588
        %s590 = sand.u32 %s65, 1
        %s591 = smul.addr %s590, 32
        %s592 = scalar_lea.vmem [#allocation4], %s591
        // Predicated region
        $region69: #{tpu_custom_call.1} parent=67 // pred_check
          %p593 = pneg %p78
        $region70: #{tpu_custom_call.1} parent=67 // pred_check_branch
          %595 = sbr.rel (%p593) target = $region72
        $region71: #{tpu_custom_call.1} parent=67 // pred_region
          %596 = dma.done %s589, 512
        $region72: #{tpu_custom_call.1} parent=67 // pred_fallthru
          _
        %s597 = sand.u32 %s43, 1
        %s598 = scalar_lea.sflag [#allocation8], %s597
        %s599 = sand.u32 %s91, 1
        %s600 = smul.addr %s599, 64
        %s601 = scalar_lea.vmem [#allocation7], %s600
        // Predicated region
        $region73: #{tpu_custom_call.1} parent=67 // pred_check
          %p602 = pneg %p104
        $region74: #{tpu_custom_call.1} parent=67 // pred_check_branch
          %604 = sbr.rel (%p602) target = $region76
        $region75: #{tpu_custom_call.1} parent=67 // pred_region
          %605 = dma.done %s598, 1024
        $region76: #{tpu_custom_call.1} parent=67 // pred_fallthru
          _
        %s606 = sand.u32 %s43, 1
        %s607 = scalar_lea.sflag [#allocation8], %s606
        %s608 = sand.u32 %s117, 1
        %s609 = smul.addr %s608, 64
        %s610 = scalar_lea.vmem [#allocation9], %s609
        // Predicated region
        $region77: #{tpu_custom_call.1} parent=67 // pred_check
          %p611 = pneg %p130
        $region78: #{tpu_custom_call.1} parent=67 // pred_check_branch
          %613 = sbr.rel (%p611) target = $region80
        $region79: #{tpu_custom_call.1} parent=67 // pred_region
          %614 = dma.done %s607, 1024
        $region80: #{tpu_custom_call.1} parent=67 // pred_fallthru
          _
        %s615 = sand.u32 %s43, 1
        %s616 = scalar_lea.sflag [#allocation11], %s615
        %s617 = sand.u32 %s145, 1
        %s618 = smul.addr %s617, 32
        %s619 = scalar_lea.vmem [#allocation10], %s618
        // Predicated region
        $region81: #{tpu_custom_call.1} parent=67 // pred_check
          %p620 = pneg %p158
        $region82: #{tpu_custom_call.1} parent=67 // pred_check_branch
          %622 = sbr.rel (%p620) target = $region84
        $region83: #{tpu_custom_call.1} parent=67 // pred_region
          %623 = dma.done %s616, 512
        $region84: #{tpu_custom_call.1} parent=67 // pred_fallthru
          _
        // Predicated region
        $region85: #{tpu_custom_call.1} parent=67 // pred_check
          %p624 = pneg %p179
        $region86: #{tpu_custom_call.1} parent=67 // pred_check_branch
          %626 = sbr.rel (%p624) target = $region88
        $region87: #{tpu_custom_call.1} parent=67 // pred_region
          %627 = dma.done [#allocation11], 1024
        $region88: #{tpu_custom_call.1} parent=67 // pred_fallthru
          _
        // Predicated region
        $region89: #{tpu_custom_call.1} parent=67 // pred_check
          %p628 = pneg %p221
        $region90: #{tpu_custom_call.1} parent=67 // pred_check_branch
          %630 = sbr.rel (%p628) target = $region92
        $region91: #{tpu_custom_call.1} parent=67 // pred_region
          %631 = dma.done [#allocation14], 1024
        $region92: #{tpu_custom_call.1} parent=67 // pred_fallthru
          _
        // Predicated region
        $region93: #{tpu_custom_call.1} parent=67 // pred_check
          %p632 = pneg %p263
        $region94: #{tpu_custom_call.1} parent=67 // pred_check_branch
          %634 = sbr.rel (%p632) target = $region96
        $region95: #{tpu_custom_call.1} parent=67 // pred_region
          %635 = dma.done [#allocation14], 1024
        $region96: #{tpu_custom_call.1} parent=67 // pred_fallthru
          _
        // Predicated region
        $region97: #{tpu_custom_call.1} parent=67 // pred_check
          %p636 = pneg %p305
        $region98: #{tpu_custom_call.1} parent=67 // pred_check_branch
          %638 = sbr.rel (%p636) target = $region100
        $region99: #{tpu_custom_call.1} parent=67 // pred_region
          %639 = dma.done [#allocation17], 1024
        $region100: #{tpu_custom_call.1} parent=67 // pred_fallthru
          _
        %s640 = sand.u32 %s65, 1
        %s641 = scalar_lea.sflag [#allocation5], %s640
        %s642 = sand.u32 %s65, 1
        %s643 = smul.addr %s642, 32
        %s644 = scalar_lea.vmem [#allocation4], %s643
        %p645 = pneg %p78
        %p646 = pneg %p75
        %s647 = sand.u32 %s43, 1
        %s648 = scalar_lea.sflag [#allocation8], %s647
        %s649 = sand.u32 %s91, 1
        %s650 = smul.addr %s649, 64
        %s651 = scalar_lea.vmem [#allocation7], %s650
        %p652 = pneg %p104
        %p653 = pneg %p101
        %s654 = sand.u32 %s43, 1
        %s655 = scalar_lea.sflag [#allocation8], %s654
        %s656 = sand.u32 %s117, 1
        %s657 = smul.addr %s656, 64
        %s658 = scalar_lea.vmem [#allocation9], %s657
        %p659 = pneg %p130
        %p660 = pneg %p127
        %s661 = sand.u32 %s43, 1
        %s662 = scalar_lea.sflag [#allocation11], %s661
        %s663 = sand.u32 %s145, 1
        %s664 = smul.addr %s663, 32
        %s665 = scalar_lea.vmem [#allocation10], %s664
        %p666 = pneg %p158
        %p667 = pneg %p155
        %p668 = pneg %p179
        %p669 = pneg %p176
        %p670 = pneg %p200
        %p671 = pneg %p197
        %p672 = pneg %p221
        %p673 = pneg %p218
        %p674 = pneg %p242
        %p675 = pneg %p239
        %p676 = pneg %p263
        %p677 = pneg %p260
        %p678 = pneg %p284
        %p679 = pneg %p281
        %p680 = pneg %p305
        %p681 = pneg %p302
        %p682 = pneg %p326
        %p683 = pneg %p323
        %p684 = pneg %p354
        %p685 = pneg %p351
        %s686 = sand.u32 %s341, 1
        %s687 = scalar_lea.sflag [#allocation6], %s686
        %s688 = sand.u32 %s341, 1
        %s689 = smul.addr %s688, 64
        %s690 = scalar_lea.vmem [#allocation18], %s689
        %p691 = pneg %p382
        %p692 = pneg %p379
        %s693 = sand.u32 %s43, 1
        %s694 = scalar_lea.sflag [#allocation20], %s693
        %s695 = sand.u32 %s369, 1
        %s696 = smul.addr %s695, 256
        %s697 = scalar_lea.vmem [#allocation19], %s696
        %p698 = pneg %p410
        %p699 = pneg %p407
        %s700 = sand.u32 %s43, 1
        %s701 = scalar_lea.sflag [#allocation20], %s700
        %s702 = sand.u32 %s397, 1
        %s703 = smul.addr %s702, 256
        %s704 = scalar_lea.vmem [#allocation21], %s703
        %s705 = smul.u32 8, %s48
        %s706 = smul.u32 8, %s48
        %s707 = smul.u32 8, %s48
        %s708 = smul.u32 8, %s48
        %s709 = smul.u32 8, %s48
        %p711 = scmp.eq.s32.totalorder %s48, 0
        // Predicated region
        $region101: #{tpu_custom_call.1} parent=67 // pred_check
          %p712 = pneg %p711
        $region102: #{tpu_custom_call.1} parent=67 // pred_check_branch
          %714 = sbr.rel (%p712) target = $region104
        $region103: #{tpu_custom_call.1} parent=67 // pred_region
          %v715 = vld [vmem:[%s601] sm:$0xf]
          %v716 = vld [vmem:[%s601 + $0x4] sm:$0xf]
          %v717 = vld [vmem:[%s601 + $0x8] sm:$0xf]
          %v718 = vld [vmem:[%s601 + $0xc] sm:$0xf]
          %v719 = vld [vmem:[%s601 + $0x10] sm:$0xf]
          %v720 = vld [vmem:[%s601 + $0x14] sm:$0xf]
          %v721 = vld [vmem:[%s601 + $0x18] sm:$0xf]
          %v722 = vld [vmem:[%s601 + $0x1c] sm:$0xf]
          %v723 = vld [vmem:[%s601 + $0x20] sm:$0xf]
          %v724 = vld [vmem:[%s601 + $0x24] sm:$0xf]
          %v725 = vld [vmem:[%s601 + $0x28] sm:$0xf]
          %v726 = vld [vmem:[%s601 + $0x2c] sm:$0xf]
          %v727 = vld [vmem:[%s601 + $0x30] sm:$0xf]
          %v728 = vld [vmem:[%s601 + $0x34] sm:$0xf]
          %v729 = vld [vmem:[%s601 + $0x38] sm:$0xf]
          %v730 = vld [vmem:[%s601 + $0x3c] sm:$0xf]
          %v731 = vld [vmem:[%s610] sm:$0xf]
          %v732 = vld [vmem:[%s610 + $0x4] sm:$0xf]
          %v733 = vld [vmem:[%s610 + $0x8] sm:$0xf]
          %v734 = vld [vmem:[%s610 + $0xc] sm:$0xf]
          %v735 = vld [vmem:[%s610 + $0x10] sm:$0xf]
          %v736 = vld [vmem:[%s610 + $0x14] sm:$0xf]
          %v737 = vld [vmem:[%s610 + $0x18] sm:$0xf]
          %v738 = vld [vmem:[%s610 + $0x1c] sm:$0xf]
          %v739 = vld [vmem:[%s610 + $0x20] sm:$0xf]
          %v740 = vld [vmem:[%s610 + $0x24] sm:$0xf]
          %v741 = vld [vmem:[%s610 + $0x28] sm:$0xf]
          %v742 = vld [vmem:[%s610 + $0x2c] sm:$0xf]
          %v743 = vld [vmem:[%s610 + $0x30] sm:$0xf]
          %v744 = vld [vmem:[%s610 + $0x34] sm:$0xf]
          %v745 = vld [vmem:[%s610 + $0x38] sm:$0xf]
          %v746 = vld [vmem:[%s610 + $0x3c] sm:$0xf]
          %v747 = vld [vmem:[#allocation13] sm:$0xf]
          %v748 = vld [vmem:[#allocation13 + $0x4] sm:$0xf]
          %v749 = vld [vmem:[#allocation13 + $0x8] sm:$0xf]
          %v750 = vld [vmem:[#allocation13 + $0xc] sm:$0xf]
          %v751 = vld [vmem:[#allocation13 + $0x10] sm:$0xf]
          %v752 = vld [vmem:[#allocation13 + $0x14] sm:$0xf]
          %v753 = vld [vmem:[#allocation13 + $0x18] sm:$0xf]
          %v754 = vld [vmem:[#allocation13 + $0x1c] sm:$0xf]
          %v755 = vld [vmem:[#allocation13 + $0x20] sm:$0xf]
          %v756 = vld [vmem:[#allocation13 + $0x24] sm:$0xf]
          %v757 = vld [vmem:[#allocation13 + $0x28] sm:$0xf]
          %v758 = vld [vmem:[#allocation13 + $0x2c] sm:$0xf]
          %v759 = vld [vmem:[#allocation13 + $0x30] sm:$0xf]
          %v760 = vld [vmem:[#allocation13 + $0x34] sm:$0xf]
          %v761 = vld [vmem:[#allocation13 + $0x38] sm:$0xf]
          %v762 = vld [vmem:[#allocation13 + $0x3c] sm:$0xf]
          %v763 = vld [vmem:[%s7] sm:$0x1]
          %v765 = vlaneseq
          %v766 = vshrl.u32 %v765, 7
          %v767 = vsub.s32 0, %v766
          %v768 = vrot.slane %v763, %v767
          %v786 = vunpack.c.l.b16 %v715
          %v787 = vunpack.c.l.b16 %v716
          %v788 = vunpack.c.l.b16 %v717
          %v789 = vunpack.c.l.b16 %v718
          %v790 = vunpack.c.l.b16 %v719
          %v791 = vunpack.c.l.b16 %v720
          %v792 = vunpack.c.l.b16 %v721
          %v793 = vunpack.c.l.b16 %v722
          %v794 = vunpack.c.l.b16 %v723
          %v795 = vunpack.c.l.b16 %v724
          %v796 = vunpack.c.l.b16 %v725
          %v797 = vunpack.c.l.b16 %v726
          %v798 = vunpack.c.l.b16 %v727
          %v799 = vunpack.c.l.b16 %v728
          %v800 = vunpack.c.l.b16 %v729
          %v801 = vunpack.c.l.b16 %v730
          %v802 = vpack.c.b16 %v787, %v786
          %v803 = vpack.c.b16 %v789, %v788
          %v804 = vpack.c.b16 %v791, %v790
          %v805 = vpack.c.b16 %v793, %v792
          %v806 = vpack.c.b16 %v795, %v794
          %v807 = vpack.c.b16 %v797, %v796
          %v808 = vpack.c.b16 %v799, %v798
          %v809 = vpack.c.b16 %v801, %v800
          %v834 = vunpack.c.l.b16 %v747
          %v835 = vunpack.c.l.b16 %v748
          %v836 = vunpack.c.l.b16 %v749
          %v837 = vunpack.c.l.b16 %v750
          %v838 = vunpack.c.l.b16 %v751
          %v839 = vunpack.c.l.b16 %v752
          %v840 = vunpack.c.l.b16 %v753
          %v841 = vunpack.c.l.b16 %v754
          %v842 = vunpack.c.l.b16 %v755
          %v843 = vunpack.c.l.b16 %v756
          %v844 = vunpack.c.l.b16 %v757
          %v845 = vunpack.c.l.b16 %v758
          %v846 = vunpack.c.l.b16 %v759
          %v847 = vunpack.c.l.b16 %v760
          %v848 = vunpack.c.l.b16 %v761
          %v849 = vunpack.c.l.b16 %v762
          %v850 = vpack.c.b16 %v835, %v834
          %v851 = vpack.c.b16 %v837, %v836
          %v852 = vpack.c.b16 %v839, %v838
          %v853 = vpack.c.b16 %v841, %v840
          %v854 = vpack.c.b16 %v843, %v842
          %v855 = vpack.c.b16 %v845, %v844
          %v856 = vpack.c.b16 %v847, %v846
          %v857 = vpack.c.b16 %v849, %v848
          %866 = vmatprep.subr.bf16.mxu0 0
          %867 = vmatpush1.bf16.msra.mxu0 %v850
          %868 = vmatprep.subr.bf16.mxu0 0
          %869 = vmatpush1.bf16.msra.mxu0 %v851
          %870 = vmatprep.subr.bf16.mxu0 0
          %871 = vmatpush1.bf16.msra.mxu0 %v852
          %872 = vmatprep.subr.bf16.mxu0 0
          %873 = vmatpush1.bf16.msra.mxu0 %v853
          %874 = vmatprep.subr.bf16.mxu0 0
          %875 = vmatpush1.bf16.msra.mxu0 %v854
          %876 = vmatprep.subr.bf16.mxu0 0
          %877 = vmatpush1.bf16.msra.mxu0 %v855
          %878 = vmatprep.subr.bf16.mxu0 0
          %879 = vmatpush1.bf16.msra.mxu0 %v856
          %880 = vmatprep.subr.bf16.mxu0 0
          %881 = vmatpush1.bf16.msra.mxu0 %v857
          %882 = vmatprep.subr.bf16.mxu0 0
          %883 = vmatpush1.bf16.msra.mxu0 0
          %884 = vmatprep.subr.bf16.mxu0 0
          %885 = vmatpush1.bf16.msra.mxu0 0
          %886 = vmatprep.subr.bf16.mxu0 0
          %887 = vmatpush1.bf16.msra.mxu0 0
          %888 = vmatprep.subr.bf16.mxu0 0
          %889 = vmatpush1.bf16.msra.mxu0 0
          %890 = vmatprep.subr.bf16.mxu0 0
          %891 = vmatpush1.bf16.msra.mxu0 0
          %892 = vmatprep.subr.bf16.mxu0 0
          %893 = vmatpush1.bf16.msra.mxu0 0
          %894 = vmatprep.subr.bf16.mxu0 0
          %895 = vmatpush1.bf16.msra.mxu0 0
          %896 = vmatprep.subr.bf16.mxu0 0
          %897 = vmatpush1.bf16.msra.mxu0 0
          %898 = vmatprep.mubr.bf16.mxu0 0
          %899 = vmatmul.mubr.bf16.gmra.mrb[0].mxu0 %v802
          %v900 = vpop.f32.mrb[0].mxu0
          %v901 = vadd.f32 %v768, %v900
          %v902 = vpop.f32.mrb[0].mxu0
          %v903 = vpop.f32.mrb[0].mxu0
          %v904 = vadd.f32 %v768, %v903
          %v905 = vpop.f32.mrb[0].mxu0
          %906 = vmatprep.mubr.bf16.mxu0 0
          %907 = vmatmul.mubr.bf16.gmra.mrb[0].mxu0 %v803
          %v908 = vpop.f32.mrb[0].mxu0
          %v909 = vadd.f32 %v768, %v908
          %v910 = vpop.f32.mrb[0].mxu0
          %v911 = vpop.f32.mrb[0].mxu0
          %v912 = vadd.f32 %v768, %v911
          %v913 = vpop.f32.mrb[0].mxu0
          %914 = vmatprep.mubr.bf16.mxu0 0
          %915 = vmatmul.mubr.bf16.gmra.mrb[0].mxu0 %v804
          %v916 = vpop.f32.mrb[0].mxu0
          %v917 = vadd.f32 %v768, %v916
          %v918 = vpop.f32.mrb[0].mxu0
          %v919 = vpop.f32.mrb[0].mxu0
          %v920 = vadd.f32 %v768, %v919
          %v921 = vpop.f32.mrb[0].mxu0
          %922 = vmatprep.mubr.bf16.mxu0 0
          %923 = vmatmul.mubr.bf16.gmra.mrb[0].mxu0 %v805
          %v924 = vpop.f32.mrb[0].mxu0
          %v925 = vadd.f32 %v768, %v924
          %v926 = vpop.f32.mrb[0].mxu0
          %v927 = vpop.f32.mrb[0].mxu0
          %v928 = vadd.f32 %v768, %v927
          %v929 = vpop.f32.mrb[0].mxu0
          %930 = vmatprep.mubr.bf16.mxu0 0
          %931 = vmatmul.mubr.bf16.gmra.mrb[0].mxu0 %v806
          %v932 = vpop.f32.mrb[0].mxu0
          %v933 = vadd.f32 %v768, %v932
          %v934 = vpop.f32.mrb[0].mxu0
          %v935 = vpop.f32.mrb[0].mxu0
          %v936 = vadd.f32 %v768, %v935
          %v937 = vpop.f32.mrb[0].mxu0
          %938 = vmatprep.mubr.bf16.mxu0 0
          %939 = vmatmul.mubr.bf16.gmra.mrb[0].mxu0 %v807
          %v940 = vpop.f32.mrb[0].mxu0
          %v941 = vadd.f32 %v768, %v940
          %v942 = vpop.f32.mrb[0].mxu0
          %v943 = vpop.f32.mrb[0].mxu0
          %v944 = vadd.f32 %v768, %v943
          %v945 = vpop.f32.mrb[0].mxu0
          %946 = vmatprep.mubr.bf16.mxu0 0
          %947 = vmatmul.mubr.bf16.gmra.mrb[0].mxu0 %v808
          %v948 = vpop.f32.mrb[0].mxu0
          %v949 = vadd.f32 %v768, %v948
          %v950 = vpop.f32.mrb[0].mxu0
          %v951 = vpop.f32.mrb[0].mxu0
          %v952 = vadd.f32 %v768, %v951
          %v953 = vpop.f32.mrb[0].mxu0
          %954 = vmatprep.mubr.bf16.mxu0 0
          %955 = vmatmul.mubr.bf16.gmra.mrb[0].mxu0 %v809
          %v956 = vpop.f32.mrb[0].mxu0
          %v957 = vadd.f32 %v768, %v956
          %v958 = vpop.f32.mrb[0].mxu0
          %v959 = vpop.f32.mrb[0].mxu0
          %v960 = vadd.f32 %v768, %v959
          %v961 = vpop.f32.mrb[0].mxu0
          %962 = vdwg.mxu0
          %v963 = vpack.c.bf16 %v904, %v901
          %v964 = vpack.c.bf16 %v912, %v909
          %v965 = vpack.c.bf16 %v920, %v917
          %v966 = vpack.c.bf16 %v928, %v925
          %v967 = vpack.c.bf16 %v936, %v933
          %v968 = vpack.c.bf16 %v944, %v941
          %v969 = vpack.c.bf16 %v952, %v949
          %v970 = vpack.c.bf16 %v960, %v957
          %v971 = vld [vmem:[#allocation15] sm:$0xf]
          %v972 = vld [vmem:[#allocation15 + $0x4] sm:$0xf]
          %v973 = vld [vmem:[#allocation15 + $0x8] sm:$0xf]
          %v974 = vld [vmem:[#allocation15 + $0xc] sm:$0xf]
          %v975 = vld [vmem:[#allocation15 + $0x10] sm:$0xf]
          %v976 = vld [vmem:[#allocation15 + $0x14] sm:$0xf]
          %v977 = vld [vmem:[#allocation15 + $0x18] sm:$0xf]
          %v978 = vld [vmem:[#allocation15 + $0x1c] sm:$0xf]
          %v979 = vld [vmem:[#allocation15 + $0x20] sm:$0xf]
          %v980 = vld [vmem:[#allocation15 + $0x24] sm:$0xf]
          %v981 = vld [vmem:[#allocation15 + $0x28] sm:$0xf]
          %v982 = vld [vmem:[#allocation15 + $0x2c] sm:$0xf]
          %v983 = vld [vmem:[#allocation15 + $0x30] sm:$0xf]
          %v984 = vld [vmem:[#allocation15 + $0x34] sm:$0xf]
          %v985 = vld [vmem:[#allocation15 + $0x38] sm:$0xf]
          %v986 = vld [vmem:[#allocation15 + $0x3c] sm:$0xf]
          %v987 = vld [vmem:[%s9] sm:$0x1]
          %v989 = vlaneseq
          %v990 = vshrl.u32 %v989, 7
          %v991 = vsub.s32 0, %v990
          %v992 = vrot.slane %v987, %v991
          %v1010 = vunpack.c.l.b16 %v731
          %v1011 = vunpack.c.l.b16 %v732
          %v1012 = vunpack.c.l.b16 %v733
          %v1013 = vunpack.c.l.b16 %v734
          %v1014 = vunpack.c.l.b16 %v735
          %v1015 = vunpack.c.l.b16 %v736
          %v1016 = vunpack.c.l.b16 %v737
          %v1017 = vunpack.c.l.b16 %v738
          %v1018 = vunpack.c.l.b16 %v739
          %v1019 = vunpack.c.l.b16 %v740
          %v1020 = vunpack.c.l.b16 %v741
          %v1021 = vunpack.c.l.b16 %v742
          %v1022 = vunpack.c.l.b16 %v743
          %v1023 = vunpack.c.l.b16 %v744
          %v1024 = vunpack.c.l.b16 %v745
          %v1025 = vunpack.c.l.b16 %v746
          %v1026 = vpack.c.b16 %v1011, %v1010
          %v1027 = vpack.c.b16 %v1013, %v1012
          %v1028 = vpack.c.b16 %v1015, %v1014
          %v1029 = vpack.c.b16 %v1017, %v1016
          %v1030 = vpack.c.b16 %v1019, %v1018
          %v1031 = vpack.c.b16 %v1021, %v1020
          %v1032 = vpack.c.b16 %v1023, %v1022
          %v1033 = vpack.c.b16 %v1025, %v1024
          %v1058 = vunpack.c.l.b16 %v971
          %v1059 = vunpack.c.l.b16 %v972
          %v1060 = vunpack.c.l.b16 %v973
          %v1061 = vunpack.c.l.b16 %v974
          %v1062 = vunpack.c.l.b16 %v975
          %v1063 = vunpack.c.l.b16 %v976
          %v1064 = vunpack.c.l.b16 %v977
          %v1065 = vunpack.c.l.b16 %v978
          %v1066 = vunpack.c.l.b16 %v979
          %v1067 = vunpack.c.l.b16 %v980
          %v1068 = vunpack.c.l.b16 %v981
          %v1069 = vunpack.c.l.b16 %v982
          %v1070 = vunpack.c.l.b16 %v983
          %v1071 = vunpack.c.l.b16 %v984
          %v1072 = vunpack.c.l.b16 %v985
          %v1073 = vunpack.c.l.b16 %v986
          %v1074 = vpack.c.b16 %v1059, %v1058
          %v1075 = vpack.c.b16 %v1061, %v1060
          %v1076 = vpack.c.b16 %v1063, %v1062
          %v1077 = vpack.c.b16 %v1065, %v1064
          %v1078 = vpack.c.b16 %v1067, %v1066
          %v1079 = vpack.c.b16 %v1069, %v1068
          %v1080 = vpack.c.b16 %v1071, %v1070
          %v1081 = vpack.c.b16 %v1073, %v1072
          %1090 = vmatprep.subr.bf16.mxu0 0
          %1091 = vmatpush1.bf16.msra.mxu0 %v1074
          %1092 = vmatprep.subr.bf16.mxu0 0
          %1093 = vmatpush1.bf16.msra.mxu0 %v1075
          %1094 = vmatprep.subr.bf16.mxu0 0
          %1095 = vmatpush1.bf16.msra.mxu0 %v1076
          %1096 = vmatprep.subr.bf16.mxu0 0
          %1097 = vmatpush1.bf16.msra.mxu0 %v1077
          %1098 = vmatprep.subr.bf16.mxu0 0
          %1099 = vmatpush1.bf16.msra.mxu0 %v1078
          %1100 = vmatprep.subr.bf16.mxu0 0
          %1101 = vmatpush1.bf16.msra.mxu0 %v1079
          %1102 = vmatprep.subr.bf16.mxu0 0
          %1103 = vmatpush1.bf16.msra.mxu0 %v1080
          %1104 = vmatprep.subr.bf16.mxu0 0
          %1105 = vmatpush1.bf16.msra.mxu0 %v1081
          %1106 = vmatprep.subr.bf16.mxu0 0
          %1107 = vmatpush1.bf16.msra.mxu0 0
          %1108 = vmatprep.subr.bf16.mxu0 0
          %1109 = vmatpush1.bf16.msra.mxu0 0
          %1110 = vmatprep.subr.bf16.mxu0 0
          %1111 = vmatpush1.bf16.msra.mxu0 0
          %1112 = vmatprep.subr.bf16.mxu0 0
          %1113 = vmatpush1.bf16.msra.mxu0 0
          %1114 = vmatprep.subr.bf16.mxu0 0
          %1115 = vmatpush1.bf16.msra.mxu0 0
          %1116 = vmatprep.subr.bf16.mxu0 0
          %1117 = vmatpush1.bf16.msra.mxu0 0
          %1118 = vmatprep.subr.bf16.mxu0 0
          %1119 = vmatpush1.bf16.msra.mxu0 0
          %1120 = vmatprep.subr.bf16.mxu0 0
          %1121 = vmatpush1.bf16.msra.mxu0 0
          %1122 = vmatprep.mubr.bf16.mxu0 0
          %1123 = vmatmul.mubr.bf16.gmra.mrb[0].mxu0 %v1026
          %v1124 = vpop.f32.mrb[0].mxu0
          %v1125 = vadd.f32 %v992, %v1124
          %v1126 = vpop.f32.mrb[0].mxu0
          %v1127 = vpop.f32.mrb[0].mxu0
          %v1128 = vadd.f32 %v992, %v1127
          %v1129 = vpop.f32.mrb[0].mxu0
          %1130 = vmatprep.mubr.bf16.mxu0 0
          %1131 = vmatmul.mubr.bf16.gmra.mrb[0].mxu0 %v1027
          %v1132 = vpop.f32.mrb[0].mxu0
          %v1133 = vadd.f32 %v992, %v1132
          %v1134 = vpop.f32.mrb[0].mxu0
          %v1135 = vpop.f32.mrb[0].mxu0
          %v1136 = vadd.f32 %v992, %v1135
          %v1137 = vpop.f32.mrb[0].mxu0
          %1138 = vmatprep.mubr.bf16.mxu0 0
          %1139 = vmatmul.mubr.bf16.gmra.mrb[0].mxu0 %v1028
          %v1140 = vpop.f32.mrb[0].mxu0
          %v1141 = vadd.f32 %v992, %v1140
          %v1142 = vpop.f32.mrb[0].mxu0
          %v1143 = vpop.f32.mrb[0].mxu0
          %v1144 = vadd.f32 %v992, %v1143
          %v1145 = vpop.f32.mrb[0].mxu0
          %1146 = vmatprep.mubr.bf16.mxu0 0
          %1147 = vmatmul.mubr.bf16.gmra.mrb[0].mxu0 %v1029
          %v1148 = vpop.f32.mrb[0].mxu0
          %v1149 = vadd.f32 %v992, %v1148
          %v1150 = vpop.f32.mrb[0].mxu0
          %v1151 = vpop.f32.mrb[0].mxu0
          %v1152 = vadd.f32 %v992, %v1151
          %v1153 = vpop.f32.mrb[0].mxu0
          %1154 = vmatprep.mubr.bf16.mxu0 0
          %1155 = vmatmul.mubr.bf16.gmra.mrb[0].mxu0 %v1030
          %v1156 = vpop.f32.mrb[0].mxu0
          %v1157 = vadd.f32 %v992, %v1156
          %v1158 = vpop.f32.mrb[0].mxu0
          %v1159 = vpop.f32.mrb[0].mxu0
          %v1160 = vadd.f32 %v992, %v1159
          %v1161 = vpop.f32.mrb[0].mxu0
          %1162 = vmatprep.mubr.bf16.mxu0 0
          %1163 = vmatmul.mubr.bf16.gmra.mrb[0].mxu0 %v1031
          %v1164 = vpop.f32.mrb[0].mxu0
          %v1165 = vadd.f32 %v992, %v1164
          %v1166 = vpop.f32.mrb[0].mxu0
          %v1167 = vpop.f32.mrb[0].mxu0
          %v1168 = vadd.f32 %v992, %v1167
          %v1169 = vpop.f32.mrb[0].mxu0
          %1170 = vmatprep.mubr.bf16.mxu0 0
          %1171 = vmatmul.mubr.bf16.gmra.mrb[0].mxu0 %v1032
          %v1172 = vpop.f32.mrb[0].mxu0
          %v1173 = vadd.f32 %v992, %v1172
          %v1174 = vpop.f32.mrb[0].mxu0
          %v1175 = vpop.f32.mrb[0].mxu0
          %v1176 = vadd.f32 %v992, %v1175
          %v1177 = vpop.f32.mrb[0].mxu0
          %1178 = vmatprep.mubr.bf16.mxu0 0
          %1179 = vmatmul.mubr.bf16.gmra.mrb[0].mxu0 %v1033
          %v1180 = vpop.f32.mrb[0].mxu0
          %v1181 = vadd.f32 %v992, %v1180
          %v1182 = vpop.f32.mrb[0].mxu0
          %v1183 = vpop.f32.mrb[0].mxu0
          %v1184 = vadd.f32 %v992, %v1183
          %v1185 = vpop.f32.mrb[0].mxu0
          %1186 = vdwg.mxu0
          %v1187 = vpack.c.bf16 %v1128, %v1125
          %v1188 = vpack.c.bf16 %v1136, %v1133
          %v1189 = vpack.c.bf16 %v1144, %v1141
          %v1190 = vpack.c.bf16 %v1152, %v1149
          %v1191 = vpack.c.bf16 %v1160, %v1157
          %v1192 = vpack.c.bf16 %v1168, %v1165
          %v1193 = vpack.c.bf16 %v1176, %v1173
          %v1194 = vpack.c.bf16 %v1184, %v1181
          %vm1195 = vcmask 261120
          %1196 = vst.msk [vmem:[#allocation2] sm:$0xff] %vm1195, %v963
          %1197 = vst.msk [vmem:[#allocation2 + $0x8] sm:$0xff] %vm1195, %v964
          %1198 = vst.msk [vmem:[#allocation2 + $0x10] sm:$0xff] %vm1195, %v965
          %1199 = vst.msk [vmem:[#allocation2 + $0x18] sm:$0xff] %vm1195, %v966
          %1200 = vst.msk [vmem:[#allocation2 + $0x20] sm:$0xff] %vm1195, %v967
          %1201 = vst.msk [vmem:[#allocation2 + $0x28] sm:$0xff] %vm1195, %v968
          %1202 = vst.msk [vmem:[#allocation2 + $0x30] sm:$0xff] %vm1195, %v969
          %1203 = vst.msk [vmem:[#allocation2 + $0x38] sm:$0xff] %vm1195, %v970
          %1204 = vst.msk [vmem:[#allocation3] sm:$0xff] %vm1195, %v1187
          %1205 = vst.msk [vmem:[#allocation3 + $0x8] sm:$0xff] %vm1195, %v1188
          %1206 = vst.msk [vmem:[#allocation3 + $0x10] sm:$0xff] %vm1195, %v1189
          %1207 = vst.msk [vmem:[#allocation3 + $0x18] sm:$0xff] %vm1195, %v1190
          %1208 = vst.msk [vmem:[#allocation3 + $0x20] sm:$0xff] %vm1195, %v1191
          %1209 = vst.msk [vmem:[#allocation3 + $0x28] sm:$0xff] %vm1195, %v1192
          %1210 = vst.msk [vmem:[#allocation3 + $0x30] sm:$0xff] %vm1195, %v1193
          %1211 = vst.msk [vmem:[#allocation3 + $0x38] sm:$0xff] %vm1195, %v1194
          %1220 = vrot.lane.b32.xlu0 %v963, 96
          %v1221 = vpop.permute.xlu0 %1220
          %1222 = vrot.lane.b32.xlu0 %v964, 96
          %v1223 = vpop.permute.xlu0 %1222
          %1224 = vrot.lane.b32.xlu0 %v965, 96
          %v1225 = vpop.permute.xlu0 %1224
          %1226 = vrot.lane.b32.xlu0 %v966, 96
          %v1227 = vpop.permute.xlu0 %1226
          %1228 = vrot.lane.b32.xlu0 %v967, 96
          %v1229 = vpop.permute.xlu0 %1228
          %1230 = vrot.lane.b32.xlu0 %v968, 96
          %v1231 = vpop.permute.xlu0 %1230
          %1232 = vrot.lane.b32.xlu0 %v969, 96
          %v1233 = vpop.permute.xlu0 %1232
          %1234 = vrot.lane.b32.xlu0 %v970, 96
          %v1235 = vpop.permute.xlu0 %1234
          %s1244 = scalar_lea.vmem [#allocation2], 64
          %1245 = vst.msk [vmem:[%s1244] sm:$0xff] %vm1195, %v1221
          %1246 = vst.msk [vmem:[%s1244 + $0x8] sm:$0xff] %vm1195, %v1223
          %1247 = vst.msk [vmem:[%s1244 + $0x10] sm:$0xff] %vm1195, %v1225
          %1248 = vst.msk [vmem:[%s1244 + $0x18] sm:$0xff] %vm1195, %v1227
          %1249 = vst.msk [vmem:[%s1244 + $0x20] sm:$0xff] %vm1195, %v1229
          %1250 = vst.msk [vmem:[%s1244 + $0x28] sm:$0xff] %vm1195, %v1231
          %1251 = vst.msk [vmem:[%s1244 + $0x30] sm:$0xff] %vm1195, %v1233
          %1252 = vst.msk [vmem:[%s1244 + $0x38] sm:$0xff] %vm1195, %v1235
          %1261 = vrot.lane.b32.xlu0 %v1187, 96
          %v1262 = vpop.permute.xlu0 %1261
          %1263 = vrot.lane.b32.xlu0 %v1188, 96
          %v1264 = vpop.permute.xlu0 %1263
          %1265 = vrot.lane.b32.xlu0 %v1189, 96
          %v1266 = vpop.permute.xlu0 %1265
          %1267 = vrot.lane.b32.xlu0 %v1190, 96
          %v1268 = vpop.permute.xlu0 %1267
          %1269 = vrot.lane.b32.xlu0 %v1191, 96
          %v1270 = vpop.permute.xlu0 %1269
          %1271 = vrot.lane.b32.xlu0 %v1192, 96
          %v1272 = vpop.permute.xlu0 %1271
          %1273 = vrot.lane.b32.xlu0 %v1193, 96
          %v1274 = vpop.permute.xlu0 %1273
          %1275 = vrot.lane.b32.xlu0 %v1194, 96
          %v1276 = vpop.permute.xlu0 %1275
          %s1285 = scalar_lea.vmem [#allocation3], 64
          %1286 = vst.msk [vmem:[%s1285] sm:$0xff] %vm1195, %v1262
          %1287 = vst.msk [vmem:[%s1285 + $0x8] sm:$0xff] %vm1195, %v1264
          %1288 = vst.msk [vmem:[%s1285 + $0x10] sm:$0xff] %vm1195, %v1266
          %1289 = vst.msk [vmem:[%s1285 + $0x18] sm:$0xff] %vm1195, %v1268
          %1290 = vst.msk [vmem:[%s1285 + $0x20] sm:$0xff] %vm1195, %v1270
          %1291 = vst.msk [vmem:[%s1285 + $0x28] sm:$0xff] %vm1195, %v1272
          %1292 = vst.msk [vmem:[%s1285 + $0x30] sm:$0xff] %vm1195, %v1274
          %1293 = vst.msk [vmem:[%s1285 + $0x38] sm:$0xff] %vm1195, %v1276
          %1294 = vrot.lane.b32.xlu0 %v963, 64
          %v1295 = vpop.permute.xlu0 %1294
          %1296 = vrot.lane.b32.xlu0 %v964, 64
          %v1297 = vpop.permute.xlu0 %1296
          %1298 = vrot.lane.b32.xlu0 %v965, 64
          %v1299 = vpop.permute.xlu0 %1298
          %1300 = vrot.lane.b32.xlu0 %v966, 64
          %v1301 = vpop.permute.xlu0 %1300
          %1302 = vrot.lane.b32.xlu0 %v967, 64
          %v1303 = vpop.permute.xlu0 %1302
          %1304 = vrot.lane.b32.xlu0 %v968, 64
          %v1305 = vpop.permute.xlu0 %1304
          %1306 = vrot.lane.b32.xlu0 %v969, 64
          %v1307 = vpop.permute.xlu0 %1306
          %1308 = vrot.lane.b32.xlu0 %v970, 64
          %v1309 = vpop.permute.xlu0 %1308
          %s1318 = scalar_lea.vmem [#allocation2], 128
          %1319 = vst.msk [vmem:[%s1318] sm:$0xff] %vm1195, %v1295
          %1320 = vst.msk [vmem:[%s1318 + $0x8] sm:$0xff] %vm1195, %v1297
          %1321 = vst.msk [vmem:[%s1318 + $0x10] sm:$0xff] %vm1195, %v1299
          %1322 = vst.msk [vmem:[%s1318 + $0x18] sm:$0xff] %vm1195, %v1301
          %1323 = vst.msk [vmem:[%s1318 + $0x20] sm:$0xff] %vm1195, %v1303
          %1324 = vst.msk [vmem:[%s1318 + $0x28] sm:$0xff] %vm1195, %v1305
          %1325 = vst.msk [vmem:[%s1318 + $0x30] sm:$0xff] %vm1195, %v1307
          %1326 = vst.msk [vmem:[%s1318 + $0x38] sm:$0xff] %vm1195, %v1309
          %1327 = vrot.lane.b32.xlu0 %v1187, 64
          %v1328 = vpop.permute.xlu0 %1327
          %1329 = vrot.lane.b32.xlu0 %v1188, 64
          %v1330 = vpop.permute.xlu0 %1329
          %1331 = vrot.lane.b32.xlu0 %v1189, 64
          %v1332 = vpop.permute.xlu0 %1331
          %1333 = vrot.lane.b32.xlu0 %v1190, 64
          %v1334 = vpop.permute.xlu0 %1333
          %1335 = vrot.lane.b32.xlu0 %v1191, 64
          %v1336 = vpop.permute.xlu0 %1335
          %1337 = vrot.lane.b32.xlu0 %v1192, 64
          %v1338 = vpop.permute.xlu0 %1337
          %1339 = vrot.lane.b32.xlu0 %v1193, 64
          %v1340 = vpop.permute.xlu0 %1339
          %1341 = vrot.lane.b32.xlu0 %v1194, 64
          %v1342 = vpop.permute.xlu0 %1341
          %s1351 = scalar_lea.vmem [#allocation3], 128
          %1352 = vst.msk [vmem:[%s1351] sm:$0xff] %vm1195, %v1328
          %1353 = vst.msk [vmem:[%s1351 + $0x8] sm:$0xff] %vm1195, %v1330
          %1354 = vst.msk [vmem:[%s1351 + $0x10] sm:$0xff] %vm1195, %v1332
          %1355 = vst.msk [vmem:[%s1351 + $0x18] sm:$0xff] %vm1195, %v1334
          %1356 = vst.msk [vmem:[%s1351 + $0x20] sm:$0xff] %vm1195, %v1336
          %1357 = vst.msk [vmem:[%s1351 + $0x28] sm:$0xff] %vm1195, %v1338
          %1358 = vst.msk [vmem:[%s1351 + $0x30] sm:$0xff] %vm1195, %v1340
          %1359 = vst.msk [vmem:[%s1351 + $0x38] sm:$0xff] %vm1195, %v1342
          %1360 = vrot.lane.b32.xlu0 %v963, 32
          %v1361 = vpop.permute.xlu0 %1360
          %1362 = vrot.lane.b32.xlu0 %v964, 32
          %v1363 = vpop.permute.xlu0 %1362
          %1364 = vrot.lane.b32.xlu0 %v965, 32
          %v1365 = vpop.permute.xlu0 %1364
          %1366 = vrot.lane.b32.xlu0 %v966, 32
          %v1367 = vpop.permute.xlu0 %1366
          %1368 = vrot.lane.b32.xlu0 %v967, 32
          %v1369 = vpop.permute.xlu0 %1368
          %1370 = vrot.lane.b32.xlu0 %v968, 32
          %v1371 = vpop.permute.xlu0 %1370
          %1372 = vrot.lane.b32.xlu0 %v969, 32
          %v1373 = vpop.permute.xlu0 %1372
          %1374 = vrot.lane.b32.xlu0 %v970, 32
          %v1375 = vpop.permute.xlu0 %1374
          %s1384 = scalar_lea.vmem [#allocation2], 192
          %1385 = vst.msk [vmem:[%s1384] sm:$0xff] %vm1195, %v1361
          %1386 = vst.msk [vmem:[%s1384 + $0x8] sm:$0xff] %vm1195, %v1363
          %1387 = vst.msk [vmem:[%s1384 + $0x10] sm:$0xff] %vm1195, %v1365
          %1388 = vst.msk [vmem:[%s1384 + $0x18] sm:$0xff] %vm1195, %v1367
          %1389 = vst.msk [vmem:[%s1384 + $0x20] sm:$0xff] %vm1195, %v1369
          %1390 = vst.msk [vmem:[%s1384 + $0x28] sm:$0xff] %vm1195, %v1371
          %1391 = vst.msk [vmem:[%s1384 + $0x30] sm:$0xff] %vm1195, %v1373
          %1392 = vst.msk [vmem:[%s1384 + $0x38] sm:$0xff] %vm1195, %v1375
          %1393 = vrot.lane.b32.xlu0 %v1187, 32
          %v1394 = vpop.permute.xlu0 %1393
          %1395 = vrot.lane.b32.xlu0 %v1188, 32
          %v1396 = vpop.permute.xlu0 %1395
          %1397 = vrot.lane.b32.xlu0 %v1189, 32
          %v1398 = vpop.permute.xlu0 %1397
          %1399 = vrot.lane.b32.xlu0 %v1190, 32
          %v1400 = vpop.permute.xlu0 %1399
          %1401 = vrot.lane.b32.xlu0 %v1191, 32
          %v1402 = vpop.permute.xlu0 %1401
          %1403 = vrot.lane.b32.xlu0 %v1192, 32
          %v1404 = vpop.permute.xlu0 %1403
          %1405 = vrot.lane.b32.xlu0 %v1193, 32
          %v1406 = vpop.permute.xlu0 %1405
          %1407 = vrot.lane.b32.xlu0 %v1194, 32
          %v1408 = vpop.permute.xlu0 %1407
          %s1417 = scalar_lea.vmem [#allocation3], 192
          %1418 = vst.msk [vmem:[%s1417] sm:$0xff] %vm1195, %v1394
          %1419 = vst.msk [vmem:[%s1417 + $0x8] sm:$0xff] %vm1195, %v1396
          %1420 = vst.msk [vmem:[%s1417 + $0x10] sm:$0xff] %vm1195, %v1398
          %1421 = vst.msk [vmem:[%s1417 + $0x18] sm:$0xff] %vm1195, %v1400
          %1422 = vst.msk [vmem:[%s1417 + $0x20] sm:$0xff] %vm1195, %v1402
          %1423 = vst.msk [vmem:[%s1417 + $0x28] sm:$0xff] %vm1195, %v1404
          %1424 = vst.msk [vmem:[%s1417 + $0x30] sm:$0xff] %vm1195, %v1406
          %1425 = vst.msk [vmem:[%s1417 + $0x38] sm:$0xff] %vm1195, %v1408
        $region104: #{tpu_custom_call.1} parent=67 // pred_fallthru
          _
        %v1426 = vld [vmem:[%s592] sm:$0xf]
        %v1427 = vld [vmem:[%s592 + $0x4] sm:$0xf]
        %v1428 = vld [vmem:[%s592 + $0x8] sm:$0xf]
        %v1429 = vld [vmem:[%s592 + $0xc] sm:$0xf]
        %v1430 = vld [vmem:[%s592 + $0x10] sm:$0xf]
        %v1431 = vld [vmem:[%s592 + $0x14] sm:$0xf]
        %v1432 = vld [vmem:[%s592 + $0x18] sm:$0xf]
        %v1433 = vld [vmem:[%s592 + $0x1c] sm:$0xf]
        %v1434 = vld [vmem:[#allocation12] sm:$0xf]
        %v1435 = vld [vmem:[#allocation12 + $0x4] sm:$0xf]
        %v1436 = vld [vmem:[#allocation12 + $0x8] sm:$0xf]
        %v1437 = vld [vmem:[#allocation12 + $0xc] sm:$0xf]
        %v1438 = vld [vmem:[#allocation12 + $0x10] sm:$0xf]
        %v1439 = vld [vmem:[#allocation12 + $0x14] sm:$0xf]
        %v1440 = vld [vmem:[#allocation12 + $0x18] sm:$0xf]
        %v1441 = vld [vmem:[#allocation12 + $0x1c] sm:$0xf]
        %v1442 = vld [vmem:[#allocation12 + $0x20] sm:$0xf]
        %v1443 = vld [vmem:[#allocation12 + $0x24] sm:$0xf]
        %v1444 = vld [vmem:[#allocation12 + $0x28] sm:$0xf]
        %v1445 = vld [vmem:[#allocation12 + $0x2c] sm:$0xf]
        %v1446 = vld [vmem:[#allocation12 + $0x30] sm:$0xf]
        %v1447 = vld [vmem:[#allocation12 + $0x34] sm:$0xf]
        %v1448 = vld [vmem:[#allocation12 + $0x38] sm:$0xf]
        %v1449 = vld [vmem:[#allocation12 + $0x3c] sm:$0xf]
        %v1450 = vld [vmem:[%s5] sm:$0x1]
        %v1452 = vlaneseq
        %v1453 = vshrl.u32 %v1452, 7
        %v1454 = vsub.s32 0, %v1453
        %v1455 = vrot.slane %v1450, %v1454
        %v1465 = vunpack.c.l.b16 %v1426
        %v1466 = vunpack.c.l.b16 %v1427
        %v1467 = vunpack.c.l.b16 %v1428
        %v1468 = vunpack.c.l.b16 %v1429
        %v1469 = vunpack.c.l.b16 %v1430
        %v1470 = vunpack.c.l.b16 %v1431
        %v1471 = vunpack.c.l.b16 %v1432
        %v1472 = vunpack.c.l.b16 %v1433
        %v1473 = vpack.c.b16 %v1466, %v1465
        %v1474 = vpack.c.b16 %v1468, %v1467
        %v1475 = vpack.c.b16 %v1470, %v1469
        %v1476 = vpack.c.b16 %v1472, %v1471
        %v1497 = vunpack.c.l.b16 %v1434
        %v1498 = vunpack.c.l.b16 %v1435
        %v1499 = vunpack.c.l.b16 %v1436
        %v1500 = vunpack.c.l.b16 %v1437
        %v1501 = vunpack.c.l.b16 %v1438
        %v1502 = vunpack.c.l.b16 %v1439
        %v1503 = vunpack.c.l.b16 %v1440
        %v1504 = vunpack.c.l.b16 %v1441
        %v1505 = vunpack.c.l.b16 %v1442
        %v1506 = vunpack.c.l.b16 %v1443
        %v1507 = vunpack.c.l.b16 %v1444
        %v1508 = vunpack.c.l.b16 %v1445
        %v1509 = vunpack.c.l.b16 %v1446
        %v1510 = vunpack.c.l.b16 %v1447
        %v1511 = vunpack.c.l.b16 %v1448
        %v1512 = vunpack.c.l.b16 %v1449
        %v1513 = vpack.c.b16 %v1498, %v1497
        %v1514 = vpack.c.b16 %v1500, %v1499
        %v1515 = vpack.c.b16 %v1502, %v1501
        %v1516 = vpack.c.b16 %v1504, %v1503
        %v1517 = vpack.c.b16 %v1506, %v1505
        %v1518 = vpack.c.b16 %v1508, %v1507
        %v1519 = vpack.c.b16 %v1510, %v1509
        %v1520 = vpack.c.b16 %v1512, %v1511
        %1529 = vmatprep.subr.bf16.mxu0 0
        %1530 = vmatpush1.bf16.msra.mxu0 %v1513
        %1531 = vmatprep.subr.bf16.mxu0 0
        %1532 = vmatpush1.bf16.msra.mxu0 %v1514
        %1533 = vmatprep.subr.bf16.mxu0 0
        %1534 = vmatpush1.bf16.msra.mxu0 %v1515
        %1535 = vmatprep.subr.bf16.mxu0 0
        %1536 = vmatpush1.bf16.msra.mxu0 %v1516
        %1537 = vmatprep.subr.bf16.mxu0 0
        %1538 = vmatpush1.bf16.msra.mxu0 %v1517
        %1539 = vmatprep.subr.bf16.mxu0 0
        %1540 = vmatpush1.bf16.msra.mxu0 %v1518
        %1541 = vmatprep.subr.bf16.mxu0 0
        %1542 = vmatpush1.bf16.msra.mxu0 %v1519
        %1543 = vmatprep.subr.bf16.mxu0 0
        %1544 = vmatpush1.bf16.msra.mxu0 %v1520
        %1545 = vmatprep.subr.bf16.mxu0 0
        %1546 = vmatpush1.bf16.msra.mxu0 0
        %1547 = vmatprep.subr.bf16.mxu0 0
        %1548 = vmatpush1.bf16.msra.mxu0 0
        %1549 = vmatprep.subr.bf16.mxu0 0
        %1550 = vmatpush1.bf16.msra.mxu0 0
        %1551 = vmatprep.subr.bf16.mxu0 0
        %1552 = vmatpush1.bf16.msra.mxu0 0
        %1553 = vmatprep.subr.bf16.mxu0 0
        %1554 = vmatpush1.bf16.msra.mxu0 0
        %1555 = vmatprep.subr.bf16.mxu0 0
        %1556 = vmatpush1.bf16.msra.mxu0 0
        %1557 = vmatprep.subr.bf16.mxu0 0
        %1558 = vmatpush1.bf16.msra.mxu0 0
        %1559 = vmatprep.subr.bf16.mxu0 0
        %1560 = vmatpush1.bf16.msra.mxu0 0
        %1561 = vmatprep.mubr.bf16.mxu0 0
        %1562 = vmatmul.mubr.bf16.gmra.mrb[0].mxu0 %v1473
        %v1563 = vpop.f32.mrb[0].mxu0
        %v1564 = vadd.f32 %v1455, %v1563
        %v1565 = vpop.f32.mrb[0].mxu0
        %v1566 = vpop.f32.mrb[0].mxu0
        %v1567 = vadd.f32 %v1455, %v1566
        %v1568 = vpop.f32.mrb[0].mxu0
        %1569 = vmatprep.mubr.bf16.mxu0 0
        %1570 = vmatmul.mubr.bf16.gmra.mrb[0].mxu0 %v1474
        %v1571 = vpop.f32.mrb[0].mxu0
        %v1572 = vadd.f32 %v1455, %v1571
        %v1573 = vpop.f32.mrb[0].mxu0
        %v1574 = vpop.f32.mrb[0].mxu0
        %v1575 = vadd.f32 %v1455, %v1574
        %v1576 = vpop.f32.mrb[0].mxu0
        %1577 = vmatprep.mubr.bf16.mxu0 0
        %1578 = vmatmul.mubr.bf16.gmra.mrb[0].mxu0 %v1475
        %v1579 = vpop.f32.mrb[0].mxu0
        %v1580 = vadd.f32 %v1455, %v1579
        %v1581 = vpop.f32.mrb[0].mxu0
        %v1582 = vpop.f32.mrb[0].mxu0
        %v1583 = vadd.f32 %v1455, %v1582
        %v1584 = vpop.f32.mrb[0].mxu0
        %1585 = vmatprep.mubr.bf16.mxu0 0
        %1586 = vmatmul.mubr.bf16.gmra.mrb[0].mxu0 %v1476
        %v1587 = vpop.f32.mrb[0].mxu0
        %v1588 = vadd.f32 %v1455, %v1587
        %v1589 = vpop.f32.mrb[0].mxu0
        %v1590 = vpop.f32.mrb[0].mxu0
        %v1591 = vadd.f32 %v1455, %v1590
        %v1592 = vpop.f32.mrb[0].mxu0
        %1593 = vdwg.mxu0
        %v1594 = vmul.f32 %v1564, 0.17677669
        %v1595 = vmul.f32 %v1567, 0.17677669
        %v1596 = vmul.f32 %v1572, 0.17677669
        %v1597 = vmul.f32 %v1575, 0.17677669
        %v1598 = vmul.f32 %v1580, 0.17677669
        %v1599 = vmul.f32 %v1583, 0.17677669
        %v1600 = vmul.f32 %v1588, 0.17677669
        %v1601 = vmul.f32 %v1591, 0.17677669
        %v1602 = vpack.c.bf16 %v1595, %v1594
        %v1603 = vpack.c.bf16 %v1597, %v1596
        %v1604 = vpack.c.bf16 %v1599, %v1598
        %v1605 = vpack.c.bf16 %v1601, %v1600
        %1610 = vrot.lane.b32.xlu0 %v1602, 96
        %v1611 = vpop.permute.xlu0 %1610
        %1612 = vrot.lane.b32.xlu0 %v1603, 96
        %v1613 = vpop.permute.xlu0 %1612
        %1614 = vrot.lane.b32.xlu0 %v1604, 96
        %v1615 = vpop.permute.xlu0 %1614
        %1616 = vrot.lane.b32.xlu0 %v1605, 96
        %v1617 = vpop.permute.xlu0 %1616
        %1618 = vrot.lane.b32.xlu0 %v1602, 64
        %v1619 = vpop.permute.xlu0 %1618
        %1620 = vrot.lane.b32.xlu0 %v1603, 64
        %v1621 = vpop.permute.xlu0 %1620
        %1622 = vrot.lane.b32.xlu0 %v1604, 64
        %v1623 = vpop.permute.xlu0 %1622
        %1624 = vrot.lane.b32.xlu0 %v1605, 64
        %v1625 = vpop.permute.xlu0 %1624
        %1626 = vrot.lane.b32.xlu0 %v1602, 32
        %v1627 = vpop.permute.xlu0 %1626
        %1628 = vrot.lane.b32.xlu0 %v1603, 32
        %v1629 = vpop.permute.xlu0 %1628
        %1630 = vrot.lane.b32.xlu0 %v1604, 32
        %v1631 = vpop.permute.xlu0 %1630
        %1632 = vrot.lane.b32.xlu0 %v1605, 32
        %v1633 = vpop.permute.xlu0 %1632
        %v1634 = vld [vmem:[%s619] sm:$0xf]
        %v1635 = vld [vmem:[%s619 + $0x4] sm:$0xf]
        %v1636 = vld [vmem:[%s619 + $0x8] sm:$0xf]
        %v1637 = vld [vmem:[%s619 + $0xc] sm:$0xf]
        %v1638 = vld [vmem:[%s619 + $0x10] sm:$0xf]
        %v1639 = vld [vmem:[%s619 + $0x14] sm:$0xf]
        %v1640 = vld [vmem:[%s619 + $0x18] sm:$0xf]
        %v1641 = vld [vmem:[%s619 + $0x1c] sm:$0xf]
        %v1642 = vunpack.c.l.bf16 %v1634
        %v1643 = vunpack.c.l.bf16 %v1635
        %v1644 = vunpack.c.l.bf16 %v1636
        %v1645 = vunpack.c.l.bf16 %v1637
        %v1646 = vunpack.c.l.bf16 %v1638
        %v1647 = vunpack.c.l.bf16 %v1639
        %v1648 = vunpack.c.l.bf16 %v1640
        %v1649 = vunpack.c.l.bf16 %v1641
        %v1650 = vld [vmem:[#allocation2] sm:$0xff]
        %v1651 = vld [vmem:[#allocation2 + $0x8] sm:$0xff]
        %v1652 = vld [vmem:[#allocation2 + $0x10] sm:$0xff]
        %v1653 = vld [vmem:[#allocation2 + $0x18] sm:$0xff]
        %v1654 = vld [vmem:[#allocation2 + $0x20] sm:$0xff]
        %v1655 = vld [vmem:[#allocation2 + $0x28] sm:$0xff]
        %v1656 = vld [vmem:[#allocation2 + $0x30] sm:$0xff]
        %v1657 = vld [vmem:[#allocation2 + $0x38] sm:$0xff]
        %v1658 = vld [vmem:[#allocation2 + $0x40] sm:$0xff]
        %v1659 = vld [vmem:[#allocation2 + $0x48] sm:$0xff]
        %v1660 = vld [vmem:[#allocation2 + $0x50] sm:$0xff]
        %v1661 = vld [vmem:[#allocation2 + $0x58] sm:$0xff]
        %v1662 = vld [vmem:[#allocation2 + $0x60] sm:$0xff]
        %v1663 = vld [vmem:[#allocation2 + $0x68] sm:$0xff]
        %v1664 = vld [vmem:[#allocation2 + $0x70] sm:$0xff]
        %v1665 = vld [vmem:[#allocation2 + $0x78] sm:$0xff]
        %v1666 = vld [vmem:[#allocation2 + $0x80] sm:$0xff]
        %v1667 = vld [vmem:[#allocation2 + $0x88] sm:$0xff]
        %v1668 = vld [vmem:[#allocation2 + $0x90] sm:$0xff]
        %v1669 = vld [vmem:[#allocation2 + $0x98] sm:$0xff]
        %v1670 = vld [vmem:[#allocation2 + $0xa0] sm:$0xff]
        %v1671 = vld [vmem:[#allocation2 + $0xa8] sm:$0xff]
        %v1672 = vld [vmem:[#allocation2 + $0xb0] sm:$0xff]
        %v1673 = vld [vmem:[#allocation2 + $0xb8] sm:$0xff]
        %v1674 = vld [vmem:[#allocation2 + $0xc0] sm:$0xff]
        %v1675 = vld [vmem:[#allocation2 + $0xc8] sm:$0xff]
        %v1676 = vld [vmem:[#allocation2 + $0xd0] sm:$0xff]
        %v1677 = vld [vmem:[#allocation2 + $0xd8] sm:$0xff]
        %v1678 = vld [vmem:[#allocation2 + $0xe0] sm:$0xff]
        %v1679 = vld [vmem:[#allocation2 + $0xe8] sm:$0xff]
        %v1680 = vld [vmem:[#allocation2 + $0xf0] sm:$0xff]
        %v1681 = vld [vmem:[#allocation2 + $0xf8] sm:$0xff]
        %vm1682 = vcmask 261120
        %v1684 = vsel %vm1682, %v1602, 0
        %v1687 = vsel %vm1682, %v1603, 0
        %v1690 = vsel %vm1682, %v1604, 0
        %v1693 = vsel %vm1682, %v1605, 0
        %v1696 = vsel %vm1682, %v1650, 0
        %v1699 = vsel %vm1682, %v1651, 0
        %v1702 = vsel %vm1682, %v1652, 0
        %v1705 = vsel %vm1682, %v1653, 0
        %v1708 = vsel %vm1682, %v1654, 0
        %v1711 = vsel %vm1682, %v1655, 0
        %v1714 = vsel %vm1682, %v1656, 0
        %v1717 = vsel %vm1682, %v1657, 0
        %1719 = vmatprep.subr.bf16.mxu0 0
        %1720 = vmatpush1.bf16.xpose.msra.mxu0 %v1696
        %1721 = vmatprep.subr.bf16.mxu0 0
        %1722 = vmatpush1.bf16.xpose.msra.mxu0 %v1699
        %1723 = vmatprep.subr.bf16.mxu0 0
        %1724 = vmatpush1.bf16.xpose.msra.mxu0 %v1702
        %1725 = vmatprep.subr.bf16.mxu0 0
        %1726 = vmatpush1.bf16.xpose.msra.mxu0 %v1705
        %1727 = vmatprep.subr.bf16.mxu0 0
        %1728 = vmatpush1.bf16.xpose.msra.mxu0 %v1708
        %1729 = vmatprep.subr.bf16.mxu0 0
        %1730 = vmatpush1.bf16.xpose.msra.mxu0 %v1711
        %1731 = vmatprep.subr.bf16.mxu0 0
        %1732 = vmatpush1.bf16.xpose.msra.mxu0 %v1714
        %1733 = vmatprep.subr.bf16.mxu0 0
        %1734 = vmatpush1.bf16.xpose.msra.mxu0 %v1717
        %1735 = vmatprep.subr.bf16.mxu0 0
        %1736 = vmatpush1.bf16.xpose.msra.mxu0 0
        %1737 = vmatprep.subr.bf16.mxu0 0
        %1738 = vmatpush1.bf16.xpose.msra.mxu0 0
        %1739 = vmatprep.subr.bf16.mxu0 0
        %1740 = vmatpush1.bf16.xpose.msra.mxu0 0
        %1741 = vmatprep.subr.bf16.mxu0 0
        %1742 = vmatpush1.bf16.xpose.msra.mxu0 0
        %1743 = vmatprep.subr.bf16.mxu0 0
        %1744 = vmatpush1.bf16.xpose.msra.mxu0 0
        %1745 = vmatprep.subr.bf16.mxu0 0
        %1746 = vmatpush1.bf16.xpose.msra.mxu0 0
        %1747 = vmatprep.subr.bf16.mxu0 0
        %1748 = vmatpush1.bf16.xpose.msra.mxu0 0
        %1749 = vmatprep.subr.bf16.mxu0 0
        %1750 = vmatpush1.bf16.xpose.msra.mxu0 0
        %1751 = vmatprep.mubr.bf16.mxu0 0
        %1752 = vmatmul.mubr.bf16.gmra.mrb[0].mxu0 %v1684
        %v1753 = vpop.f32.mrb[0].mxu0
        %v1754 = vadd.f32 0.0, %v1753
        %v1755 = vpop.f32.mrb[0].mxu0
        %v1756 = vpop.f32.mrb[0].mxu0
        %v1757 = vadd.f32 0.0, %v1756
        %v1758 = vpop.f32.mrb[0].mxu0
        %1759 = vmatprep.mubr.bf16.mxu0 0
        %1760 = vmatmul.mubr.bf16.gmra.mrb[0].mxu0 %v1687
        %v1761 = vpop.f32.mrb[0].mxu0
        %v1762 = vadd.f32 0.0, %v1761
        %v1763 = vpop.f32.mrb[0].mxu0
        %v1764 = vpop.f32.mrb[0].mxu0
        %v1765 = vadd.f32 0.0, %v1764
        %v1766 = vpop.f32.mrb[0].mxu0
        %1767 = vmatprep.mubr.bf16.mxu0 0
        %1768 = vmatmul.mubr.bf16.gmra.mrb[0].mxu0 %v1690
        %v1769 = vpop.f32.mrb[0].mxu0
        %v1770 = vadd.f32 0.0, %v1769
        %v1771 = vpop.f32.mrb[0].mxu0
        %v1772 = vpop.f32.mrb[0].mxu0
        %v1773 = vadd.f32 0.0, %v1772
        %v1774 = vpop.f32.mrb[0].mxu0
        %1775 = vmatprep.mubr.bf16.mxu0 0
        %1776 = vmatmul.mubr.bf16.gmra.mrb[0].mxu0 %v1693
        %v1777 = vpop.f32.mrb[0].mxu0
        %v1778 = vadd.f32 0.0, %v1777
        %v1779 = vpop.f32.mrb[0].mxu0
        %v1780 = vpop.f32.mrb[0].mxu0
        %v1781 = vadd.f32 0.0, %v1780
        %v1782 = vpop.f32.mrb[0].mxu0
        %1783 = vdwg.mxu0
        %v1785 = vsel %vm1682, %v1611, 0
        %v1788 = vsel %vm1682, %v1613, 0
        %v1791 = vsel %vm1682, %v1615, 0
        %v1794 = vsel %vm1682, %v1617, 0
        %v1797 = vsel %vm1682, %v1658, 0
        %v1800 = vsel %vm1682, %v1659, 0
        %v1803 = vsel %vm1682, %v1660, 0
        %v1806 = vsel %vm1682, %v1661, 0
        %v1809 = vsel %vm1682, %v1662, 0
        %v1812 = vsel %vm1682, %v1663, 0
        %v1815 = vsel %vm1682, %v1664, 0
        %v1818 = vsel %vm1682, %v1665, 0
        %1820 = vmatprep.subr.bf16.mxu0 0
        %1821 = vmatpush1.bf16.xpose.msra.mxu0 %v1797
        %1822 = vmatprep.subr.bf16.mxu0 0
        %1823 = vmatpush1.bf16.xpose.msra.mxu0 %v1800
        %1824 = vmatprep.subr.bf16.mxu0 0
        %1825 = vmatpush1.bf16.xpose.msra.mxu0 %v1803
        %1826 = vmatprep.subr.bf16.mxu0 0
        %1827 = vmatpush1.bf16.xpose.msra.mxu0 %v1806
        %1828 = vmatprep.subr.bf16.mxu0 0
        %1829 = vmatpush1.bf16.xpose.msra.mxu0 %v1809
        %1830 = vmatprep.subr.bf16.mxu0 0
        %1831 = vmatpush1.bf16.xpose.msra.mxu0 %v1812
        %1832 = vmatprep.subr.bf16.mxu0 0
        %1833 = vmatpush1.bf16.xpose.msra.mxu0 %v1815
        %1834 = vmatprep.subr.bf16.mxu0 0
        %1835 = vmatpush1.bf16.xpose.msra.mxu0 %v1818
        %1836 = vmatprep.subr.bf16.mxu0 0
        %1837 = vmatpush1.bf16.xpose.msra.mxu0 0
        %1838 = vmatprep.subr.bf16.mxu0 0
        %1839 = vmatpush1.bf16.xpose.msra.mxu0 0
        %1840 = vmatprep.subr.bf16.mxu0 0
        %1841 = vmatpush1.bf16.xpose.msra.mxu0 0
        %1842 = vmatprep.subr.bf16.mxu0 0
        %1843 = vmatpush1.bf16.xpose.msra.mxu0 0
        %1844 = vmatprep.subr.bf16.mxu0 0
        %1845 = vmatpush1.bf16.xpose.msra.mxu0 0
        %1846 = vmatprep.subr.bf16.mxu0 0
        %1847 = vmatpush1.bf16.xpose.msra.mxu0 0
        %1848 = vmatprep.subr.bf16.mxu0 0
        %1849 = vmatpush1.bf16.xpose.msra.mxu0 0
        %1850 = vmatprep.subr.bf16.mxu0 0
        %1851 = vmatpush1.bf16.xpose.msra.mxu0 0
        %1852 = vmatprep.mubr.bf16.mxu0 0
        %1853 = vmatmul.mubr.bf16.gmra.mrb[0].mxu0 %v1785
        %v1854 = vpop.f32.mrb[0].mxu0
        %v1855 = vadd.f32 0.0, %v1854
        %v1856 = vpop.f32.mrb[0].mxu0
        %v1857 = vpop.f32.mrb[0].mxu0
        %v1858 = vadd.f32 0.0, %v1857
        %v1859 = vpop.f32.mrb[0].mxu0
        %1860 = vmatprep.mubr.bf16.mxu0 0
        %1861 = vmatmul.mubr.bf16.gmra.mrb[0].mxu0 %v1788
        %v1862 = vpop.f32.mrb[0].mxu0
        %v1863 = vadd.f32 0.0, %v1862
        %v1864 = vpop.f32.mrb[0].mxu0
        %v1865 = vpop.f32.mrb[0].mxu0
        %v1866 = vadd.f32 0.0, %v1865
        %v1867 = vpop.f32.mrb[0].mxu0
        %1868 = vmatprep.mubr.bf16.mxu0 0
        %1869 = vmatmul.mubr.bf16.gmra.mrb[0].mxu0 %v1791
        %v1870 = vpop.f32.mrb[0].mxu0
        %v1871 = vadd.f32 0.0, %v1870
        %v1872 = vpop.f32.mrb[0].mxu0
        %v1873 = vpop.f32.mrb[0].mxu0
        %v1874 = vadd.f32 0.0, %v1873
        %v1875 = vpop.f32.mrb[0].mxu0
        %1876 = vmatprep.mubr.bf16.mxu0 0
        %1877 = vmatmul.mubr.bf16.gmra.mrb[0].mxu0 %v1794
        %v1878 = vpop.f32.mrb[0].mxu0
        %v1879 = vadd.f32 0.0, %v1878
        %v1880 = vpop.f32.mrb[0].mxu0
        %v1881 = vpop.f32.mrb[0].mxu0
        %v1882 = vadd.f32 0.0, %v1881
        %v1883 = vpop.f32.mrb[0].mxu0
        %1884 = vdwg.mxu0
        %v1886 = vsel %vm1682, %v1619, 0
        %v1889 = vsel %vm1682, %v1621, 0
        %v1892 = vsel %vm1682, %v1623, 0
        %v1895 = vsel %vm1682, %v1625, 0
        %v1898 = vsel %vm1682, %v1666, 0
        %v1901 = vsel %vm1682, %v1667, 0
        %v1904 = vsel %vm1682, %v1668, 0
        %v1907 = vsel %vm1682, %v1669, 0
        %v1910 = vsel %vm1682, %v1670, 0
        %v1913 = vsel %vm1682, %v1671, 0
        %v1916 = vsel %vm1682, %v1672, 0
        %v1919 = vsel %vm1682, %v1673, 0
        %1921 = vmatprep.subr.bf16.mxu0 0
        %1922 = vmatpush1.bf16.xpose.msra.mxu0 %v1898
        %1923 = vmatprep.subr.bf16.mxu0 0
        %1924 = vmatpush1.bf16.xpose.msra.mxu0 %v1901
        %1925 = vmatprep.subr.bf16.mxu0 0
        %1926 = vmatpush1.bf16.xpose.msra.mxu0 %v1904
        %1927 = vmatprep.subr.bf16.mxu0 0
        %1928 = vmatpush1.bf16.xpose.msra.mxu0 %v1907
        %1929 = vmatprep.subr.bf16.mxu0 0
        %1930 = vmatpush1.bf16.xpose.msra.mxu0 %v1910
        %1931 = vmatprep.subr.bf16.mxu0 0
        %1932 = vmatpush1.bf16.xpose.msra.mxu0 %v1913
        %1933 = vmatprep.subr.bf16.mxu0 0
        %1934 = vmatpush1.bf16.xpose.msra.mxu0 %v1916
        %1935 = vmatprep.subr.bf16.mxu0 0
        %1936 = vmatpush1.bf16.xpose.msra.mxu0 %v1919
        %1937 = vmatprep.subr.bf16.mxu0 0
        %1938 = vmatpush1.bf16.xpose.msra.mxu0 0
        %1939 = vmatprep.subr.bf16.mxu0 0
        %1940 = vmatpush1.bf16.xpose.msra.mxu0 0
        %1941 = vmatprep.subr.bf16.mxu0 0
        %1942 = vmatpush1.bf16.xpose.msra.mxu0 0
        %1943 = vmatprep.subr.bf16.mxu0 0
        %1944 = vmatpush1.bf16.xpose.msra.mxu0 0
        %1945 = vmatprep.subr.bf16.mxu0 0
        %1946 = vmatpush1.bf16.xpose.msra.mxu0 0
        %1947 = vmatprep.subr.bf16.mxu0 0
        %1948 = vmatpush1.bf16.xpose.msra.mxu0 0
        %1949 = vmatprep.subr.bf16.mxu0 0
        %1950 = vmatpush1.bf16.xpose.msra.mxu0 0
        %1951 = vmatprep.subr.bf16.mxu0 0
        %1952 = vmatpush1.bf16.xpose.msra.mxu0 0
        %1953 = vmatprep.mubr.bf16.mxu0 0
        %1954 = vmatmul.mubr.bf16.gmra.mrb[0].mxu0 %v1886
        %v1955 = vpop.f32.mrb[0].mxu0
        %v1956 = vadd.f32 0.0, %v1955
        %v1957 = vpop.f32.mrb[0].mxu0
        %v1958 = vpop.f32.mrb[0].mxu0
        %v1959 = vadd.f32 0.0, %v1958
        %v1960 = vpop.f32.mrb[0].mxu0
        %1961 = vmatprep.mubr.bf16.mxu0 0
        %1962 = vmatmul.mubr.bf16.gmra.mrb[0].mxu0 %v1889
        %v1963 = vpop.f32.mrb[0].mxu0
        %v1964 = vadd.f32 0.0, %v1963
        %v1965 = vpop.f32.mrb[0].mxu0
        %v1966 = vpop.f32.mrb[0].mxu0
        %v1967 = vadd.f32 0.0, %v1966
        %v1968 = vpop.f32.mrb[0].mxu0
        %1969 = vmatprep.mubr.bf16.mxu0 0
        %1970 = vmatmul.mubr.bf16.gmra.mrb[0].mxu0 %v1892
        %v1971 = vpop.f32.mrb[0].mxu0
        %v1972 = vadd.f32 0.0, %v1971
        %v1973 = vpop.f32.mrb[0].mxu0
        %v1974 = vpop.f32.mrb[0].mxu0
        %v1975 = vadd.f32 0.0, %v1974
        %v1976 = vpop.f32.mrb[0].mxu0
        %1977 = vmatprep.mubr.bf16.mxu0 0
        %1978 = vmatmul.mubr.bf16.gmra.mrb[0].mxu0 %v1895
        %v1979 = vpop.f32.mrb[0].mxu0
        %v1980 = vadd.f32 0.0, %v1979
        %v1981 = vpop.f32.mrb[0].mxu0
        %v1982 = vpop.f32.mrb[0].mxu0
        %v1983 = vadd.f32 0.0, %v1982
        %v1984 = vpop.f32.mrb[0].mxu0
        %1985 = vdwg.mxu0
        %v1987 = vsel %vm1682, %v1627, 0
        %v1990 = vsel %vm1682, %v1629, 0
        %v1993 = vsel %vm1682, %v1631, 0
        %v1996 = vsel %vm1682, %v1633, 0
        %v1999 = vsel %vm1682, %v1674, 0
        %v2002 = vsel %vm1682, %v1675, 0
        %v2005 = vsel %vm1682, %v1676, 0
        %v2008 = vsel %vm1682, %v1677, 0
        %v2011 = vsel %vm1682, %v1678, 0
        %v2014 = vsel %vm1682, %v1679, 0
        %v2017 = vsel %vm1682, %v1680, 0
        %v2020 = vsel %vm1682, %v1681, 0
        %2022 = vmatprep.subr.bf16.mxu0 0
        %2023 = vmatpush1.bf16.xpose.msra.mxu0 %v1999
        %2024 = vmatprep.subr.bf16.mxu0 0
        %2025 = vmatpush1.bf16.xpose.msra.mxu0 %v2002
        %2026 = vmatprep.subr.bf16.mxu0 0
        %2027 = vmatpush1.bf16.xpose.msra.mxu0 %v2005
        %2028 = vmatprep.subr.bf16.mxu0 0
        %2029 = vmatpush1.bf16.xpose.msra.mxu0 %v2008
        %2030 = vmatprep.subr.bf16.mxu0 0
        %2031 = vmatpush1.bf16.xpose.msra.mxu0 %v2011
        %2032 = vmatprep.subr.bf16.mxu0 0
        %2033 = vmatpush1.bf16.xpose.msra.mxu0 %v2014
        %2034 = vmatprep.subr.bf16.mxu0 0
        %2035 = vmatpush1.bf16.xpose.msra.mxu0 %v2017
        %2036 = vmatprep.subr.bf16.mxu0 0
        %2037 = vmatpush1.bf16.xpose.msra.mxu0 %v2020
        %2038 = vmatprep.subr.bf16.mxu0 0
        %2039 = vmatpush1.bf16.xpose.msra.mxu0 0
        %2040 = vmatprep.subr.bf16.mxu0 0
        %2041 = vmatpush1.bf16.xpose.msra.mxu0 0
        %2042 = vmatprep.subr.bf16.mxu0 0
        %2043 = vmatpush1.bf16.xpose.msra.mxu0 0
        %2044 = vmatprep.subr.bf16.mxu0 0
        %2045 = vmatpush1.bf16.xpose.msra.mxu0 0
        %2046 = vmatprep.subr.bf16.mxu0 0
        %2047 = vmatpush1.bf16.xpose.msra.mxu0 0
        %2048 = vmatprep.subr.bf16.mxu0 0
        %2049 = vmatpush1.bf16.xpose.msra.mxu0 0
        %2050 = vmatprep.subr.bf16.mxu0 0
        %2051 = vmatpush1.bf16.xpose.msra.mxu0 0
        %2052 = vmatprep.subr.bf16.mxu0 0
        %2053 = vmatpush1.bf16.xpose.msra.mxu0 0
        %2054 = vmatprep.mubr.bf16.mxu0 0
        %2055 = vmatmul.mubr.bf16.gmra.mrb[0].mxu0 %v1987
        %v2056 = vpop.f32.mrb[0].mxu0
        %v2057 = vadd.f32 0.0, %v2056
        %v2058 = vpop.f32.mrb[0].mxu0
        %v2059 = vpop.f32.mrb[0].mxu0
        %v2060 = vadd.f32 0.0, %v2059
        %v2061 = vpop.f32.mrb[0].mxu0
        %2062 = vmatprep.mubr.bf16.mxu0 0
        %2063 = vmatmul.mubr.bf16.gmra.mrb[0].mxu0 %v1990
        %v2064 = vpop.f32.mrb[0].mxu0
        %v2065 = vadd.f32 0.0, %v2064
        %v2066 = vpop.f32.mrb[0].mxu0
        %v2067 = vpop.f32.mrb[0].mxu0
        %v2068 = vadd.f32 0.0, %v2067
        %v2069 = vpop.f32.mrb[0].mxu0
        %2070 = vmatprep.mubr.bf16.mxu0 0
        %2071 = vmatmul.mubr.bf16.gmra.mrb[0].mxu0 %v1993
        %v2072 = vpop.f32.mrb[0].mxu0
        %v2073 = vadd.f32 0.0, %v2072
        %v2074 = vpop.f32.mrb[0].mxu0
        %v2075 = vpop.f32.mrb[0].mxu0
        %v2076 = vadd.f32 0.0, %v2075
        %v2077 = vpop.f32.mrb[0].mxu0
        %2078 = vmatprep.mubr.bf16.mxu0 0
        %2079 = vmatmul.mubr.bf16.gmra.mrb[0].mxu0 %v1996
        %v2080 = vpop.f32.mrb[0].mxu0
        %v2081 = vadd.f32 0.0, %v2080
        %v2082 = vpop.f32.mrb[0].mxu0
        %v2083 = vpop.f32.mrb[0].mxu0
        %v2084 = vadd.f32 0.0, %v2083
        %v2085 = vpop.f32.mrb[0].mxu0
        %2086 = vdwg.mxu0
        %vm2087 = vcmp.eq.f32.partialorder %v1642, 0.0
        %vm2088 = vcmp.eq.f32.partialorder %v1643, 0.0
        %vm2089 = vcmp.eq.f32.partialorder %v1644, 0.0
        %vm2090 = vcmp.eq.f32.partialorder %v1645, 0.0
        %vm2091 = vcmp.eq.f32.partialorder %v1646, 0.0
        %vm2092 = vcmp.eq.f32.partialorder %v1647, 0.0
        %vm2093 = vcmp.eq.f32.partialorder %v1648, 0.0
        %vm2094 = vcmp.eq.f32.partialorder %v1649, 0.0
        %v2095 = vsel %vm2087, -1e+09, %v1754
        %v2096 = vsel %vm2088, -1e+09, %v1757
        %v2097 = vsel %vm2089, -1e+09, %v1762
        %v2098 = vsel %vm2090, -1e+09, %v1765
        %v2099 = vsel %vm2091, -1e+09, %v1770
        %v2100 = vsel %vm2092, -1e+09, %v1773
        %v2101 = vsel %vm2093, -1e+09, %v1778
        %v2102 = vsel %vm2094, -1e+09, %v1781
        %v2103 = vsel %vm2087, -1e+09, %v1855
        %v2104 = vsel %vm2088, -1e+09, %v1858
        %v2105 = vsel %vm2089, -1e+09, %v1863
        %v2106 = vsel %vm2090, -1e+09, %v1866
        %v2107 = vsel %vm2091, -1e+09, %v1871
        %v2108 = vsel %vm2092, -1e+09, %v1874
        %v2109 = vsel %vm2093, -1e+09, %v1879
        %v2110 = vsel %vm2094, -1e+09, %v1882
        %v2111 = vsel %vm2087, -1e+09, %v1956
        %v2112 = vsel %vm2088, -1e+09, %v1959
        %v2113 = vsel %vm2089, -1e+09, %v1964
        %v2114 = vsel %vm2090, -1e+09, %v1967
        %v2115 = vsel %vm2091, -1e+09, %v1972
        %v2116 = vsel %vm2092, -1e+09, %v1975
        %v2117 = vsel %vm2093, -1e+09, %v1980
        %v2118 = vsel %vm2094, -1e+09, %v1983
        %v2119 = vsel %vm2087, -1e+09, %v2057
        %v2120 = vsel %vm2088, -1e+09, %v2060
        %v2121 = vsel %vm2089, -1e+09, %v2065
        %v2122 = vsel %vm2090, -1e+09, %v2068
        %v2123 = vsel %vm2091, -1e+09, %v2073
        %v2124 = vsel %vm2092, -1e+09, %v2076
        %v2125 = vsel %vm2093, -1e+09, %v2081
        %v2126 = vsel %vm2094, -1e+09, %v2084
        %2127 = vst [vmem:[%s697] sm:$0xff] %v2095
        %2128 = vst [vmem:[%s697 + $0x8] sm:$0xff] %v2096
        %2129 = vst [vmem:[%s697 + $0x10] sm:$0xff] %v2097
        %2130 = vst [vmem:[%s697 + $0x18] sm:$0xff] %v2098
        %2131 = vst [vmem:[%s697 + $0x20] sm:$0xff] %v2099
        %2132 = vst [vmem:[%s697 + $0x28] sm:$0xff] %v2100
        %2133 = vst [vmem:[%s697 + $0x30] sm:$0xff] %v2101
        %2134 = vst [vmem:[%s697 + $0x38] sm:$0xff] %v2102
        %2135 = vst [vmem:[%s697 + $0x40] sm:$0xff] %v2103
        %2136 = vst [vmem:[%s697 + $0x48] sm:$0xff] %v2104
        %2137 = vst [vmem:[%s697 + $0x50] sm:$0xff] %v2105
        %2138 = vst [vmem:[%s697 + $0x58] sm:$0xff] %v2106
        %2139 = vst [vmem:[%s697 + $0x60] sm:$0xff] %v2107
        %2140 = vst [vmem:[%s697 + $0x68] sm:$0xff] %v2108
        %2141 = vst [vmem:[%s697 + $0x70] sm:$0xff] %v2109
        %2142 = vst [vmem:[%s697 + $0x78] sm:$0xff] %v2110
        %2143 = vst [vmem:[%s697 + $0x80] sm:$0xff] %v2111
        %2144 = vst [vmem:[%s697 + $0x88] sm:$0xff] %v2112
        %2145 = vst [vmem:[%s697 + $0x90] sm:$0xff] %v2113
        %2146 = vst [vmem:[%s697 + $0x98] sm:$0xff] %v2114
        %2147 = vst [vmem:[%s697 + $0xa0] sm:$0xff] %v2115
        %2148 = vst [vmem:[%s697 + $0xa8] sm:$0xff] %v2116
        %2149 = vst [vmem:[%s697 + $0xb0] sm:$0xff] %v2117
        %2150 = vst [vmem:[%s697 + $0xb8] sm:$0xff] %v2118
        %2151 = vst [vmem:[%s697 + $0xc0] sm:$0xff] %v2119
        %2152 = vst [vmem:[%s697 + $0xc8] sm:$0xff] %v2120
        %2153 = vst [vmem:[%s697 + $0xd0] sm:$0xff] %v2121
        %2154 = vst [vmem:[%s697 + $0xd8] sm:$0xff] %v2122
        %2155 = vst [vmem:[%s697 + $0xe0] sm:$0xff] %v2123
        %2156 = vst [vmem:[%s697 + $0xe8] sm:$0xff] %v2124
        %2157 = vst [vmem:[%s697 + $0xf0] sm:$0xff] %v2125
        %2158 = vst [vmem:[%s697 + $0xf8] sm:$0xff] %v2126
        %2159 = vmax.xlane.f32.xlu0 %v2095
        %v2160 = vpop.xlane.xlu0 %2159
        %2161 = vmax.xlane.f32.xlu0 %v2096
        %v2162 = vpop.xlane.xlu0 %2161
        %2163 = vmax.xlane.f32.xlu0 %v2097
        %v2164 = vpop.xlane.xlu0 %2163
        %2165 = vmax.xlane.f32.xlu0 %v2098
        %v2166 = vpop.xlane.xlu0 %2165
        %2167 = vmax.xlane.f32.xlu0 %v2099
        %v2168 = vpop.xlane.xlu0 %2167
        %2169 = vmax.xlane.f32.xlu0 %v2100
        %v2170 = vpop.xlane.xlu0 %2169
        %2171 = vmax.xlane.f32.xlu0 %v2101
        %v2172 = vpop.xlane.xlu0 %2171
        %2173 = vmax.xlane.f32.xlu0 %v2102
        %v2174 = vpop.xlane.xlu0 %2173
        %2175 = vmax.xlane.f32.xlu0 %v2103
        %v2176 = vpop.xlane.xlu0 %2175
        %2177 = vmax.xlane.f32.xlu0 %v2104
        %v2178 = vpop.xlane.xlu0 %2177
        %2179 = vmax.xlane.f32.xlu0 %v2105
        %v2180 = vpop.xlane.xlu0 %2179
        %2181 = vmax.xlane.f32.xlu0 %v2106
        %v2182 = vpop.xlane.xlu0 %2181
        %2183 = vmax.xlane.f32.xlu0 %v2107
        %v2184 = vpop.xlane.xlu0 %2183
        %2185 = vmax.xlane.f32.xlu0 %v2108
        %v2186 = vpop.xlane.xlu0 %2185
        %2187 = vmax.xlane.f32.xlu0 %v2109
        %v2188 = vpop.xlane.xlu0 %2187
        %2189 = vmax.xlane.f32.xlu0 %v2110
        %v2190 = vpop.xlane.xlu0 %2189
        %2191 = vmax.xlane.f32.xlu0 %v2111
        %v2192 = vpop.xlane.xlu0 %2191
        %2193 = vmax.xlane.f32.xlu0 %v2112
        %v2194 = vpop.xlane.xlu0 %2193
        %2195 = vmax.xlane.f32.xlu0 %v2113
        %v2196 = vpop.xlane.xlu0 %2195
        %2197 = vmax.xlane.f32.xlu0 %v2114
        %v2198 = vpop.xlane.xlu0 %2197
        %2199 = vmax.xlane.f32.xlu0 %v2115
        %v2200 = vpop.xlane.xlu0 %2199
        %2201 = vmax.xlane.f32.xlu0 %v2116
        %v2202 = vpop.xlane.xlu0 %2201
        %2203 = vmax.xlane.f32.xlu0 %v2117
        %v2204 = vpop.xlane.xlu0 %2203
        %2205 = vmax.xlane.f32.xlu0 %v2118
        %v2206 = vpop.xlane.xlu0 %2205
        %2207 = vmax.xlane.f32.xlu0 %v2119
        %v2208 = vpop.xlane.xlu0 %2207
        %2209 = vmax.xlane.f32.xlu0 %v2120
        %v2210 = vpop.xlane.xlu0 %2209
        %2211 = vmax.xlane.f32.xlu0 %v2121
        %v2212 = vpop.xlane.xlu0 %2211
        %2213 = vmax.xlane.f32.xlu0 %v2122
        %v2214 = vpop.xlane.xlu0 %2213
        %2215 = vmax.xlane.f32.xlu0 %v2123
        %v2216 = vpop.xlane.xlu0 %2215
        %2217 = vmax.xlane.f32.xlu0 %v2124
        %v2218 = vpop.xlane.xlu0 %2217
        %2219 = vmax.xlane.f32.xlu0 %v2125
        %v2220 = vpop.xlane.xlu0 %2219
        %2221 = vmax.xlane.f32.xlu0 %v2126
        %v2222 = vpop.xlane.xlu0 %2221
        %v2223 = vsub.f32 %v2095, %v2160
        %v2224 = vsub.f32 %v2096, %v2162
        %v2225 = vsub.f32 %v2097, %v2164
        %v2226 = vsub.f32 %v2098, %v2166
        %v2227 = vsub.f32 %v2099, %v2168
        %v2228 = vsub.f32 %v2100, %v2170
        %v2229 = vsub.f32 %v2101, %v2172
        %v2230 = vsub.f32 %v2102, %v2174
        %v2231 = vsub.f32 %v2103, %v2176
        %v2232 = vsub.f32 %v2104, %v2178
        %v2233 = vsub.f32 %v2105, %v2180
        %v2234 = vsub.f32 %v2106, %v2182
        %v2235 = vsub.f32 %v2107, %v2184
        %v2236 = vsub.f32 %v2108, %v2186
        %v2237 = vsub.f32 %v2109, %v2188
        %v2238 = vsub.f32 %v2110, %v2190
        %v2239 = vsub.f32 %v2111, %v2192
        %v2240 = vsub.f32 %v2112, %v2194
        %v2241 = vsub.f32 %v2113, %v2196
        %v2242 = vsub.f32 %v2114, %v2198
        %v2243 = vsub.f32 %v2115, %v2200
        %v2244 = vsub.f32 %v2116, %v2202
        %v2245 = vsub.f32 %v2117, %v2204
        %v2246 = vsub.f32 %v2118, %v2206
        %v2247 = vsub.f32 %v2119, %v2208
        %v2248 = vsub.f32 %v2120, %v2210
        %v2249 = vsub.f32 %v2121, %v2212
        %v2250 = vsub.f32 %v2122, %v2214
        %v2251 = vsub.f32 %v2123, %v2216
        %v2252 = vsub.f32 %v2124, %v2218
        %v2253 = vsub.f32 %v2125, %v2220
        %v2254 = vsub.f32 %v2126, %v2222
        %v2255 = vmul.f32 %v2223, 1.442695
        %v2256 = vpow.pop %v2255
        %v2257 = vmul.f32 %v2224, 1.442695
        %v2258 = vpow.pop %v2257
        %v2259 = vmul.f32 %v2225, 1.442695
        %v2260 = vpow.pop %v2259
        %v2261 = vmul.f32 %v2226, 1.442695
        %v2262 = vpow.pop %v2261
        %v2263 = vmul.f32 %v2227, 1.442695
        %v2264 = vpow.pop %v2263
        %v2265 = vmul.f32 %v2228, 1.442695
        %v2266 = vpow.pop %v2265
        %v2267 = vmul.f32 %v2229, 1.442695
        %v2268 = vpow.pop %v2267
        %v2269 = vmul.f32 %v2230, 1.442695
        %v2270 = vpow.pop %v2269
        %v2271 = vmul.f32 %v2231, 1.442695
        %v2272 = vpow.pop %v2271
        %v2273 = vmul.f32 %v2232, 1.442695
        %v2274 = vpow.pop %v2273
        %v2275 = vmul.f32 %v2233, 1.442695
        %v2276 = vpow.pop %v2275
        %v2277 = vmul.f32 %v2234, 1.442695
        %v2278 = vpow.pop %v2277
        %v2279 = vmul.f32 %v2235, 1.442695
        %v2280 = vpow.pop %v2279
        %v2281 = vmul.f32 %v2236, 1.442695
        %v2282 = vpow.pop %v2281
        %v2283 = vmul.f32 %v2237, 1.442695
        %v2284 = vpow.pop %v2283
        %v2285 = vmul.f32 %v2238, 1.442695
        %v2286 = vpow.pop %v2285
        %v2287 = vmul.f32 %v2239, 1.442695
        %v2288 = vpow.pop %v2287
        %v2289 = vmul.f32 %v2240, 1.442695
        %v2290 = vpow.pop %v2289
        %v2291 = vmul.f32 %v2241, 1.442695
        %v2292 = vpow.pop %v2291
        %v2293 = vmul.f32 %v2242, 1.442695
        %v2294 = vpow.pop %v2293
        %v2295 = vmul.f32 %v2243, 1.442695
        %v2296 = vpow.pop %v2295
        %v2297 = vmul.f32 %v2244, 1.442695
        %v2298 = vpow.pop %v2297
        %v2299 = vmul.f32 %v2245, 1.442695
        %v2300 = vpow.pop %v2299
        %v2301 = vmul.f32 %v2246, 1.442695
        %v2302 = vpow.pop %v2301
        %v2303 = vmul.f32 %v2247, 1.442695
        %v2304 = vpow.pop %v2303
        %v2305 = vmul.f32 %v2248, 1.442695
        %v2306 = vpow.pop %v2305
        %v2307 = vmul.f32 %v2249, 1.442695
        %v2308 = vpow.pop %v2307
        %v2309 = vmul.f32 %v2250, 1.442695
        %v2310 = vpow.pop %v2309
        %v2311 = vmul.f32 %v2251, 1.442695
        %v2312 = vpow.pop %v2311
        %v2313 = vmul.f32 %v2252, 1.442695
        %v2314 = vpow.pop %v2313
        %v2315 = vmul.f32 %v2253, 1.442695
        %v2316 = vpow.pop %v2315
        %v2317 = vmul.f32 %v2254, 1.442695
        %v2318 = vpow.pop %v2317
        %2319 = vadd.xlane.f32.xlu0 %v2256
        %v2320 = vpop.xlane.xlu0 %2319
        %2321 = vadd.xlane.f32.xlu0 %v2258
        %v2322 = vpop.xlane.xlu0 %2321
        %2323 = vadd.xlane.f32.xlu0 %v2260
        %v2324 = vpop.xlane.xlu0 %2323
        %2325 = vadd.xlane.f32.xlu0 %v2262
        %v2326 = vpop.xlane.xlu0 %2325
        %2327 = vadd.xlane.f32.xlu0 %v2264
        %v2328 = vpop.xlane.xlu0 %2327
        %2329 = vadd.xlane.f32.xlu0 %v2266
        %v2330 = vpop.xlane.xlu0 %2329
        %2331 = vadd.xlane.f32.xlu0 %v2268
        %v2332 = vpop.xlane.xlu0 %2331
        %2333 = vadd.xlane.f32.xlu0 %v2270
        %v2334 = vpop.xlane.xlu0 %2333
        %2335 = vadd.xlane.f32.xlu0 %v2272
        %v2336 = vpop.xlane.xlu0 %2335
        %2337 = vadd.xlane.f32.xlu0 %v2274
        %v2338 = vpop.xlane.xlu0 %2337
        %2339 = vadd.xlane.f32.xlu0 %v2276
        %v2340 = vpop.xlane.xlu0 %2339
        %2341 = vadd.xlane.f32.xlu0 %v2278
        %v2342 = vpop.xlane.xlu0 %2341
        %2343 = vadd.xlane.f32.xlu0 %v2280
        %v2344 = vpop.xlane.xlu0 %2343
        %2345 = vadd.xlane.f32.xlu0 %v2282
        %v2346 = vpop.xlane.xlu0 %2345
        %2347 = vadd.xlane.f32.xlu0 %v2284
        %v2348 = vpop.xlane.xlu0 %2347
        %2349 = vadd.xlane.f32.xlu0 %v2286
        %v2350 = vpop.xlane.xlu0 %2349
        %2351 = vadd.xlane.f32.xlu0 %v2288
        %v2352 = vpop.xlane.xlu0 %2351
        %2353 = vadd.xlane.f32.xlu0 %v2290
        %v2354 = vpop.xlane.xlu0 %2353
        %2355 = vadd.xlane.f32.xlu0 %v2292
        %v2356 = vpop.xlane.xlu0 %2355
        %2357 = vadd.xlane.f32.xlu0 %v2294
        %v2358 = vpop.xlane.xlu0 %2357
        %2359 = vadd.xlane.f32.xlu0 %v2296
        %v2360 = vpop.xlane.xlu0 %2359
        %2361 = vadd.xlane.f32.xlu0 %v2298
        %v2362 = vpop.xlane.xlu0 %2361
        %2363 = vadd.xlane.f32.xlu0 %v2300
        %v2364 = vpop.xlane.xlu0 %2363
        %2365 = vadd.xlane.f32.xlu0 %v2302
        %v2366 = vpop.xlane.xlu0 %2365
        %2367 = vadd.xlane.f32.xlu0 %v2304
        %v2368 = vpop.xlane.xlu0 %2367
        %2369 = vadd.xlane.f32.xlu0 %v2306
        %v2370 = vpop.xlane.xlu0 %2369
        %2371 = vadd.xlane.f32.xlu0 %v2308
        %v2372 = vpop.xlane.xlu0 %2371
        %2373 = vadd.xlane.f32.xlu0 %v2310
        %v2374 = vpop.xlane.xlu0 %2373
        %2375 = vadd.xlane.f32.xlu0 %v2312
        %v2376 = vpop.xlane.xlu0 %2375
        %2377 = vadd.xlane.f32.xlu0 %v2314
        %v2378 = vpop.xlane.xlu0 %2377
        %2379 = vadd.xlane.f32.xlu0 %v2316
        %v2380 = vpop.xlane.xlu0 %2379
        %2381 = vadd.xlane.f32.xlu0 %v2318
        %v2382 = vpop.xlane.xlu0 %2381
        %v2383 = vrcp.pop %v2320
        %v2384 = vrcp.pop %v2322
        %v2385 = vrcp.pop %v2324
        %v2386 = vrcp.pop %v2326
        %v2387 = vrcp.pop %v2328
        %v2388 = vrcp.pop %v2330
        %v2389 = vrcp.pop %v2332
        %v2390 = vrcp.pop %v2334
        %v2391 = vrcp.pop %v2336
        %v2392 = vrcp.pop %v2338
        %v2393 = vrcp.pop %v2340
        %v2394 = vrcp.pop %v2342
        %v2395 = vrcp.pop %v2344
        %v2396 = vrcp.pop %v2346
        %v2397 = vrcp.pop %v2348
        %v2398 = vrcp.pop %v2350
        %v2399 = vrcp.pop %v2352
        %v2400 = vrcp.pop %v2354
        %v2401 = vrcp.pop %v2356
        %v2402 = vrcp.pop %v2358
        %v2403 = vrcp.pop %v2360
        %v2404 = vrcp.pop %v2362
        %v2405 = vrcp.pop %v2364
        %v2406 = vrcp.pop %v2366
        %v2407 = vrcp.pop %v2368
        %v2408 = vrcp.pop %v2370
        %v2409 = vrcp.pop %v2372
        %v2410 = vrcp.pop %v2374
        %v2411 = vrcp.pop %v2376
        %v2412 = vrcp.pop %v2378
        %v2413 = vrcp.pop %v2380
        %v2414 = vrcp.pop %v2382
        %v2415 = vmul.f32 %v2256, %v2383
        %v2416 = vmul.f32 %v2258, %v2384
        %v2417 = vmul.f32 %v2260, %v2385
        %v2418 = vmul.f32 %v2262, %v2386
        %v2419 = vmul.f32 %v2264, %v2387
        %v2420 = vmul.f32 %v2266, %v2388
        %v2421 = vmul.f32 %v2268, %v2389
        %v2422 = vmul.f32 %v2270, %v2390
        %v2423 = vmul.f32 %v2272, %v2391
        %v2424 = vmul.f32 %v2274, %v2392
        %v2425 = vmul.f32 %v2276, %v2393
        %v2426 = vmul.f32 %v2278, %v2394
        %v2427 = vmul.f32 %v2280, %v2395
        %v2428 = vmul.f32 %v2282, %v2396
        %v2429 = vmul.f32 %v2284, %v2397
        %v2430 = vmul.f32 %v2286, %v2398
        %v2431 = vmul.f32 %v2288, %v2399
        %v2432 = vmul.f32 %v2290, %v2400
        %v2433 = vmul.f32 %v2292, %v2401
        %v2434 = vmul.f32 %v2294, %v2402
        %v2435 = vmul.f32 %v2296, %v2403
        %v2436 = vmul.f32 %v2298, %v2404
        %v2437 = vmul.f32 %v2300, %v2405
        %v2438 = vmul.f32 %v2302, %v2406
        %v2439 = vmul.f32 %v2304, %v2407
        %v2440 = vmul.f32 %v2306, %v2408
        %v2441 = vmul.f32 %v2308, %v2409
        %v2442 = vmul.f32 %v2310, %v2410
        %v2443 = vmul.f32 %v2312, %v2411
        %v2444 = vmul.f32 %v2314, %v2412
        %v2445 = vmul.f32 %v2316, %v2413
        %v2446 = vmul.f32 %v2318, %v2414
        %v2447 = vmul.f32 %v2415, %v1642
        %v2448 = vmul.f32 %v2416, %v1643
        %v2449 = vmul.f32 %v2417, %v1644
        %v2450 = vmul.f32 %v2418, %v1645
        %v2451 = vmul.f32 %v2419, %v1646
        %v2452 = vmul.f32 %v2420, %v1647
        %v2453 = vmul.f32 %v2421, %v1648
        %v2454 = vmul.f32 %v2422, %v1649
        %v2455 = vmul.f32 %v2423, %v1642
        %v2456 = vmul.f32 %v2424, %v1643
        %v2457 = vmul.f32 %v2425, %v1644
        %v2458 = vmul.f32 %v2426, %v1645
        %v2459 = vmul.f32 %v2427, %v1646
        %v2460 = vmul.f32 %v2428, %v1647
        %v2461 = vmul.f32 %v2429, %v1648
        %v2462 = vmul.f32 %v2430, %v1649
        %v2463 = vmul.f32 %v2431, %v1642
        %v2464 = vmul.f32 %v2432, %v1643
        %v2465 = vmul.f32 %v2433, %v1644
        %v2466 = vmul.f32 %v2434, %v1645
        %v2467 = vmul.f32 %v2435, %v1646
        %v2468 = vmul.f32 %v2436, %v1647
        %v2469 = vmul.f32 %v2437, %v1648
        %v2470 = vmul.f32 %v2438, %v1649
        %v2471 = vmul.f32 %v2439, %v1642
        %v2472 = vmul.f32 %v2440, %v1643
        %v2473 = vmul.f32 %v2441, %v1644
        %v2474 = vmul.f32 %v2442, %v1645
        %v2475 = vmul.f32 %v2443, %v1646
        %v2476 = vmul.f32 %v2444, %v1647
        %v2477 = vmul.f32 %v2445, %v1648
        %v2478 = vmul.f32 %v2446, %v1649
        %2479 = vadd.xlane.f32.xlu0 %v2447
        %v2480 = vpop.xlane.xlu0 %2479
        %2481 = vadd.xlane.f32.xlu0 %v2448
        %v2482 = vpop.xlane.xlu0 %2481
        %2483 = vadd.xlane.f32.xlu0 %v2449
        %v2484 = vpop.xlane.xlu0 %2483
        %2485 = vadd.xlane.f32.xlu0 %v2450
        %v2486 = vpop.xlane.xlu0 %2485
        %2487 = vadd.xlane.f32.xlu0 %v2451
        %v2488 = vpop.xlane.xlu0 %2487
        %2489 = vadd.xlane.f32.xlu0 %v2452
        %v2490 = vpop.xlane.xlu0 %2489
        %2491 = vadd.xlane.f32.xlu0 %v2453
        %v2492 = vpop.xlane.xlu0 %2491
        %2493 = vadd.xlane.f32.xlu0 %v2454
        %v2494 = vpop.xlane.xlu0 %2493
        %2495 = vadd.xlane.f32.xlu0 %v2455
        %v2496 = vpop.xlane.xlu0 %2495
        %2497 = vadd.xlane.f32.xlu0 %v2456
        %v2498 = vpop.xlane.xlu0 %2497
        %2499 = vadd.xlane.f32.xlu0 %v2457
        %v2500 = vpop.xlane.xlu0 %2499
        %2501 = vadd.xlane.f32.xlu0 %v2458
        %v2502 = vpop.xlane.xlu0 %2501
        %2503 = vadd.xlane.f32.xlu0 %v2459
        %v2504 = vpop.xlane.xlu0 %2503
        %2505 = vadd.xlane.f32.xlu0 %v2460
        %v2506 = vpop.xlane.xlu0 %2505
        %2507 = vadd.xlane.f32.xlu0 %v2461
        %v2508 = vpop.xlane.xlu0 %2507
        %2509 = vadd.xlane.f32.xlu0 %v2462
        %v2510 = vpop.xlane.xlu0 %2509
        %2511 = vadd.xlane.f32.xlu0 %v2463
        %v2512 = vpop.xlane.xlu0 %2511
        %2513 = vadd.xlane.f32.xlu0 %v2464
        %v2514 = vpop.xlane.xlu0 %2513
        %2515 = vadd.xlane.f32.xlu0 %v2465
        %v2516 = vpop.xlane.xlu0 %2515
        %2517 = vadd.xlane.f32.xlu0 %v2466
        %v2518 = vpop.xlane.xlu0 %2517
        %2519 = vadd.xlane.f32.xlu0 %v2467
        %v2520 = vpop.xlane.xlu0 %2519
        %2521 = vadd.xlane.f32.xlu0 %v2468
        %v2522 = vpop.xlane.xlu0 %2521
        %2523 = vadd.xlane.f32.xlu0 %v2469
        %v2524 = vpop.xlane.xlu0 %2523
        %2525 = vadd.xlane.f32.xlu0 %v2470
        %v2526 = vpop.xlane.xlu0 %2525
        %2527 = vadd.xlane.f32.xlu0 %v2471
        %v2528 = vpop.xlane.xlu0 %2527
        %2529 = vadd.xlane.f32.xlu0 %v2472
        %v2530 = vpop.xlane.xlu0 %2529
        %2531 = vadd.xlane.f32.xlu0 %v2473
        %v2532 = vpop.xlane.xlu0 %2531
        %2533 = vadd.xlane.f32.xlu0 %v2474
        %v2534 = vpop.xlane.xlu0 %2533
        %2535 = vadd.xlane.f32.xlu0 %v2475
        %v2536 = vpop.xlane.xlu0 %2535
        %2537 = vadd.xlane.f32.xlu0 %v2476
        %v2538 = vpop.xlane.xlu0 %2537
        %2539 = vadd.xlane.f32.xlu0 %v2477
        %v2540 = vpop.xlane.xlu0 %2539
        %2541 = vadd.xlane.f32.xlu0 %v2478
        %v2542 = vpop.xlane.xlu0 %2541
        %v2543 = vadd.f32 %v2480, 1e-13
        %v2544 = vadd.f32 %v2482, 1e-13
        %v2545 = vadd.f32 %v2484, 1e-13
        %v2546 = vadd.f32 %v2486, 1e-13
        %v2547 = vadd.f32 %v2488, 1e-13
        %v2548 = vadd.f32 %v2490, 1e-13
        %v2549 = vadd.f32 %v2492, 1e-13
        %v2550 = vadd.f32 %v2494, 1e-13
        %v2551 = vadd.f32 %v2496, 1e-13
        %v2552 = vadd.f32 %v2498, 1e-13
        %v2553 = vadd.f32 %v2500, 1e-13
        %v2554 = vadd.f32 %v2502, 1e-13
        %v2555 = vadd.f32 %v2504, 1e-13
        %v2556 = vadd.f32 %v2506, 1e-13
        %v2557 = vadd.f32 %v2508, 1e-13
        %v2558 = vadd.f32 %v2510, 1e-13
        %v2559 = vadd.f32 %v2512, 1e-13
        %v2560 = vadd.f32 %v2514, 1e-13
        %v2561 = vadd.f32 %v2516, 1e-13
        %v2562 = vadd.f32 %v2518, 1e-13
        %v2563 = vadd.f32 %v2520, 1e-13
        %v2564 = vadd.f32 %v2522, 1e-13
        %v2565 = vadd.f32 %v2524, 1e-13
        %v2566 = vadd.f32 %v2526, 1e-13
        %v2567 = vadd.f32 %v2528, 1e-13
        %v2568 = vadd.f32 %v2530, 1e-13
        %v2569 = vadd.f32 %v2532, 1e-13
        %v2570 = vadd.f32 %v2534, 1e-13
        %v2571 = vadd.f32 %v2536, 1e-13
        %v2572 = vadd.f32 %v2538, 1e-13
        %v2573 = vadd.f32 %v2540, 1e-13
        %v2574 = vadd.f32 %v2542, 1e-13
        %v2575 = vrcp.pop %v2543
        %v2576 = vrcp.pop %v2544
        %v2577 = vrcp.pop %v2545
        %v2578 = vrcp.pop %v2546
        %v2579 = vrcp.pop %v2547
        %v2580 = vrcp.pop %v2548
        %v2581 = vrcp.pop %v2549
        %v2582 = vrcp.pop %v2550
        %v2583 = vrcp.pop %v2551
        %v2584 = vrcp.pop %v2552
        %v2585 = vrcp.pop %v2553
        %v2586 = vrcp.pop %v2554
        %v2587 = vrcp.pop %v2555
        %v2588 = vrcp.pop %v2556
        %v2589 = vrcp.pop %v2557
        %v2590 = vrcp.pop %v2558
        %v2591 = vrcp.pop %v2559
        %v2592 = vrcp.pop %v2560
        %v2593 = vrcp.pop %v2561
        %v2594 = vrcp.pop %v2562
        %v2595 = vrcp.pop %v2563
        %v2596 = vrcp.pop %v2564
        %v2597 = vrcp.pop %v2565
        %v2598 = vrcp.pop %v2566
        %v2599 = vrcp.pop %v2567
        %v2600 = vrcp.pop %v2568
        %v2601 = vrcp.pop %v2569
        %v2602 = vrcp.pop %v2570
        %v2603 = vrcp.pop %v2571
        %v2604 = vrcp.pop %v2572
        %v2605 = vrcp.pop %v2573
        %v2606 = vrcp.pop %v2574
        %v2607 = vmul.f32 %v2447, %v2575
        %v2608 = vmul.f32 %v2448, %v2576
        %v2609 = vmul.f32 %v2449, %v2577
        %v2610 = vmul.f32 %v2450, %v2578
        %v2611 = vmul.f32 %v2451, %v2579
        %v2612 = vmul.f32 %v2452, %v2580
        %v2613 = vmul.f32 %v2453, %v2581
        %v2614 = vmul.f32 %v2454, %v2582
        %v2615 = vmul.f32 %v2455, %v2583
        %v2616 = vmul.f32 %v2456, %v2584
        %v2617 = vmul.f32 %v2457, %v2585
        %v2618 = vmul.f32 %v2458, %v2586
        %v2619 = vmul.f32 %v2459, %v2587
        %v2620 = vmul.f32 %v2460, %v2588
        %v2621 = vmul.f32 %v2461, %v2589
        %v2622 = vmul.f32 %v2462, %v2590
        %v2623 = vmul.f32 %v2463, %v2591
        %v2624 = vmul.f32 %v2464, %v2592
        %v2625 = vmul.f32 %v2465, %v2593
        %v2626 = vmul.f32 %v2466, %v2594
        %v2627 = vmul.f32 %v2467, %v2595
        %v2628 = vmul.f32 %v2468, %v2596
        %v2629 = vmul.f32 %v2469, %v2597
        %v2630 = vmul.f32 %v2470, %v2598
        %v2631 = vmul.f32 %v2471, %v2599
        %v2632 = vmul.f32 %v2472, %v2600
        %v2633 = vmul.f32 %v2473, %v2601
        %v2634 = vmul.f32 %v2474, %v2602
        %v2635 = vmul.f32 %v2475, %v2603
        %v2636 = vmul.f32 %v2476, %v2604
        %v2637 = vmul.f32 %v2477, %v2605
        %v2638 = vmul.f32 %v2478, %v2606
        %2639 = vst [vmem:[%s704] sm:$0xff] %v2607
        %2640 = vst [vmem:[%s704 + $0x8] sm:$0xff] %v2608
        %2641 = vst [vmem:[%s704 + $0x10] sm:$0xff] %v2609
        %2642 = vst [vmem:[%s704 + $0x18] sm:$0xff] %v2610
        %2643 = vst [vmem:[%s704 + $0x20] sm:$0xff] %v2611
        %2644 = vst [vmem:[%s704 + $0x28] sm:$0xff] %v2612
        %2645 = vst [vmem:[%s704 + $0x30] sm:$0xff] %v2613
        %2646 = vst [vmem:[%s704 + $0x38] sm:$0xff] %v2614
        %2647 = vst [vmem:[%s704 + $0x40] sm:$0xff] %v2615
        %2648 = vst [vmem:[%s704 + $0x48] sm:$0xff] %v2616
        %2649 = vst [vmem:[%s704 + $0x50] sm:$0xff] %v2617
        %2650 = vst [vmem:[%s704 + $0x58] sm:$0xff] %v2618
        %2651 = vst [vmem:[%s704 + $0x60] sm:$0xff] %v2619
        %2652 = vst [vmem:[%s704 + $0x68] sm:$0xff] %v2620
        %2653 = vst [vmem:[%s704 + $0x70] sm:$0xff] %v2621
        %2654 = vst [vmem:[%s704 + $0x78] sm:$0xff] %v2622
        %2655 = vst [vmem:[%s704 + $0x80] sm:$0xff] %v2623
        %2656 = vst [vmem:[%s704 + $0x88] sm:$0xff] %v2624
        %2657 = vst [vmem:[%s704 + $0x90] sm:$0xff] %v2625
        %2658 = vst [vmem:[%s704 + $0x98] sm:$0xff] %v2626
        %2659 = vst [vmem:[%s704 + $0xa0] sm:$0xff] %v2627
        %2660 = vst [vmem:[%s704 + $0xa8] sm:$0xff] %v2628
        %2661 = vst [vmem:[%s704 + $0xb0] sm:$0xff] %v2629
        %2662 = vst [vmem:[%s704 + $0xb8] sm:$0xff] %v2630
        %2663 = vst [vmem:[%s704 + $0xc0] sm:$0xff] %v2631
        %2664 = vst [vmem:[%s704 + $0xc8] sm:$0xff] %v2632
        %2665 = vst [vmem:[%s704 + $0xd0] sm:$0xff] %v2633
        %2666 = vst [vmem:[%s704 + $0xd8] sm:$0xff] %v2634
        %2667 = vst [vmem:[%s704 + $0xe0] sm:$0xff] %v2635
        %2668 = vst [vmem:[%s704 + $0xe8] sm:$0xff] %v2636
        %2669 = vst [vmem:[%s704 + $0xf0] sm:$0xff] %v2637
        %2670 = vst [vmem:[%s704 + $0xf8] sm:$0xff] %v2638
        %v2671 = vpack.c.bf16 %v2608, %v2607
        %v2672 = vpack.c.bf16 %v2610, %v2609
        %v2673 = vpack.c.bf16 %v2612, %v2611
        %v2674 = vpack.c.bf16 %v2614, %v2613
        %v2675 = vpack.c.bf16 %v2616, %v2615
        %v2676 = vpack.c.bf16 %v2618, %v2617
        %v2677 = vpack.c.bf16 %v2620, %v2619
        %v2678 = vpack.c.bf16 %v2622, %v2621
        %v2679 = vpack.c.bf16 %v2624, %v2623
        %v2680 = vpack.c.bf16 %v2626, %v2625
        %v2681 = vpack.c.bf16 %v2628, %v2627
        %v2682 = vpack.c.bf16 %v2630, %v2629
        %v2683 = vpack.c.bf16 %v2632, %v2631
        %v2684 = vpack.c.bf16 %v2634, %v2633
        %v2685 = vpack.c.bf16 %v2636, %v2635
        %v2686 = vpack.c.bf16 %v2638, %v2637
        %v2687 = vld [vmem:[#allocation3] sm:$0xff]
        %v2688 = vld [vmem:[#allocation3 + $0x8] sm:$0xff]
        %v2689 = vld [vmem:[#allocation3 + $0x10] sm:$0xff]
        %v2690 = vld [vmem:[#allocation3 + $0x18] sm:$0xff]
        %v2691 = vld [vmem:[#allocation3 + $0x20] sm:$0xff]
        %v2692 = vld [vmem:[#allocation3 + $0x28] sm:$0xff]
        %v2693 = vld [vmem:[#allocation3 + $0x30] sm:$0xff]
        %v2694 = vld [vmem:[#allocation3 + $0x38] sm:$0xff]
        %v2695 = vld [vmem:[#allocation3 + $0x40] sm:$0xff]
        %v2696 = vld [vmem:[#allocation3 + $0x48] sm:$0xff]
        %v2697 = vld [vmem:[#allocation3 + $0x50] sm:$0xff]
        %v2698 = vld [vmem:[#allocation3 + $0x58] sm:$0xff]
        %v2699 = vld [vmem:[#allocation3 + $0x60] sm:$0xff]
        %v2700 = vld [vmem:[#allocation3 + $0x68] sm:$0xff]
        %v2701 = vld [vmem:[#allocation3 + $0x70] sm:$0xff]
        %v2702 = vld [vmem:[#allocation3 + $0x78] sm:$0xff]
        %v2703 = vld [vmem:[#allocation3 + $0x80] sm:$0xff]
        %v2704 = vld [vmem:[#allocation3 + $0x88] sm:$0xff]
        %v2705 = vld [vmem:[#allocation3 + $0x90] sm:$0xff]
        %v2706 = vld [vmem:[#allocation3 + $0x98] sm:$0xff]
        %v2707 = vld [vmem:[#allocation3 + $0xa0] sm:$0xff]
        %v2708 = vld [vmem:[#allocation3 + $0xa8] sm:$0xff]
        %v2709 = vld [vmem:[#allocation3 + $0xb0] sm:$0xff]
        %v2710 = vld [vmem:[#allocation3 + $0xb8] sm:$0xff]
        %v2711 = vld [vmem:[#allocation3 + $0xc0] sm:$0xff]
        %v2712 = vld [vmem:[#allocation3 + $0xc8] sm:$0xff]
        %v2713 = vld [vmem:[#allocation3 + $0xd0] sm:$0xff]
        %v2714 = vld [vmem:[#allocation3 + $0xd8] sm:$0xff]
        %v2715 = vld [vmem:[#allocation3 + $0xe0] sm:$0xff]
        %v2716 = vld [vmem:[#allocation3 + $0xe8] sm:$0xff]
        %v2717 = vld [vmem:[#allocation3 + $0xf0] sm:$0xff]
        %v2718 = vld [vmem:[#allocation3 + $0xf8] sm:$0xff]
        %2719 = vmatprep.subr.bf16.mxu0 0
        %2720 = vmatpush1.bf16.msra.mxu0 %v2687
        %2721 = vmatprep.subr.bf16.mxu0 0
        %2722 = vmatpush1.bf16.msra.mxu0 %v2688
        %2723 = vmatprep.subr.bf16.mxu0 0
        %2724 = vmatpush1.bf16.msra.mxu0 %v2689
        %2725 = vmatprep.subr.bf16.mxu0 0
        %2726 = vmatpush1.bf16.msra.mxu0 %v2690
        %2727 = vmatprep.subr.bf16.mxu0 0
        %2728 = vmatpush1.bf16.msra.mxu0 %v2691
        %2729 = vmatprep.subr.bf16.mxu0 0
        %2730 = vmatpush1.bf16.msra.mxu0 %v2692
        %2731 = vmatprep.subr.bf16.mxu0 0
        %2732 = vmatpush1.bf16.msra.mxu0 %v2693
        %2733 = vmatprep.subr.bf16.mxu0 0
        %2734 = vmatpush1.bf16.msra.mxu0 %v2694
        %2735 = vmatprep.subr.bf16.mxu0 0
        %2736 = vmatpush1.bf16.msra.mxu0 0
        %2737 = vmatprep.subr.bf16.mxu0 0
        %2738 = vmatpush1.bf16.msra.mxu0 0
        %2739 = vmatprep.subr.bf16.mxu0 0
        %2740 = vmatpush1.bf16.msra.mxu0 0
        %2741 = vmatprep.subr.bf16.mxu0 0
        %2742 = vmatpush1.bf16.msra.mxu0 0
        %2743 = vmatprep.subr.bf16.mxu0 0
        %2744 = vmatpush1.bf16.msra.mxu0 0
        %2745 = vmatprep.subr.bf16.mxu0 0
        %2746 = vmatpush1.bf16.msra.mxu0 0
        %2747 = vmatprep.subr.bf16.mxu0 0
        %2748 = vmatpush1.bf16.msra.mxu0 0
        %2749 = vmatprep.subr.bf16.mxu0 0
        %2750 = vmatpush1.bf16.msra.mxu0 0
        %2751 = vmatprep.mubr.bf16.mxu0 0
        %2752 = vmatmul.mubr.bf16.gmra.mrb[0].mxu0 %v2671
        %v2753 = vpop.f32.mrb[0].mxu0
        %v2754 = vadd.f32 0.0, %v2753
        %v2755 = vpop.f32.mrb[0].mxu0
        %v2756 = vpop.f32.mrb[0].mxu0
        %v2757 = vadd.f32 0.0, %v2756
        %v2758 = vpop.f32.mrb[0].mxu0
        %2759 = vmatprep.mubr.bf16.mxu0 0
        %2760 = vmatmul.mubr.bf16.gmra.mrb[0].mxu0 %v2672
        %v2761 = vpop.f32.mrb[0].mxu0
        %v2762 = vadd.f32 0.0, %v2761
        %v2763 = vpop.f32.mrb[0].mxu0
        %v2764 = vpop.f32.mrb[0].mxu0
        %v2765 = vadd.f32 0.0, %v2764
        %v2766 = vpop.f32.mrb[0].mxu0
        %2767 = vmatprep.mubr.bf16.mxu0 0
        %2768 = vmatmul.mubr.bf16.gmra.mrb[0].mxu0 %v2673
        %v2769 = vpop.f32.mrb[0].mxu0
        %v2770 = vadd.f32 0.0, %v2769
        %v2771 = vpop.f32.mrb[0].mxu0
        %v2772 = vpop.f32.mrb[0].mxu0
        %v2773 = vadd.f32 0.0, %v2772
        %v2774 = vpop.f32.mrb[0].mxu0
        %2775 = vmatprep.mubr.bf16.mxu0 0
        %2776 = vmatmul.mubr.bf16.gmra.mrb[0].mxu0 %v2674
        %v2777 = vpop.f32.mrb[0].mxu0
        %v2778 = vadd.f32 0.0, %v2777
        %v2779 = vpop.f32.mrb[0].mxu0
        %v2780 = vpop.f32.mrb[0].mxu0
        %v2781 = vadd.f32 0.0, %v2780
        %v2782 = vpop.f32.mrb[0].mxu0
        %2783 = vdwg.mxu0
        %2784 = vmatprep.subr.bf16.mxu0 0
        %2785 = vmatpush1.bf16.msra.mxu0 %v2695
        %2786 = vmatprep.subr.bf16.mxu0 0
        %2787 = vmatpush1.bf16.msra.mxu0 %v2696
        %2788 = vmatprep.subr.bf16.mxu0 0
        %2789 = vmatpush1.bf16.msra.mxu0 %v2697
        %2790 = vmatprep.subr.bf16.mxu0 0
        %2791 = vmatpush1.bf16.msra.mxu0 %v2698
        %2792 = vmatprep.subr.bf16.mxu0 0
        %2793 = vmatpush1.bf16.msra.mxu0 %v2699
        %2794 = vmatprep.subr.bf16.mxu0 0
        %2795 = vmatpush1.bf16.msra.mxu0 %v2700
        %2796 = vmatprep.subr.bf16.mxu0 0
        %2797 = vmatpush1.bf16.msra.mxu0 %v2701
        %2798 = vmatprep.subr.bf16.mxu0 0
        %2799 = vmatpush1.bf16.msra.mxu0 %v2702
        %2800 = vmatprep.subr.bf16.mxu0 0
        %2801 = vmatpush1.bf16.msra.mxu0 0
        %2802 = vmatprep.subr.bf16.mxu0 0
        %2803 = vmatpush1.bf16.msra.mxu0 0
        %2804 = vmatprep.subr.bf16.mxu0 0
        %2805 = vmatpush1.bf16.msra.mxu0 0
        %2806 = vmatprep.subr.bf16.mxu0 0
        %2807 = vmatpush1.bf16.msra.mxu0 0
        %2808 = vmatprep.subr.bf16.mxu0 0
        %2809 = vmatpush1.bf16.msra.mxu0 0
        %2810 = vmatprep.subr.bf16.mxu0 0
        %2811 = vmatpush1.bf16.msra.mxu0 0
        %2812 = vmatprep.subr.bf16.mxu0 0
        %2813 = vmatpush1.bf16.msra.mxu0 0
        %2814 = vmatprep.subr.bf16.mxu0 0
        %2815 = vmatpush1.bf16.msra.mxu0 0
        %2816 = vmatprep.mubr.bf16.mxu0 0
        %2817 = vmatmul.mubr.bf16.gmra.mrb[0].mxu0 %v2675
        %v2818 = vpop.f32.mrb[0].mxu0
        %v2819 = vadd.f32 0.0, %v2818
        %v2820 = vpop.f32.mrb[0].mxu0
        %v2821 = vpop.f32.mrb[0].mxu0
        %v2822 = vadd.f32 0.0, %v2821
        %v2823 = vpop.f32.mrb[0].mxu0
        %2824 = vmatprep.mubr.bf16.mxu0 0
        %2825 = vmatmul.mubr.bf16.gmra.mrb[0].mxu0 %v2676
        %v2826 = vpop.f32.mrb[0].mxu0
        %v2827 = vadd.f32 0.0, %v2826
        %v2828 = vpop.f32.mrb[0].mxu0
        %v2829 = vpop.f32.mrb[0].mxu0
        %v2830 = vadd.f32 0.0, %v2829
        %v2831 = vpop.f32.mrb[0].mxu0
        %2832 = vmatprep.mubr.bf16.mxu0 0
        %2833 = vmatmul.mubr.bf16.gmra.mrb[0].mxu0 %v2677
        %v2834 = vpop.f32.mrb[0].mxu0
        %v2835 = vadd.f32 0.0, %v2834
        %v2836 = vpop.f32.mrb[0].mxu0
        %v2837 = vpop.f32.mrb[0].mxu0
        %v2838 = vadd.f32 0.0, %v2837
        %v2839 = vpop.f32.mrb[0].mxu0
        %2840 = vmatprep.mubr.bf16.mxu0 0
        %2841 = vmatmul.mubr.bf16.gmra.mrb[0].mxu0 %v2678
        %v2842 = vpop.f32.mrb[0].mxu0
        %v2843 = vadd.f32 0.0, %v2842
        %v2844 = vpop.f32.mrb[0].mxu0
        %v2845 = vpop.f32.mrb[0].mxu0
        %v2846 = vadd.f32 0.0, %v2845
        %v2847 = vpop.f32.mrb[0].mxu0
        %2848 = vdwg.mxu0
        %2849 = vmatprep.subr.bf16.mxu0 0
        %2850 = vmatpush1.bf16.msra.mxu0 %v2703
        %2851 = vmatprep.subr.bf16.mxu0 0
        %2852 = vmatpush1.bf16.msra.mxu0 %v2704
        %2853 = vmatprep.subr.bf16.mxu0 0
        %2854 = vmatpush1.bf16.msra.mxu0 %v2705
        %2855 = vmatprep.subr.bf16.mxu0 0
        %2856 = vmatpush1.bf16.msra.mxu0 %v2706
        %2857 = vmatprep.subr.bf16.mxu0 0
        %2858 = vmatpush1.bf16.msra.mxu0 %v2707
        %2859 = vmatprep.subr.bf16.mxu0 0
        %2860 = vmatpush1.bf16.msra.mxu0 %v2708
        %2861 = vmatprep.subr.bf16.mxu0 0
        %2862 = vmatpush1.bf16.msra.mxu0 %v2709
        %2863 = vmatprep.subr.bf16.mxu0 0
        %2864 = vmatpush1.bf16.msra.mxu0 %v2710
        %2865 = vmatprep.subr.bf16.mxu0 0
        %2866 = vmatpush1.bf16.msra.mxu0 0
        %2867 = vmatprep.subr.bf16.mxu0 0
        %2868 = vmatpush1.bf16.msra.mxu0 0
        %2869 = vmatprep.subr.bf16.mxu0 0
        %2870 = vmatpush1.bf16.msra.mxu0 0
        %2871 = vmatprep.subr.bf16.mxu0 0
        %2872 = vmatpush1.bf16.msra.mxu0 0
        %2873 = vmatprep.subr.bf16.mxu0 0
        %2874 = vmatpush1.bf16.msra.mxu0 0
        %2875 = vmatprep.subr.bf16.mxu0 0
        %2876 = vmatpush1.bf16.msra.mxu0 0
        %2877 = vmatprep.subr.bf16.mxu0 0
        %2878 = vmatpush1.bf16.msra.mxu0 0
        %2879 = vmatprep.subr.bf16.mxu0 0
        %2880 = vmatpush1.bf16.msra.mxu0 0
        %2881 = vmatprep.mubr.bf16.mxu0 0
        %2882 = vmatmul.mubr.bf16.gmra.mrb[0].mxu0 %v2679
        %v2883 = vpop.f32.mrb[0].mxu0
        %v2884 = vadd.f32 0.0, %v2883
        %v2885 = vpop.f32.mrb[0].mxu0
        %v2886 = vpop.f32.mrb[0].mxu0
        %v2887 = vadd.f32 0.0, %v2886
        %v2888 = vpop.f32.mrb[0].mxu0
        %2889 = vmatprep.mubr.bf16.mxu0 0
        %2890 = vmatmul.mubr.bf16.gmra.mrb[0].mxu0 %v2680
        %v2891 = vpop.f32.mrb[0].mxu0
        %v2892 = vadd.f32 0.0, %v2891
        %v2893 = vpop.f32.mrb[0].mxu0
        %v2894 = vpop.f32.mrb[0].mxu0
        %v2895 = vadd.f32 0.0, %v2894
        %v2896 = vpop.f32.mrb[0].mxu0
        %2897 = vmatprep.mubr.bf16.mxu0 0
        %2898 = vmatmul.mubr.bf16.gmra.mrb[0].mxu0 %v2681
        %v2899 = vpop.f32.mrb[0].mxu0
        %v2900 = vadd.f32 0.0, %v2899
        %v2901 = vpop.f32.mrb[0].mxu0
        %v2902 = vpop.f32.mrb[0].mxu0
        %v2903 = vadd.f32 0.0, %v2902
        %v2904 = vpop.f32.mrb[0].mxu0
        %2905 = vmatprep.mubr.bf16.mxu0 0
        %2906 = vmatmul.mubr.bf16.gmra.mrb[0].mxu0 %v2682
        %v2907 = vpop.f32.mrb[0].mxu0
        %v2908 = vadd.f32 0.0, %v2907
        %v2909 = vpop.f32.mrb[0].mxu0
        %v2910 = vpop.f32.mrb[0].mxu0
        %v2911 = vadd.f32 0.0, %v2910
        %v2912 = vpop.f32.mrb[0].mxu0
        %2913 = vdwg.mxu0
        %2914 = vmatprep.subr.bf16.mxu0 0
        %2915 = vmatpush1.bf16.msra.mxu0 %v2711
        %2916 = vmatprep.subr.bf16.mxu0 0
        %2917 = vmatpush1.bf16.msra.mxu0 %v2712
        %2918 = vmatprep.subr.bf16.mxu0 0
        %2919 = vmatpush1.bf16.msra.mxu0 %v2713
        %2920 = vmatprep.subr.bf16.mxu0 0
        %2921 = vmatpush1.bf16.msra.mxu0 %v2714
        %2922 = vmatprep.subr.bf16.mxu0 0
        %2923 = vmatpush1.bf16.msra.mxu0 %v2715
        %2924 = vmatprep.subr.bf16.mxu0 0
        %2925 = vmatpush1.bf16.msra.mxu0 %v2716
        %2926 = vmatprep.subr.bf16.mxu0 0
        %2927 = vmatpush1.bf16.msra.mxu0 %v2717
        %2928 = vmatprep.subr.bf16.mxu0 0
        %2929 = vmatpush1.bf16.msra.mxu0 %v2718
        %2930 = vmatprep.subr.bf16.mxu0 0
        %2931 = vmatpush1.bf16.msra.mxu0 0
        %2932 = vmatprep.subr.bf16.mxu0 0
        %2933 = vmatpush1.bf16.msra.mxu0 0
        %2934 = vmatprep.subr.bf16.mxu0 0
        %2935 = vmatpush1.bf16.msra.mxu0 0
        %2936 = vmatprep.subr.bf16.mxu0 0
        %2937 = vmatpush1.bf16.msra.mxu0 0
        %2938 = vmatprep.subr.bf16.mxu0 0
        %2939 = vmatpush1.bf16.msra.mxu0 0
        %2940 = vmatprep.subr.bf16.mxu0 0
        %2941 = vmatpush1.bf16.msra.mxu0 0
        %2942 = vmatprep.subr.bf16.mxu0 0
        %2943 = vmatpush1.bf16.msra.mxu0 0
        %2944 = vmatprep.subr.bf16.mxu0 0
        %2945 = vmatpush1.bf16.msra.mxu0 0
        %2946 = vmatprep.mubr.bf16.mxu0 0
        %2947 = vmatmul.mubr.bf16.gmra.mrb[0].mxu0 %v2683
        %v2948 = vpop.f32.mrb[0].mxu0
        %v2949 = vadd.f32 0.0, %v2948
        %v2950 = vpop.f32.mrb[0].mxu0
        %v2951 = vpop.f32.mrb[0].mxu0
        %v2952 = vadd.f32 0.0, %v2951
        %v2953 = vpop.f32.mrb[0].mxu0
        %2954 = vmatprep.mubr.bf16.mxu0 0
        %2955 = vmatmul.mubr.bf16.gmra.mrb[0].mxu0 %v2684
        %v2956 = vpop.f32.mrb[0].mxu0
        %v2957 = vadd.f32 0.0, %v2956
        %v2958 = vpop.f32.mrb[0].mxu0
        %v2959 = vpop.f32.mrb[0].mxu0
        %v2960 = vadd.f32 0.0, %v2959
        %v2961 = vpop.f32.mrb[0].mxu0
        %2962 = vmatprep.mubr.bf16.mxu0 0
        %2963 = vmatmul.mubr.bf16.gmra.mrb[0].mxu0 %v2685
        %v2964 = vpop.f32.mrb[0].mxu0
        %v2965 = vadd.f32 0.0, %v2964
        %v2966 = vpop.f32.mrb[0].mxu0
        %v2967 = vpop.f32.mrb[0].mxu0
        %v2968 = vadd.f32 0.0, %v2967
        %v2969 = vpop.f32.mrb[0].mxu0
        %2970 = vmatprep.mubr.bf16.mxu0 0
        %2971 = vmatmul.mubr.bf16.gmra.mrb[0].mxu0 %v2686
        %v2972 = vpop.f32.mrb[0].mxu0
        %v2973 = vadd.f32 0.0, %v2972
        %v2974 = vpop.f32.mrb[0].mxu0
        %v2975 = vpop.f32.mrb[0].mxu0
        %v2976 = vadd.f32 0.0, %v2975
        %v2977 = vpop.f32.mrb[0].mxu0
        %2978 = vdwg.mxu0
        %v2979 = vpack.c.bf16 %v2757, %v2754
        %v2980 = vpack.c.bf16 %v2765, %v2762
        %v2981 = vpack.c.bf16 %v2773, %v2770
        %v2982 = vpack.c.bf16 %v2781, %v2778
        %v2983 = vpack.c.bf16 %v2822, %v2819
        %v2984 = vpack.c.bf16 %v2830, %v2827
        %v2985 = vpack.c.bf16 %v2838, %v2835
        %v2986 = vpack.c.bf16 %v2846, %v2843
        %v2987 = vpack.c.bf16 %v2887, %v2884
        %v2988 = vpack.c.bf16 %v2895, %v2892
        %v2989 = vpack.c.bf16 %v2903, %v2900
        %v2990 = vpack.c.bf16 %v2911, %v2908
        %v2991 = vpack.c.bf16 %v2952, %v2949
        %v2992 = vpack.c.bf16 %v2960, %v2957
        %v2993 = vpack.c.bf16 %v2968, %v2965
        %v2994 = vpack.c.bf16 %v2976, %v2973
        %2999 = vrot.lane.b32.xlu0 %v2983, 32
        %v3000 = vpop.permute.xlu0 %2999
        %3001 = vrot.lane.b32.xlu0 %v2984, 32
        %v3002 = vpop.permute.xlu0 %3001
        %3003 = vrot.lane.b32.xlu0 %v2985, 32
        %v3004 = vpop.permute.xlu0 %3003
        %3005 = vrot.lane.b32.xlu0 %v2986, 32
        %v3006 = vpop.permute.xlu0 %3005
        %3011 = vrot.lane.b32.xlu0 %v2987, 64
        %v3012 = vpop.permute.xlu0 %3011
        %3013 = vrot.lane.b32.xlu0 %v2988, 64
        %v3014 = vpop.permute.xlu0 %3013
        %3015 = vrot.lane.b32.xlu0 %v2989, 64
        %v3016 = vpop.permute.xlu0 %3015
        %3017 = vrot.lane.b32.xlu0 %v2990, 64
        %v3018 = vpop.permute.xlu0 %3017
        %3023 = vrot.lane.b32.xlu0 %v2991, 96
        %v3024 = vpop.permute.xlu0 %3023
        %3025 = vrot.lane.b32.xlu0 %v2992, 96
        %v3026 = vpop.permute.xlu0 %3025
        %3027 = vrot.lane.b32.xlu0 %v2993, 96
        %v3028 = vpop.permute.xlu0 %3027
        %3029 = vrot.lane.b32.xlu0 %v2994, 96
        %v3030 = vpop.permute.xlu0 %3029
        %v3033 = vsel %vm1682, %v2979, %v3000
        %v3036 = vsel %vm1682, %v2980, %v3002
        %v3039 = vsel %vm1682, %v2981, %v3004
        %v3042 = vsel %vm1682, %v2982, %v3006
        %vm3043 = vcmask 523264
        %v3045 = vsel %vm3043, %v3033, %v3012
        %v3047 = vsel %vm3043, %v3036, %v3014
        %v3049 = vsel %vm3043, %v3039, %v3016
        %v3051 = vsel %vm3043, %v3042, %v3018
        %vm3052 = vcmask 785408
        %v3054 = vsel %vm3052, %v3045, %v3024
        %v3057 = vsel %vm3052, %v3047, %v3026
        %v3060 = vsel %vm3052, %v3049, %v3028
        %v3063 = vsel %vm3052, %v3051, %v3030
        %v3065 = vld [vmem:[#allocation16] sm:$0xf]
        %v3066 = vld [vmem:[#allocation16 + $0x4] sm:$0xf]
        %v3067 = vld [vmem:[#allocation16 + $0x8] sm:$0xf]
        %v3068 = vld [vmem:[#allocation16 + $0xc] sm:$0xf]
        %v3069 = vld [vmem:[#allocation16 + $0x10] sm:$0xf]
        %v3070 = vld [vmem:[#allocation16 + $0x14] sm:$0xf]
        %v3071 = vld [vmem:[#allocation16 + $0x18] sm:$0xf]
        %v3072 = vld [vmem:[#allocation16 + $0x1c] sm:$0xf]
        %v3073 = vld [vmem:[#allocation16 + $0x20] sm:$0xf]
        %v3074 = vld [vmem:[#allocation16 + $0x24] sm:$0xf]
        %v3075 = vld [vmem:[#allocation16 + $0x28] sm:$0xf]
        %v3076 = vld [vmem:[#allocation16 + $0x2c] sm:$0xf]
        %v3077 = vld [vmem:[#allocation16 + $0x30] sm:$0xf]
        %v3078 = vld [vmem:[#allocation16 + $0x34] sm:$0xf]
        %v3079 = vld [vmem:[#allocation16 + $0x38] sm:$0xf]
        %v3080 = vld [vmem:[#allocation16 + $0x3c] sm:$0xf]
        %v3081 = vld [vmem:[%s11] sm:$0x1]
        %v3083 = vlaneseq
        %v3084 = vshrl.u32 %v3083, 7
        %v3085 = vsub.s32 0, %v3084
        %v3086 = vrot.slane %v3081, %v3085
        %v3104 = vunpack.c.l.b16 %v3065
        %v3105 = vunpack.c.l.b16 %v3066
        %v3106 = vunpack.c.l.b16 %v3067
        %v3107 = vunpack.c.l.b16 %v3068
        %v3108 = vunpack.c.l.b16 %v3069
        %v3109 = vunpack.c.l.b16 %v3070
        %v3110 = vunpack.c.l.b16 %v3071
        %v3111 = vunpack.c.l.b16 %v3072
        %v3112 = vunpack.c.l.b16 %v3073
        %v3113 = vunpack.c.l.b16 %v3074
        %v3114 = vunpack.c.l.b16 %v3075
        %v3115 = vunpack.c.l.b16 %v3076
        %v3116 = vunpack.c.l.b16 %v3077
        %v3117 = vunpack.c.l.b16 %v3078
        %v3118 = vunpack.c.l.b16 %v3079
        %v3119 = vunpack.c.l.b16 %v3080
        %v3120 = vpack.c.b16 %v3105, %v3104
        %v3121 = vpack.c.b16 %v3107, %v3106
        %v3122 = vpack.c.b16 %v3109, %v3108
        %v3123 = vpack.c.b16 %v3111, %v3110
        %v3124 = vpack.c.b16 %v3113, %v3112
        %v3125 = vpack.c.b16 %v3115, %v3114
        %v3126 = vpack.c.b16 %v3117, %v3116
        %v3127 = vpack.c.b16 %v3119, %v3118
        %3136 = vmatprep.subr.bf16.mxu0 0
        %3137 = vmatpush1.bf16.msra.mxu0 %v3120
        %3138 = vmatprep.subr.bf16.mxu0 0
        %3139 = vmatpush1.bf16.msra.mxu0 %v3121
        %3140 = vmatprep.subr.bf16.mxu0 0
        %3141 = vmatpush1.bf16.msra.mxu0 %v3122
        %3142 = vmatprep.subr.bf16.mxu0 0
        %3143 = vmatpush1.bf16.msra.mxu0 %v3123
        %3144 = vmatprep.subr.bf16.mxu0 0
        %3145 = vmatpush1.bf16.msra.mxu0 %v3124
        %3146 = vmatprep.subr.bf16.mxu0 0
        %3147 = vmatpush1.bf16.msra.mxu0 %v3125
        %3148 = vmatprep.subr.bf16.mxu0 0
        %3149 = vmatpush1.bf16.msra.mxu0 %v3126
        %3150 = vmatprep.subr.bf16.mxu0 0
        %3151 = vmatpush1.bf16.msra.mxu0 %v3127
        %3152 = vmatprep.subr.bf16.mxu0 0
        %3153 = vmatpush1.bf16.msra.mxu0 0
        %3154 = vmatprep.subr.bf16.mxu0 0
        %3155 = vmatpush1.bf16.msra.mxu0 0
        %3156 = vmatprep.subr.bf16.mxu0 0
        %3157 = vmatpush1.bf16.msra.mxu0 0
        %3158 = vmatprep.subr.bf16.mxu0 0
        %3159 = vmatpush1.bf16.msra.mxu0 0
        %3160 = vmatprep.subr.bf16.mxu0 0
        %3161 = vmatpush1.bf16.msra.mxu0 0
        %3162 = vmatprep.subr.bf16.mxu0 0
        %3163 = vmatpush1.bf16.msra.mxu0 0
        %3164 = vmatprep.subr.bf16.mxu0 0
        %3165 = vmatpush1.bf16.msra.mxu0 0
        %3166 = vmatprep.subr.bf16.mxu0 0
        %3167 = vmatpush1.bf16.msra.mxu0 0
        %3168 = vmatprep.mubr.bf16.mxu0 0
        %3169 = vmatmul.mubr.bf16.gmra.mrb[0].mxu0 %v3054
        %v3170 = vpop.f32.mrb[0].mxu0
        %v3171 = vadd.f32 %v3086, %v3170
        %v3172 = vpop.f32.mrb[0].mxu0
        %v3173 = vpop.f32.mrb[0].mxu0
        %v3174 = vadd.f32 %v3086, %v3173
        %v3175 = vpop.f32.mrb[0].mxu0
        %3176 = vmatprep.mubr.bf16.mxu0 0
        %3177 = vmatmul.mubr.bf16.gmra.mrb[0].mxu0 %v3057
        %v3178 = vpop.f32.mrb[0].mxu0
        %v3179 = vadd.f32 %v3086, %v3178
        %v3180 = vpop.f32.mrb[0].mxu0
        %v3181 = vpop.f32.mrb[0].mxu0
        %v3182 = vadd.f32 %v3086, %v3181
        %v3183 = vpop.f32.mrb[0].mxu0
        %3184 = vmatprep.mubr.bf16.mxu0 0
        %3185 = vmatmul.mubr.bf16.gmra.mrb[0].mxu0 %v3060
        %v3186 = vpop.f32.mrb[0].mxu0
        %v3187 = vadd.f32 %v3086, %v3186
        %v3188 = vpop.f32.mrb[0].mxu0
        %v3189 = vpop.f32.mrb[0].mxu0
        %v3190 = vadd.f32 %v3086, %v3189
        %v3191 = vpop.f32.mrb[0].mxu0
        %3192 = vmatprep.mubr.bf16.mxu0 0
        %3193 = vmatmul.mubr.bf16.gmra.mrb[0].mxu0 %v3063
        %v3194 = vpop.f32.mrb[0].mxu0
        %v3195 = vadd.f32 %v3086, %v3194
        %v3196 = vpop.f32.mrb[0].mxu0
        %v3197 = vpop.f32.mrb[0].mxu0
        %v3198 = vadd.f32 %v3086, %v3197
        %v3199 = vpop.f32.mrb[0].mxu0
        %3200 = vdwg.mxu0
        %3201 = vst [vmem:[%s690] sm:$0xff] %v3171
        %3202 = vst [vmem:[%s690 + $0x8] sm:$0xff] %v3174
        %3203 = vst [vmem:[%s690 + $0x10] sm:$0xff] %v3179
        %3204 = vst [vmem:[%s690 + $0x18] sm:$0xff] %v3182
        %3205 = vst [vmem:[%s690 + $0x20] sm:$0xff] %v3187
        %3206 = vst [vmem:[%s690 + $0x28] sm:$0xff] %v3190
        %3207 = vst [vmem:[%s690 + $0x30] sm:$0xff] %v3195
        %3208 = vst [vmem:[%s690 + $0x38] sm:$0xff] %v3198
        %s3209 = sand.u32 %s341, 1
        %s3210 = scalar_lea.sflag [#allocation6], %s3209
        %s3211 = sand.u32 %s341, 1
        %s3212 = smul.addr %s3211, 64
        %s3213 = scalar_lea.vmem [#allocation18], %s3212
        %s3214 = sand.u32 %s43, 1
        %s3215 = scalar_lea.sflag [#allocation20], %s3214
        %s3216 = sand.u32 %s369, 1
        %s3217 = smul.addr %s3216, 256
        %s3218 = scalar_lea.vmem [#allocation19], %s3217
        %s3219 = sand.u32 %s43, 1
        %s3220 = scalar_lea.sflag [#allocation20], %s3219
        %s3221 = sand.u32 %s397, 1
        %s3222 = smul.addr %s3221, 256
        %s3223 = scalar_lea.vmem [#allocation21], %s3222
        // Predicated region
        $region105: #{tpu_custom_call.1} parent=67 // pred_check
          %p3224 = pneg %p351
        $region106: #{tpu_custom_call.1} parent=67 // pred_check_branch
          %3226 = sbr.rel (%p3224) target = $region108
        $region107: #{tpu_custom_call.1} parent=67 // pred_region
          %s3227 = smul.u32 8, %s48
          %s3229 = ssub.s32 1024, 1024
          %3230 = vsyncadd %s3210, %s3229
          %s3231 = smul.addr %s47, 16
          %s3232 = sadd.s32 %s3227, %s3231
          %s3233 = smul.addr %s3232, 128
          %s3234 = scalar_lea.hbm %s12, %s3233
          %s3235 = sshll.u32 %s3213, 4
          %s3236 = int_to_ptr.vmem [resolvable:$true] %s3235
          %3241 = dma.vmem_to_hbm [thread:$0]  %s3236, 1024, %s3234, %s3210, 128, 128, 8
        $region108: #{tpu_custom_call.1} parent=67 // pred_fallthru
          _
        // Predicated region
        $region109: #{tpu_custom_call.1} parent=67 // pred_check
          %p3242 = pneg %p379
        $region110: #{tpu_custom_call.1} parent=67 // pred_check_branch
          %3244 = sbr.rel (%p3242) target = $region112
        $region111: #{tpu_custom_call.1} parent=67 // pred_region
          #allocation23 [shape = 'u32[6]{0}', space=smem, size = 0x18, scoped, tag = 'DMA stride descriptor']
          %s3245 = smul.u32 8, %s48
          %s3247 = ssub.s32 4096, 4096
          %3248 = vsyncadd %s3215, %s3247
          %s3249 = smul.addr %s47, 64
          %s3250 = sadd.s32 %s3245, %s3249
          %s3251 = smul.addr %s3250, 128
          %s3252 = scalar_lea.hbm %s13, %s3251
          %s3254 = sshll.u32 1, 14
          %s3255 = sxor.u32 4294967295, %s3254
          %s3258 = sshll.u32 7, 18
          %s3259 = sxor.u32 4294967295, %s3258
          %s3260 = sand.u32 0, %s3259
          %s3262 = sor.u32 %s3260, 0
          %s3264 = sshll.u32 3, 24
          %s3265 = sxor.u32 4294967295, %s3264
          %s3266 = sand.u32 %s3262, %s3265
          %s3268 = sor.u32 %s3266, 0
          %s3269 = sshll.u32 %s3218, 4
          %s3270 = int_to_ptr.vmem [resolvable:$true] %s3269
          %3276 = sst [smem:[#allocation23]] 1024
          %s3277 = scalar_lea.smem [#allocation23], 1
          %3278 = sst [smem:[%s3277]] 2048
          %s3279 = scalar_lea.smem [#allocation23], 2
          %3280 = sst [smem:[%s3279]] 8
          %s3281 = scalar_lea.smem [#allocation23], 3
          %3282 = sst [smem:[%s3281]] 128
          %s3283 = scalar_lea.smem [#allocation23], 4
          %3284 = sst [smem:[%s3283]] 128
          %s3285 = scalar_lea.smem [#allocation23], 5
          %3286 = sst [smem:[%s3285]] 8
          %3288 = dma.general %s3270, 4096, %s3252, %s3215, [#allocation22], [#allocation23], %s3268, 0
        $region112: #{tpu_custom_call.1} parent=67 // pred_fallthru
          _
        // Predicated region
        $region113: #{tpu_custom_call.1} parent=67 // pred_check
          %p3289 = pneg %p407
        $region114: #{tpu_custom_call.1} parent=67 // pred_check_branch
          %3291 = sbr.rel (%p3289) target = $region116
        $region115: #{tpu_custom_call.1} parent=67 // pred_region
          #allocation25 [shape = 'u32[6]{0}', space=smem, size = 0x18, scoped, tag = 'DMA stride descriptor']
          %s3292 = smul.u32 8, %s48
          %s3294 = ssub.s32 4096, 4096
          %3295 = vsyncadd %s3220, %s3294
          %s3296 = smul.addr %s47, 64
          %s3297 = sadd.s32 %s3292, %s3296
          %s3298 = smul.addr %s3297, 128
          %s3299 = scalar_lea.hbm %s14, %s3298
          %s3301 = sshll.u32 1, 14
          %s3302 = sxor.u32 4294967295, %s3301
          %s3305 = sshll.u32 7, 18
          %s3306 = sxor.u32 4294967295, %s3305
          %s3307 = sand.u32 0, %s3306
          %s3309 = sor.u32 %s3307, 0
          %s3311 = sshll.u32 3, 24
          %s3312 = sxor.u32 4294967295, %s3311
          %s3313 = sand.u32 %s3309, %s3312
          %s3315 = sor.u32 %s3313, 0
          %s3316 = sshll.u32 %s3223, 4
          %s3317 = int_to_ptr.vmem [resolvable:$true] %s3316
          %3323 = sst [smem:[#allocation25]] 1024
          %s3324 = scalar_lea.smem [#allocation25], 1
          %3325 = sst [smem:[%s3324]] 2048
          %s3326 = scalar_lea.smem [#allocation25], 2
          %3327 = sst [smem:[%s3326]] 8
          %s3328 = scalar_lea.smem [#allocation25], 3
          %3329 = sst [smem:[%s3328]] 128
          %s3330 = scalar_lea.smem [#allocation25], 4
          %3331 = sst [smem:[%s3330]] 128
          %s3332 = scalar_lea.smem [#allocation25], 5
          %3333 = sst [smem:[%s3332]] 8
          %3335 = dma.general %s3317, 4096, %s3299, %s3220, [#allocation24], [#allocation25], %s3315, 0
        $region116: #{tpu_custom_call.1} parent=67 // pred_fallthru
          _
      $region68: #{tpu_custom_call.1} parent=5 // pred_fallthru
        _
      %p3336 = scmp.le.s32.totalorder 2, %s38
      // Predicated region
      $region117: #{tpu_custom_call.1} parent=5 // pred_check
        %p3337 = pneg %p3336
      $region118: #{tpu_custom_call.1} parent=5 // pred_check_branch
        %3339 = sbr.rel (%p3337) target = $region120
      $region119: #{tpu_custom_call.1} parent=5 // pred_region
        %s3340 = ssub.s32 %s38, 2
        // Predicated region
        $region121: #{tpu_custom_call.1} parent=119 // pred_check
          %p3341 = pneg %p357
        $region122: #{tpu_custom_call.1} parent=119 // pred_check_branch
          %3343 = sbr.rel (%p3341) target = $region124
        $region123: #{tpu_custom_call.1} parent=119 // pred_region
          %s3344 = sand.u32 %s342, 1
          %s3345 = scalar_lea.sflag [#allocation6], %s3344
          %s3346 = sand.u32 %s342, 1
          %s3347 = smul.addr %s3346, 64
          %s3348 = scalar_lea.vmem [#allocation18], %s3347
          %3349 = dma.done %s3345, 1024
        $region124: #{tpu_custom_call.1} parent=119 // pred_fallthru
          _
        // Predicated region
        $region125: #{tpu_custom_call.1} parent=119 // pred_check
          %p3350 = pneg %p385
        $region126: #{tpu_custom_call.1} parent=119 // pred_check_branch
          %3352 = sbr.rel (%p3350) target = $region128
        $region127: #{tpu_custom_call.1} parent=119 // pred_region
          %s3353 = sand.u32 %s44, 1
          %s3354 = scalar_lea.sflag [#allocation20], %s3353
          %s3355 = sand.u32 %s370, 1
          %s3356 = smul.addr %s3355, 256
          %s3357 = scalar_lea.vmem [#allocation19], %s3356
          %3358 = dma.done %s3354, 4096
        $region128: #{tpu_custom_call.1} parent=119 // pred_fallthru
          _
        // Predicated region
        $region129: #{tpu_custom_call.1} parent=119 // pred_check
          %p3359 = pneg %p413
        $region130: #{tpu_custom_call.1} parent=119 // pred_check_branch
          %3361 = sbr.rel (%p3359) target = $region132
        $region131: #{tpu_custom_call.1} parent=119 // pred_region
          %s3362 = sand.u32 %s44, 1
          %s3363 = scalar_lea.sflag [#allocation20], %s3362
          %s3364 = sand.u32 %s398, 1
          %s3365 = smul.addr %s3364, 256
          %s3366 = scalar_lea.vmem [#allocation21], %s3365
          %3367 = dma.done %s3363, 4096
        $region132: #{tpu_custom_call.1} parent=119 // pred_fallthru
          _
      $region120: #{tpu_custom_call.1} parent=5 // pred_fallthru
        _
    $region6: #{tpu_custom_call.1} parent=1 // loop_footer
      %s42 = sadd.s32 1, %s38
    $region7: #{tpu_custom_call.1} parent=1 // loop_footer_branch
      %37 = sbr.rel target = $region3
    $region8: #{tpu_custom_call.1} parent=1 // loop_exit
      _
    %3368 = vsyncpa [#allocation5], 1
    %s3369 = scalar_lea.sflag [#allocation5], 1
    %3370 = vsyncpa %s3369, 1
    %3371 = vsyncpa [#allocation8], 1
    %s3372 = scalar_lea.sflag [#allocation8], 1
    %3373 = vsyncpa %s3372, 1
    %3374 = vsyncpa [#allocation11], 1
    %s3375 = scalar_lea.sflag [#allocation11], 1
    %3376 = vsyncpa %s3375, 1
    %3377 = vsyncpa [#allocation14], 1
    %3378 = vsyncpa [#allocation17], 1
    %3379 = vsyncpa [#allocation6], 1
    %s3380 = scalar_lea.sflag [#allocation6], 1
    %3381 = vsyncpa %s3380, 1
    %3382 = vsyncpa [#allocation20], 1
    %s3383 = scalar_lea.sflag [#allocation20], 1
    %3384 = vsyncpa %s3383, 1

</llo_original>
